<compile_context>
chip_gen: v7x
topology: tpu7x:2x2x1
jax: 0.10.0
libtpu: 0.0.40
codegen_flags: <defaults>
</compile_context>

<pallas_src>
import jax
import jax.numpy as jnp
from jax import lax
from jax.experimental import pallas as pl
from jax.experimental.pallas import tpu as pltpu


def _make_fp_ebc_kernel(B, TB, L, D, N):
    """Kernel factory closing over the static problem dimensions."""

    def kernel(ids_sm, len_ref, pw_ref, tbl_ref, out_ref, gbuf, sem):
        f = pl.program_id(0)           # feature index
        nb = pl.program_id(1)          # batch-tile index
        row0 = f * B + nb * TB         # first (feature, bag) row in ids_sm
        tbl0 = f * N                   # first table row of this feature

        def fetch(l, slot):
            # Gather the TB rows needed at bag position l into gbuf[slot].
            for b in range(TB):
                rid = ids_sm[row0 + b, l]
                pltpu.make_async_copy(
                    tbl_ref.at[pl.ds(tbl0 + rid, 1)],   # [1, D] HBM row
                    gbuf.at[slot, pl.ds(b, 1)],         # [1, D] VMEM slot
                    sem.at[slot, b],
                ).start()

        def wait_slot(slot):
            for b in range(TB):
                pltpu.make_async_copy(
                    tbl_ref.at[pl.ds(0, 1)],
                    gbuf.at[slot, pl.ds(b, 1)],
                    sem.at[slot, b],
                ).wait()

        # Prime the pipeline with position 0.
        fetch(0, 0)

        # Feature-processor weights (computed while the first gather is in
        # flight):  w[b, l] = pos_weight[l] if l < bag_len[b] else 0
        lens = len_ref[0]                                    # [TB, 1] int32
        pw = pw_ref[0]                                       # [1,  L] f32
        pos = lax.broadcasted_iota(jnp.int32, (TB, L), 1)    # [TB, L]
        w = jnp.where(pos < lens, pw, 0.0)                   # [TB, L] f32

        # Double-buffered weighted sum pooling over the bag positions.
        # TODO(synk): for large L switch this unrolled Python loop to
        # lax.fori_loop with a dynamic buffer-slot index to bound code size.
        acc = jnp.zeros((TB, D), jnp.float32)
        for l in range(L):
            slot = l & 1
            wait_slot(slot)
            if l + 1 < L:
                fetch(l + 1, 1 - slot)
            acc = acc + w[:, l:l + 1] * gbuf[slot].astype(jnp.float32)

        out_ref[...] = acc.astype(out_ref.dtype)

    return kernel


def _derive_vmem_limit(needed_bytes):
    """Scoped-VMEM limit sized per TPU generation (v7x: 64 MiB physical)."""
    cap = None
    try:
        cap = getattr(pltpu.get_tpu_info(), "vmem_capacity_bytes", None)
    except Exception:
        cap = None
    if not cap:
        cap = 64 * 1024 * 1024          # assume the smallest (v7x) if unknown
    return int(min(cap // 2, max(2 * needed_bytes, 16 * 1024 * 1024)))


def fp_embedding_bag_collection(ids, lengths, pos_weights, tables, *,
                                batch_tile=None):
    """ids:[F,B,L] int32, lengths:[F,B,1] int32, pos_weights:[F,1,L] f32,
    tables:[F,N,D] float  ->  KeyedTensor values of shape [B, F*D] (f32)."""
    F, B, L = ids.shape
    F2, N, D = tables.shape
    assert F == F2
    # Lane-dense output blocks need D % 128 == 0.
    # TODO(synk): pad D (and strip the pad columns afterwards) for D = 64 / 96.
    assert D % 128 == 0, "embedding dim must be a multiple of 128"

    # Batch tile: one lane-dense output block of TB rows per grid step.
    if batch_tile is None:
        batch_tile = B if B <= 128 else 128
    TB = min(batch_tile, B)
    if B % TB != 0 or (TB % 8 != 0 and TB != B):
        TB = B                          # fall back to a single batch tile
    NB = B // TB

    # Safety: padded / out-of-range ids must stay inside the table (they carry
    # weight 0 from the length mask, so the clamp never changes the result).
    ids = jnp.clip(ids, 0, N - 1).astype(jnp.int32)
    ids2d = ids.reshape(F * B, L)              # scalar-prefetched into SMEM
    tables_flat = tables.reshape(F * N, D)     # single flat row index space

    itemsize = jnp.dtype(tables.dtype).itemsize
    cost = pl.CostEstimate(
        flops=2 * F * B * L * D,
        transcendentals=0,
        bytes_accessed=(F * B * L * D * itemsize   # gathered table rows
                        + F * B * L * 4            # ids
                        + F * B * 4                # lengths
                        + F * L * 4                # position weights
                        + B * F * D * 4),          # pooled output
    )
    needed_vmem = (2 * TB * D * itemsize           # gather double buffer
                   + 2 * TB * D * 4                # pipelined output block
                   + 2 * TB * 4 + 2 * L * 4)       # lengths + position weights

    kernel = _make_fp_ebc_kernel(B, TB, L, D, N)
    out = pl.pallas_call(
        kernel,
        out_shape=jax.ShapeDtypeStruct((B, F * D), jnp.float32),
        grid_spec=pltpu.PrefetchScalarGridSpec(
            num_scalar_prefetch=1,
            grid=(F, NB),
            in_specs=[
                pl.BlockSpec((1, TB, 1), lambda f, nb, ids_sm: (f, nb, 0)),
                pl.BlockSpec((1, 1, L), lambda f, nb, ids_sm: (f, 0, 0)),
                pl.BlockSpec(memory_space=pl.ANY),      # table stays in HBM
            ],
            # Write directly in KeyedTensor layout: feature f -> cols [f*D,(f+1)*D)
            out_specs=pl.BlockSpec((TB, D), lambda f, nb, ids_sm: (nb, f)),
            scratch_shapes=[
                pltpu.VMEM((2, TB, D), tables.dtype),   # gather double buffer
                pltpu.SemaphoreType.DMA((2, TB)),       # one sem per row copy
            ],
        ),
        compiler_params=pltpu.CompilerParams(
            dimension_semantics=("parallel", "parallel"),
            vmem_limit_bytes=_derive_vmem_limit(needed_vmem),
        ),
        cost_estimate=cost,
    )(ids2d, lengths, pos_weights, tables_flat)
    return out


def _reference(ids, lengths, pos_weights, tables):
    """Plain-JAX reference of the same forward pass."""
    F, B, L = ids.shape
    _, N, D = tables.shape
    pos = jnp.arange(L)[None, None, :]                         # [1,1,L]
    mask = (pos < lengths).astype(jnp.float32)                 # [F,B,L]
    w = pos_weights * mask                                     # [F,B,L]
    gathered = jax.vmap(lambda t, i: t[i])(tables, ids)        # [F,B,L,D]
    pooled = jnp.sum(gathered * w[..., None], axis=2)          # [F,B,D]
    return jnp.transpose(pooled, (1, 0, 2)).reshape(B, F * D)


if __name__ == "__main__":
    # Small shapes; vocab N=256 is irrelevant to cost now (gather touches B*L rows).
    F, B, L, N, D = 2, 8, 8, 256, 128

    key = jax.random.PRNGKey(0)
    k_ids, k_len, k_pw, k_tbl = jax.random.split(key, 4)

    ids = jax.random.randint(k_ids, (F, B, L), 0, N, dtype=jnp.int32)
    lengths = jax.random.randint(k_len, (F, B, 1), 0, L + 1, dtype=jnp.int32)
    pos_weights = jax.random.uniform(
        k_pw, (F, 1, L), dtype=jnp.float32, minval=0.5, maxval=1.5)
    tables = jax.random.normal(k_tbl, (F, N, D), dtype=jnp.float32) * 0.05

    out = fp_embedding_bag_collection(ids, lengths, pos_weights, tables)
    out = jax.block_until_ready(out)

    ref = _reference(ids, lengths, pos_weights, tables)
    assert out.shape == (B, F * D)
    assert jnp.allclose(out, ref, atol=1e-4, rtol=1e-4), "mismatch vs reference"

    print("KERNEL_OK")
</pallas_src>

<mosaic_0001>
module attributes {stable_mosaic.version = 11 : i64} {
  func.func @kernel(%arg0: i32, %arg1: i32, %arg2: memref<16x8xi32, #tpu.memory_space<smem>>, %arg3: memref<1x8x1xi32, #tpu.memory_space<vmem>>, %arg4: memref<1x1x8xf32, #tpu.memory_space<vmem>>, %arg5: memref<512x128xf32, #tpu.memory_space<any>>, %arg6: memref<8x128xf32, #tpu.memory_space<vmem>>, %arg7: memref<2x8x128xf32, #tpu.memory_space<vmem>>, %arg8: memref<2x8x!tpu.dma_semaphore, #tpu.memory_space<semaphore_mem>>) attributes {dimension_semantics = [#tpu.dimension_semantics<parallel>, #tpu.dimension_semantics<parallel>], iteration_bounds = array<i64: 2, 1>, scalar_prefetch = 1 : i64, scratch_operands = 2 : i64, tpu.core_type = #tpu.core_type<tc>, window_params = [{transform_indices = @transform_0, window_bounds = array<i64: 1, 8, 1>}, {transform_indices = @transform_1, window_bounds = array<i64: 1, 1, 8>}, {}, {transform_indices = @transform_3, window_bounds = array<i64: 8, 128>}]} {
    %c8_i32 = arith.constant 8 : i32
    %0 = arith.muli %arg0, %c8_i32 : i32
    %c8_i32_0 = arith.constant 8 : i32
    %1 = arith.muli %arg1, %c8_i32_0 : i32
    %2 = arith.addi %0, %1 : i32
    %c256_i32 = arith.constant 256 : i32
    %3 = arith.muli %arg0, %c256_i32 : i32
    %c0_i32 = arith.constant 0 : i32
    %4 = arith.addi %2, %c0_i32 : i32
    %5 = arith.index_cast %4 : i32 to index
    %c0 = arith.constant 0 : index
    %6 = memref.load %arg2[%5, %c0] : memref<16x8xi32, #tpu.memory_space<smem>>
    %7 = arith.addi %3, %6 : i32
    %c0_i32_1 = arith.constant 0 : i32
    %c0_i32_2 = arith.constant 0 : i32
    %c0_i32_3 = arith.constant 0 : i32
    %c0_i32_4 = arith.constant 0 : i32
    %8 = tpu.memref_slice %arg5[%7, %c0_i32_4] : memref<512x128xf32, #tpu.memory_space<any>> -> memref<1x128xf32, #tpu.memory_space<any>>
    %c0_i32_5 = arith.constant 0 : i32
    %c0_i32_6 = arith.constant 0 : i32
    %9 = tpu.memref_slice %arg7[%c0_i32_1, %c0_i32_5, %c0_i32_6] : memref<2x8x128xf32, #tpu.memory_space<vmem>> -> memref<1x1x128xf32, #tpu.memory_space<vmem>>
    %10 = tpu.memref_squeeze %9 : memref<1x1x128xf32, #tpu.memory_space<vmem>> -> memref<1x128xf32, #tpu.memory_space<vmem>>
    %11 = tpu.memref_slice %arg8[%c0_i32_2, %c0_i32_3] : memref<2x8x!tpu.dma_semaphore, #tpu.memory_space<semaphore_mem>> -> memref<1x1x!tpu.dma_semaphore, #tpu.memory_space<semaphore_mem>>
    %12 = tpu.memref_squeeze %11 : memref<1x1x!tpu.dma_semaphore, #tpu.memory_space<semaphore_mem>> -> memref<!tpu.dma_semaphore, #tpu.memory_space<semaphore_mem>>
    tpu.enqueue_dma source(%8 : memref<1x128xf32, #tpu.memory_space<any>>) target(%10 : memref<1x128xf32, #tpu.memory_space<vmem>>) target_semaphore(%12 : memref<!tpu.dma_semaphore, #tpu.memory_space<semaphore_mem>>)
    %c1_i32 = arith.constant 1 : i32
    %13 = arith.addi %2, %c1_i32 : i32
    %14 = arith.index_cast %13 : i32 to index
    %c0_7 = arith.constant 0 : index
    %15 = memref.load %arg2[%14, %c0_7] : memref<16x8xi32, #tpu.memory_space<smem>>
    %16 = arith.addi %3, %15 : i32
    %c0_i32_8 = arith.constant 0 : i32
    %c0_i32_9 = arith.constant 0 : i32
    %c1_i32_10 = arith.constant 1 : i32
    %c0_i32_11 = arith.constant 0 : i32
    %17 = tpu.memref_slice %arg5[%16, %c0_i32_11] : memref<512x128xf32, #tpu.memory_space<any>> -> memref<1x128xf32, #tpu.memory_space<any>>
    %c1_i32_12 = arith.constant 1 : i32
    %c0_i32_13 = arith.constant 0 : i32
    %18 = tpu.memref_slice %arg7[%c0_i32_8, %c1_i32_12, %c0_i32_13] : memref<2x8x128xf32, #tpu.memory_space<vmem>> -> memref<1x1x128xf32, #tpu.memory_space<vmem>>
    %19 = tpu.memref_squeeze %18 : memref<1x1x128xf32, #tpu.memory_space<vmem>> -> memref<1x128xf32, #tpu.memory_space<vmem>>
    %20 = tpu.memref_slice %arg8[%c0_i32_9, %c1_i32_10] : memref<2x8x!tpu.dma_semaphore, #tpu.memory_space<semaphore_mem>> -> memref<1x1x!tpu.dma_semaphore, #tpu.memory_space<semaphore_mem>>
    %21 = tpu.memref_squeeze %20 : memref<1x1x!tpu.dma_semaphore, #tpu.memory_space<semaphore_mem>> -> memref<!tpu.dma_semaphore, #tpu.memory_space<semaphore_mem>>
    tpu.enqueue_dma source(%17 : memref<1x128xf32, #tpu.memory_space<any>>) target(%19 : memref<1x128xf32, #tpu.memory_space<vmem>>) target_semaphore(%21 : memref<!tpu.dma_semaphore, #tpu.memory_space<semaphore_mem>>)
    %c2_i32 = arith.constant 2 : i32
    %22 = arith.addi %2, %c2_i32 : i32
    %23 = arith.index_cast %22 : i32 to index
    %c0_14 = arith.constant 0 : index
    %24 = memref.load %arg2[%23, %c0_14] : memref<16x8xi32, #tpu.memory_space<smem>>
    %25 = arith.addi %3, %24 : i32
    %c0_i32_15 = arith.constant 0 : i32
    %c0_i32_16 = arith.constant 0 : i32
    %c2_i32_17 = arith.constant 2 : i32
    %c0_i32_18 = arith.constant 0 : i32
    %26 = tpu.memref_slice %arg5[%25, %c0_i32_18] : memref<512x128xf32, #tpu.memory_space<any>> -> memref<1x128xf32, #tpu.memory_space<any>>
    %c2_i32_19 = arith.constant 2 : i32
    %c0_i32_20 = arith.constant 0 : i32
    %27 = tpu.memref_slice %arg7[%c0_i32_15, %c2_i32_19, %c0_i32_20] : memref<2x8x128xf32, #tpu.memory_space<vmem>> -> memref<1x1x128xf32, #tpu.memory_space<vmem>>
    %28 = tpu.memref_squeeze %27 : memref<1x1x128xf32, #tpu.memory_space<vmem>> -> memref<1x128xf32, #tpu.memory_space<vmem>>
    %29 = tpu.memref_slice %arg8[%c0_i32_16, %c2_i32_17] : memref<2x8x!tpu.dma_semaphore, #tpu.memory_space<semaphore_mem>> -> memref<1x1x!tpu.dma_semaphore, #tpu.memory_space<semaphore_mem>>
    %30 = tpu.memref_squeeze %29 : memref<1x1x!tpu.dma_semaphore, #tpu.memory_space<semaphore_mem>> -> memref<!tpu.dma_semaphore, #tpu.memory_space<semaphore_mem>>
    tpu.enqueue_dma source(%26 : memref<1x128xf32, #tpu.memory_space<any>>) target(%28 : memref<1x128xf32, #tpu.memory_space<vmem>>) target_semaphore(%30 : memref<!tpu.dma_semaphore, #tpu.memory_space<semaphore_mem>>)
    %c3_i32 = arith.constant 3 : i32
    %31 = arith.addi %2, %c3_i32 : i32
    %32 = arith.index_cast %31 : i32 to index
    %c0_21 = arith.constant 0 : index
    %33 = memref.load %arg2[%32, %c0_21] : memref<16x8xi32, #tpu.memory_space<smem>>
    %34 = arith.addi %3, %33 : i32
    %c0_i32_22 = arith.constant 0 : i32
    %c0_i32_23 = arith.constant 0 : i32
    %c3_i32_24 = arith.constant 3 : i32
    %c0_i32_25 = arith.constant 0 : i32
    %35 = tpu.memref_slice %arg5[%34, %c0_i32_25] : memref<512x128xf32, #tpu.memory_space<any>> -> memref<1x128xf32, #tpu.memory_space<any>>
    %c3_i32_26 = arith.constant 3 : i32
    %c0_i32_27 = arith.constant 0 : i32
    %36 = tpu.memref_slice %arg7[%c0_i32_22, %c3_i32_26, %c0_i32_27] : memref<2x8x128xf32, #tpu.memory_space<vmem>> -> memref<1x1x128xf32, #tpu.memory_space<vmem>>
    %37 = tpu.memref_squeeze %36 : memref<1x1x128xf32, #tpu.memory_space<vmem>> -> memref<1x128xf32, #tpu.memory_space<vmem>>
    %38 = tpu.memref_slice %arg8[%c0_i32_23, %c3_i32_24] : memref<2x8x!tpu.dma_semaphore, #tpu.memory_space<semaphore_mem>> -> memref<1x1x!tpu.dma_semaphore, #tpu.memory_space<semaphore_mem>>
    %39 = tpu.memref_squeeze %38 : memref<1x1x!tpu.dma_semaphore, #tpu.memory_space<semaphore_mem>> -> memref<!tpu.dma_semaphore, #tpu.memory_space<semaphore_mem>>
    tpu.enqueue_dma source(%35 : memref<1x128xf32, #tpu.memory_space<any>>) target(%37 : memref<1x128xf32, #tpu.memory_space<vmem>>) target_semaphore(%39 : memref<!tpu.dma_semaphore, #tpu.memory_space<semaphore_mem>>)
    %c4_i32 = arith.constant 4 : i32
    %40 = arith.addi %2, %c4_i32 : i32
    %41 = arith.index_cast %40 : i32 to index
    %c0_28 = arith.constant 0 : index
    %42 = memref.load %arg2[%41, %c0_28] : memref<16x8xi32, #tpu.memory_space<smem>>
    %43 = arith.addi %3, %42 : i32
    %c0_i32_29 = arith.constant 0 : i32
    %c0_i32_30 = arith.constant 0 : i32
    %c4_i32_31 = arith.constant 4 : i32
    %c0_i32_32 = arith.constant 0 : i32
    %44 = tpu.memref_slice %arg5[%43, %c0_i32_32] : memref<512x128xf32, #tpu.memory_space<any>> -> memref<1x128xf32, #tpu.memory_space<any>>
    %c4_i32_33 = arith.constant 4 : i32
    %c0_i32_34 = arith.constant 0 : i32
    %45 = tpu.memref_slice %arg7[%c0_i32_29, %c4_i32_33, %c0_i32_34] : memref<2x8x128xf32, #tpu.memory_space<vmem>> -> memref<1x1x128xf32, #tpu.memory_space<vmem>>
    %46 = tpu.memref_squeeze %45 : memref<1x1x128xf32, #tpu.memory_space<vmem>> -> memref<1x128xf32, #tpu.memory_space<vmem>>
    %47 = tpu.memref_slice %arg8[%c0_i32_30, %c4_i32_31] : memref<2x8x!tpu.dma_semaphore, #tpu.memory_space<semaphore_mem>> -> memref<1x1x!tpu.dma_semaphore, #tpu.memory_space<semaphore_mem>>
    %48 = tpu.memref_squeeze %47 : memref<1x1x!tpu.dma_semaphore, #tpu.memory_space<semaphore_mem>> -> memref<!tpu.dma_semaphore, #tpu.memory_space<semaphore_mem>>
    tpu.enqueue_dma source(%44 : memref<1x128xf32, #tpu.memory_space<any>>) target(%46 : memref<1x128xf32, #tpu.memory_space<vmem>>) target_semaphore(%48 : memref<!tpu.dma_semaphore, #tpu.memory_space<semaphore_mem>>)
    %c5_i32 = arith.constant 5 : i32
    %49 = arith.addi %2, %c5_i32 : i32
    %50 = arith.index_cast %49 : i32 to index
    %c0_35 = arith.constant 0 : index
    %51 = memref.load %arg2[%50, %c0_35] : memref<16x8xi32, #tpu.memory_space<smem>>
    %52 = arith.addi %3, %51 : i32
    %c0_i32_36 = arith.constant 0 : i32
    %c0_i32_37 = arith.constant 0 : i32
    %c5_i32_38 = arith.constant 5 : i32
    %c0_i32_39 = arith.constant 0 : i32
    %53 = tpu.memref_slice %arg5[%52, %c0_i32_39] : memref<512x128xf32, #tpu.memory_space<any>> -> memref<1x128xf32, #tpu.memory_space<any>>
    %c5_i32_40 = arith.constant 5 : i32
    %c0_i32_41 = arith.constant 0 : i32
    %54 = tpu.memref_slice %arg7[%c0_i32_36, %c5_i32_40, %c0_i32_41] : memref<2x8x128xf32, #tpu.memory_space<vmem>> -> memref<1x1x128xf32, #tpu.memory_space<vmem>>
    %55 = tpu.memref_squeeze %54 : memref<1x1x128xf32, #tpu.memory_space<vmem>> -> memref<1x128xf32, #tpu.memory_space<vmem>>
    %56 = tpu.memref_slice %arg8[%c0_i32_37, %c5_i32_38] : memref<2x8x!tpu.dma_semaphore, #tpu.memory_space<semaphore_mem>> -> memref<1x1x!tpu.dma_semaphore, #tpu.memory_space<semaphore_mem>>
    %57 = tpu.memref_squeeze %56 : memref<1x1x!tpu.dma_semaphore, #tpu.memory_space<semaphore_mem>> -> memref<!tpu.dma_semaphore, #tpu.memory_space<semaphore_mem>>
    tpu.enqueue_dma source(%53 : memref<1x128xf32, #tpu.memory_space<any>>) target(%55 : memref<1x128xf32, #tpu.memory_space<vmem>>) target_semaphore(%57 : memref<!tpu.dma_semaphore, #tpu.memory_space<semaphore_mem>>)
    %c6_i32 = arith.constant 6 : i32
    %58 = arith.addi %2, %c6_i32 : i32
    %59 = arith.index_cast %58 : i32 to index
    %c0_42 = arith.constant 0 : index
    %60 = memref.load %arg2[%59, %c0_42] : memref<16x8xi32, #tpu.memory_space<smem>>
    %61 = arith.addi %3, %60 : i32
    %c0_i32_43 = arith.constant 0 : i32
    %c0_i32_44 = arith.constant 0 : i32
    %c6_i32_45 = arith.constant 6 : i32
    %c0_i32_46 = arith.constant 0 : i32
    %62 = tpu.memref_slice %arg5[%61, %c0_i32_46] : memref<512x128xf32, #tpu.memory_space<any>> -> memref<1x128xf32, #tpu.memory_space<any>>
    %c6_i32_47 = arith.constant 6 : i32
    %c0_i32_48 = arith.constant 0 : i32
    %63 = tpu.memref_slice %arg7[%c0_i32_43, %c6_i32_47, %c0_i32_48] : memref<2x8x128xf32, #tpu.memory_space<vmem>> -> memref<1x1x128xf32, #tpu.memory_space<vmem>>
    %64 = tpu.memref_squeeze %63 : memref<1x1x128xf32, #tpu.memory_space<vmem>> -> memref<1x128xf32, #tpu.memory_space<vmem>>
    %65 = tpu.memref_slice %arg8[%c0_i32_44, %c6_i32_45] : memref<2x8x!tpu.dma_semaphore, #tpu.memory_space<semaphore_mem>> -> memref<1x1x!tpu.dma_semaphore, #tpu.memory_space<semaphore_mem>>
    %66 = tpu.memref_squeeze %65 : memref<1x1x!tpu.dma_semaphore, #tpu.memory_space<semaphore_mem>> -> memref<!tpu.dma_semaphore, #tpu.memory_space<semaphore_mem>>
    tpu.enqueue_dma source(%62 : memref<1x128xf32, #tpu.memory_space<any>>) target(%64 : memref<1x128xf32, #tpu.memory_space<vmem>>) target_semaphore(%66 : memref<!tpu.dma_semaphore, #tpu.memory_space<semaphore_mem>>)
    %c7_i32 = arith.constant 7 : i32
    %67 = arith.addi %2, %c7_i32 : i32
    %68 = arith.index_cast %67 : i32 to index
    %c0_49 = arith.constant 0 : index
    %69 = memref.load %arg2[%68, %c0_49] : memref<16x8xi32, #tpu.memory_space<smem>>
    %70 = arith.addi %3, %69 : i32
    %c0_i32_50 = arith.constant 0 : i32
    %c0_i32_51 = arith.constant 0 : i32
    %c7_i32_52 = arith.constant 7 : i32
    %c0_i32_53 = arith.constant 0 : i32
    %71 = tpu.memref_slice %arg5[%70, %c0_i32_53] : memref<512x128xf32, #tpu.memory_space<any>> -> memref<1x128xf32, #tpu.memory_space<any>>
    %c7_i32_54 = arith.constant 7 : i32
    %c0_i32_55 = arith.constant 0 : i32
    %72 = tpu.memref_slice %arg7[%c0_i32_50, %c7_i32_54, %c0_i32_55] : memref<2x8x128xf32, #tpu.memory_space<vmem>> -> memref<1x1x128xf32, #tpu.memory_space<vmem>>
    %73 = tpu.memref_squeeze %72 : memref<1x1x128xf32, #tpu.memory_space<vmem>> -> memref<1x128xf32, #tpu.memory_space<vmem>>
    %74 = tpu.memref_slice %arg8[%c0_i32_51, %c7_i32_52] : memref<2x8x!tpu.dma_semaphore, #tpu.memory_space<semaphore_mem>> -> memref<1x1x!tpu.dma_semaphore, #tpu.memory_space<semaphore_mem>>
    %75 = tpu.memref_squeeze %74 : memref<1x1x!tpu.dma_semaphore, #tpu.memory_space<semaphore_mem>> -> memref<!tpu.dma_semaphore, #tpu.memory_space<semaphore_mem>>
    tpu.enqueue_dma source(%71 : memref<1x128xf32, #tpu.memory_space<any>>) target(%73 : memref<1x128xf32, #tpu.memory_space<vmem>>) target_semaphore(%75 : memref<!tpu.dma_semaphore, #tpu.memory_space<semaphore_mem>>)
    %c0_56 = arith.constant 0 : index
    %c0_57 = arith.constant 0 : index
    %c0_58 = arith.constant 0 : index
    %76 = vector.load %arg3[%c0_56, %c0_57, %c0_58] : memref<1x8x1xi32, #tpu.memory_space<vmem>>, vector<1x8x1xi32>
    %77 = vector.shape_cast %76 : vector<1x8x1xi32> to vector<8x1xi32>
    %c0_59 = arith.constant 0 : index
    %c0_60 = arith.constant 0 : index
    %c0_61 = arith.constant 0 : index
    %78 = vector.load %arg4[%c0_59, %c0_60, %c0_61] : memref<1x1x8xf32, #tpu.memory_space<vmem>>, vector<1x1x8xf32>
    %79 = vector.shape_cast %78 : vector<1x1x8xf32> to vector<1x8xf32>
    %80 = tpu.iota {dimensions = array<i32: 1>} : vector<8x8xi32>
    %81 = vector.broadcast %77 : vector<8x1xi32> to vector<8x8xi32>
    %82 = arith.cmpi slt, %80, %81 : vector<8x8xi32>
    %cst = arith.constant 0.000000e+00 : f32
    %83 = vector.shape_cast %79 : vector<1x8xf32> to vector<1x8xf32>
    %84 = vector.broadcast %83 : vector<1x8xf32> to vector<8x8xf32>
    %85 = vector.broadcast %cst : f32 to vector<8x8xf32>
    %86 = arith.select %82, %84, %85 : vector<8x8xi1>, vector<8x8xf32>
    %cst_62 = arith.constant 0.000000e+00 : f32
    %87 = vector.broadcast %cst_62 : f32 to vector<8x128xf32>
    %c0_i32_63 = arith.constant 0 : i32
    %c0_i32_64 = arith.constant 0 : i32
    %c0_i32_65 = arith.constant 0 : i32
    %c0_i32_66 = arith.constant 0 : i32
    %c0_i32_67 = arith.constant 0 : i32
    %88 = tpu.memref_slice %arg5[%c0_i32_66, %c0_i32_67] : memref<512x128xf32, #tpu.memory_space<any>> -> memref<1x128xf32, #tpu.memory_space<any>>
    %c0_i32_68 = arith.constant 0 : i32
    %c0_i32_69 = arith.constant 0 : i32
    %89 = tpu.memref_slice %arg7[%c0_i32_63, %c0_i32_68, %c0_i32_69] : memref<2x8x128xf32, #tpu.memory_space<vmem>> -> memref<1x1x128xf32, #tpu.memory_space<vmem>>
    %90 = tpu.memref_squeeze %89 : memref<1x1x128xf32, #tpu.memory_space<vmem>> -> memref<1x128xf32, #tpu.memory_space<vmem>>
    %91 = tpu.memref_slice %arg8[%c0_i32_64, %c0_i32_65] : memref<2x8x!tpu.dma_semaphore, #tpu.memory_space<semaphore_mem>> -> memref<1x1x!tpu.dma_semaphore, #tpu.memory_space<semaphore_mem>>
    %92 = tpu.memref_squeeze %91 : memref<1x1x!tpu.dma_semaphore, #tpu.memory_space<semaphore_mem>> -> memref<!tpu.dma_semaphore, #tpu.memory_space<semaphore_mem>>
    tpu.wait_dma2 semaphore(%92 : memref<!tpu.dma_semaphore, #tpu.memory_space<semaphore_mem>>) src(%88 : memref<1x128xf32, #tpu.memory_space<any>>) dst(%90 : memref<1x128xf32, #tpu.memory_space<vmem>>)
    %c0_i32_70 = arith.constant 0 : i32
    %c0_i32_71 = arith.constant 0 : i32
    %c1_i32_72 = arith.constant 1 : i32
    %c0_i32_73 = arith.constant 0 : i32
    %c0_i32_74 = arith.constant 0 : i32
    %93 = tpu.memref_slice %arg5[%c0_i32_73, %c0_i32_74] : memref<512x128xf32, #tpu.memory_space<any>> -> memref<1x128xf32, #tpu.memory_space<any>>
    %c1_i32_75 = arith.constant 1 : i32
    %c0_i32_76 = arith.constant 0 : i32
    %94 = tpu.memref_slice %arg7[%c0_i32_70, %c1_i32_75, %c0_i32_76] : memref<2x8x128xf32, #tpu.memory_space<vmem>> -> memref<1x1x128xf32, #tpu.memory_space<vmem>>
    %95 = tpu.memref_squeeze %94 : memref<1x1x128xf32, #tpu.memory_space<vmem>> -> memref<1x128xf32, #tpu.memory_space<vmem>>
    %96 = tpu.memref_slice %arg8[%c0_i32_71, %c1_i32_72] : memref<2x8x!tpu.dma_semaphore, #tpu.memory_space<semaphore_mem>> -> memref<1x1x!tpu.dma_semaphore, #tpu.memory_space<semaphore_mem>>
    %97 = tpu.memref_squeeze %96 : memref<1x1x!tpu.dma_semaphore, #tpu.memory_space<semaphore_mem>> -> memref<!tpu.dma_semaphore, #tpu.memory_space<semaphore_mem>>
    tpu.wait_dma2 semaphore(%97 : memref<!tpu.dma_semaphore, #tpu.memory_space<semaphore_mem>>) src(%93 : memref<1x128xf32, #tpu.memory_space<any>>) dst(%95 : memref<1x128xf32, #tpu.memory_space<vmem>>)
    %c0_i32_77 = arith.constant 0 : i32
    %c0_i32_78 = arith.constant 0 : i32
    %c2_i32_79 = arith.constant 2 : i32
    %c0_i32_80 = arith.constant 0 : i32
    %c0_i32_81 = arith.constant 0 : i32
    %98 = tpu.memref_slice %arg5[%c0_i32_80, %c0_i32_81] : memref<512x128xf32, #tpu.memory_space<any>> -> memref<1x128xf32, #tpu.memory_space<any>>
    %c2_i32_82 = arith.constant 2 : i32
    %c0_i32_83 = arith.constant 0 : i32
    %99 = tpu.memref_slice %arg7[%c0_i32_77, %c2_i32_82, %c0_i32_83] : memref<2x8x128xf32, #tpu.memory_space<vmem>> -> memref<1x1x128xf32, #tpu.memory_space<vmem>>
    %100 = tpu.memref_squeeze %99 : memref<1x1x128xf32, #tpu.memory_space<vmem>> -> memref<1x128xf32, #tpu.memory_space<vmem>>
    %101 = tpu.memref_slice %arg8[%c0_i32_78, %c2_i32_79] : memref<2x8x!tpu.dma_semaphore, #tpu.memory_space<semaphore_mem>> -> memref<1x1x!tpu.dma_semaphore, #tpu.memory_space<semaphore_mem>>
    %102 = tpu.memref_squeeze %101 : memref<1x1x!tpu.dma_semaphore, #tpu.memory_space<semaphore_mem>> -> memref<!tpu.dma_semaphore, #tpu.memory_space<semaphore_mem>>
    tpu.wait_dma2 semaphore(%102 : memref<!tpu.dma_semaphore, #tpu.memory_space<semaphore_mem>>) src(%98 : memref<1x128xf32, #tpu.memory_space<any>>) dst(%100 : memref<1x128xf32, #tpu.memory_space<vmem>>)
    %c0_i32_84 = arith.constant 0 : i32
    %c0_i32_85 = arith.constant 0 : i32
    %c3_i32_86 = arith.constant 3 : i32
    %c0_i32_87 = arith.constant 0 : i32
    %c0_i32_88 = arith.constant 0 : i32
    %103 = tpu.memref_slice %arg5[%c0_i32_87, %c0_i32_88] : memref<512x128xf32, #tpu.memory_space<any>> -> memref<1x128xf32, #tpu.memory_space<any>>
    %c3_i32_89 = arith.constant 3 : i32
    %c0_i32_90 = arith.constant 0 : i32
    %104 = tpu.memref_slice %arg7[%c0_i32_84, %c3_i32_89, %c0_i32_90] : memref<2x8x128xf32, #tpu.memory_space<vmem>> -> memref<1x1x128xf32, #tpu.memory_space<vmem>>
    %105 = tpu.memref_squeeze %104 : memref<1x1x128xf32, #tpu.memory_space<vmem>> -> memref<1x128xf32, #tpu.memory_space<vmem>>
    %106 = tpu.memref_slice %arg8[%c0_i32_85, %c3_i32_86] : memref<2x8x!tpu.dma_semaphore, #tpu.memory_space<semaphore_mem>> -> memref<1x1x!tpu.dma_semaphore, #tpu.memory_space<semaphore_mem>>
    %107 = tpu.memref_squeeze %106 : memref<1x1x!tpu.dma_semaphore, #tpu.memory_space<semaphore_mem>> -> memref<!tpu.dma_semaphore, #tpu.memory_space<semaphore_mem>>
    tpu.wait_dma2 semaphore(%107 : memref<!tpu.dma_semaphore, #tpu.memory_space<semaphore_mem>>) src(%103 : memref<1x128xf32, #tpu.memory_space<any>>) dst(%105 : memref<1x128xf32, #tpu.memory_space<vmem>>)
    %c0_i32_91 = arith.constant 0 : i32
    %c0_i32_92 = arith.constant 0 : i32
    %c4_i32_93 = arith.constant 4 : i32
    %c0_i32_94 = arith.constant 0 : i32
    %c0_i32_95 = arith.constant 0 : i32
    %108 = tpu.memref_slice %arg5[%c0_i32_94, %c0_i32_95] : memref<512x128xf32, #tpu.memory_space<any>> -> memref<1x128xf32, #tpu.memory_space<any>>
    %c4_i32_96 = arith.constant 4 : i32
    %c0_i32_97 = arith.constant 0 : i32
    %109 = tpu.memref_slice %arg7[%c0_i32_91, %c4_i32_96, %c0_i32_97] : memref<2x8x128xf32, #tpu.memory_space<vmem>> -> memref<1x1x128xf32, #tpu.memory_space<vmem>>
    %110 = tpu.memref_squeeze %109 : memref<1x1x128xf32, #tpu.memory_space<vmem>> -> memref<1x128xf32, #tpu.memory_space<vmem>>
    %111 = tpu.memref_slice %arg8[%c0_i32_92, %c4_i32_93] : memref<2x8x!tpu.dma_semaphore, #tpu.memory_space<semaphore_mem>> -> memref<1x1x!tpu.dma_semaphore, #tpu.memory_space<semaphore_mem>>
    %112 = tpu.memref_squeeze %111 : memref<1x1x!tpu.dma_semaphore, #tpu.memory_space<semaphore_mem>> -> memref<!tpu.dma_semaphore, #tpu.memory_space<semaphore_mem>>
    tpu.wait_dma2 semaphore(%112 : memref<!tpu.dma_semaphore, #tpu.memory_space<semaphore_mem>>) src(%108 : memref<1x128xf32, #tpu.memory_space<any>>) dst(%110 : memref<1x128xf32, #tpu.memory_space<vmem>>)
    %c0_i32_98 = arith.constant 0 : i32
    %c0_i32_99 = arith.constant 0 : i32
    %c5_i32_100 = arith.constant 5 : i32
    %c0_i32_101 = arith.constant 0 : i32
    %c0_i32_102 = arith.constant 0 : i32
    %113 = tpu.memref_slice %arg5[%c0_i32_101, %c0_i32_102] : memref<512x128xf32, #tpu.memory_space<any>> -> memref<1x128xf32, #tpu.memory_space<any>>
    %c5_i32_103 = arith.constant 5 : i32
    %c0_i32_104 = arith.constant 0 : i32
    %114 = tpu.memref_slice %arg7[%c0_i32_98, %c5_i32_103, %c0_i32_104] : memref<2x8x128xf32, #tpu.memory_space<vmem>> -> memref<1x1x128xf32, #tpu.memory_space<vmem>>
    %115 = tpu.memref_squeeze %114 : memref<1x1x128xf32, #tpu.memory_space<vmem>> -> memref<1x128xf32, #tpu.memory_space<vmem>>
    %116 = tpu.memref_slice %arg8[%c0_i32_99, %c5_i32_100] : memref<2x8x!tpu.dma_semaphore, #tpu.memory_space<semaphore_mem>> -> memref<1x1x!tpu.dma_semaphore, #tpu.memory_space<semaphore_mem>>
    %117 = tpu.memref_squeeze %116 : memref<1x1x!tpu.dma_semaphore, #tpu.memory_space<semaphore_mem>> -> memref<!tpu.dma_semaphore, #tpu.memory_space<semaphore_mem>>
    tpu.wait_dma2 semaphore(%117 : memref<!tpu.dma_semaphore, #tpu.memory_space<semaphore_mem>>) src(%113 : memref<1x128xf32, #tpu.memory_space<any>>) dst(%115 : memref<1x128xf32, #tpu.memory_space<vmem>>)
    %c0_i32_105 = arith.constant 0 : i32
    %c0_i32_106 = arith.constant 0 : i32
    %c6_i32_107 = arith.constant 6 : i32
    %c0_i32_108 = arith.constant 0 : i32
    %c0_i32_109 = arith.constant 0 : i32
    %118 = tpu.memref_slice %arg5[%c0_i32_108, %c0_i32_109] : memref<512x128xf32, #tpu.memory_space<any>> -> memref<1x128xf32, #tpu.memory_space<any>>
    %c6_i32_110 = arith.constant 6 : i32
    %c0_i32_111 = arith.constant 0 : i32
    %119 = tpu.memref_slice %arg7[%c0_i32_105, %c6_i32_110, %c0_i32_111] : memref<2x8x128xf32, #tpu.memory_space<vmem>> -> memref<1x1x128xf32, #tpu.memory_space<vmem>>
    %120 = tpu.memref_squeeze %119 : memref<1x1x128xf32, #tpu.memory_space<vmem>> -> memref<1x128xf32, #tpu.memory_space<vmem>>
    %121 = tpu.memref_slice %arg8[%c0_i32_106, %c6_i32_107] : memref<2x8x!tpu.dma_semaphore, #tpu.memory_space<semaphore_mem>> -> memref<1x1x!tpu.dma_semaphore, #tpu.memory_space<semaphore_mem>>
    %122 = tpu.memref_squeeze %121 : memref<1x1x!tpu.dma_semaphore, #tpu.memory_space<semaphore_mem>> -> memref<!tpu.dma_semaphore, #tpu.memory_space<semaphore_mem>>
    tpu.wait_dma2 semaphore(%122 : memref<!tpu.dma_semaphore, #tpu.memory_space<semaphore_mem>>) src(%118 : memref<1x128xf32, #tpu.memory_space<any>>) dst(%120 : memref<1x128xf32, #tpu.memory_space<vmem>>)
    %c0_i32_112 = arith.constant 0 : i32
    %c0_i32_113 = arith.constant 0 : i32
    %c7_i32_114 = arith.constant 7 : i32
    %c0_i32_115 = arith.constant 0 : i32
    %c0_i32_116 = arith.constant 0 : i32
    %123 = tpu.memref_slice %arg5[%c0_i32_115, %c0_i32_116] : memref<512x128xf32, #tpu.memory_space<any>> -> memref<1x128xf32, #tpu.memory_space<any>>
    %c7_i32_117 = arith.constant 7 : i32
    %c0_i32_118 = arith.constant 0 : i32
    %124 = tpu.memref_slice %arg7[%c0_i32_112, %c7_i32_117, %c0_i32_118] : memref<2x8x128xf32, #tpu.memory_space<vmem>> -> memref<1x1x128xf32, #tpu.memory_space<vmem>>
    %125 = tpu.memref_squeeze %124 : memref<1x1x128xf32, #tpu.memory_space<vmem>> -> memref<1x128xf32, #tpu.memory_space<vmem>>
    %126 = tpu.memref_slice %arg8[%c0_i32_113, %c7_i32_114] : memref<2x8x!tpu.dma_semaphore, #tpu.memory_space<semaphore_mem>> -> memref<1x1x!tpu.dma_semaphore, #tpu.memory_space<semaphore_mem>>
    %127 = tpu.memref_squeeze %126 : memref<1x1x!tpu.dma_semaphore, #tpu.memory_space<semaphore_mem>> -> memref<!tpu.dma_semaphore, #tpu.memory_space<semaphore_mem>>
    tpu.wait_dma2 semaphore(%127 : memref<!tpu.dma_semaphore, #tpu.memory_space<semaphore_mem>>) src(%123 : memref<1x128xf32, #tpu.memory_space<any>>) dst(%125 : memref<1x128xf32, #tpu.memory_space<vmem>>)
    %c0_i32_119 = arith.constant 0 : i32
    %128 = arith.addi %2, %c0_i32_119 : i32
    %129 = arith.index_cast %128 : i32 to index
    %c1 = arith.constant 1 : index
    %130 = memref.load %arg2[%129, %c1] : memref<16x8xi32, #tpu.memory_space<smem>>
    %131 = arith.addi %3, %130 : i32
    %c1_i32_120 = arith.constant 1 : i32
    %c1_i32_121 = arith.constant 1 : i32
    %c0_i32_122 = arith.constant 0 : i32
    %c0_i32_123 = arith.constant 0 : i32
    %132 = tpu.memref_slice %arg5[%131, %c0_i32_123] : memref<512x128xf32, #tpu.memory_space<any>> -> memref<1x128xf32, #tpu.memory_space<any>>
    %c0_i32_124 = arith.constant 0 : i32
    %c0_i32_125 = arith.constant 0 : i32
    %133 = tpu.memref_slice %arg7[%c1_i32_120, %c0_i32_124, %c0_i32_125] : memref<2x8x128xf32, #tpu.memory_space<vmem>> -> memref<1x1x128xf32, #tpu.memory_space<vmem>>
    %134 = tpu.memref_squeeze %133 : memref<1x1x128xf32, #tpu.memory_space<vmem>> -> memref<1x128xf32, #tpu.memory_space<vmem>>
    %135 = tpu.memref_slice %arg8[%c1_i32_121, %c0_i32_122] : memref<2x8x!tpu.dma_semaphore, #tpu.memory_space<semaphore_mem>> -> memref<1x1x!tpu.dma_semaphore, #tpu.memory_space<semaphore_mem>>
    %136 = tpu.memref_squeeze %135 : memref<1x1x!tpu.dma_semaphore, #tpu.memory_space<semaphore_mem>> -> memref<!tpu.dma_semaphore, #tpu.memory_space<semaphore_mem>>
    tpu.enqueue_dma source(%132 : memref<1x128xf32, #tpu.memory_space<any>>) target(%134 : memref<1x128xf32, #tpu.memory_space<vmem>>) target_semaphore(%136 : memref<!tpu.dma_semaphore, #tpu.memory_space<semaphore_mem>>)
    %c1_i32_126 = arith.constant 1 : i32
    %137 = arith.addi %2, %c1_i32_126 : i32
    %138 = arith.index_cast %137 : i32 to index
    %c1_127 = arith.constant 1 : index
    %139 = memref.load %arg2[%138, %c1_127] : memref<16x8xi32, #tpu.memory_space<smem>>
    %140 = arith.addi %3, %139 : i32
    %c1_i32_128 = arith.constant 1 : i32
    %c1_i32_129 = arith.constant 1 : i32
    %c1_i32_130 = arith.constant 1 : i32
    %c0_i32_131 = arith.constant 0 : i32
    %141 = tpu.memref_slice %arg5[%140, %c0_i32_131] : memref<512x128xf32, #tpu.memory_space<any>> -> memref<1x128xf32, #tpu.memory_space<any>>
    %c1_i32_132 = arith.constant 1 : i32
    %c0_i32_133 = arith.constant 0 : i32
    %142 = tpu.memref_slice %arg7[%c1_i32_128, %c1_i32_132, %c0_i32_133] : memref<2x8x128xf32, #tpu.memory_space<vmem>> -> memref<1x1x128xf32, #tpu.memory_space<vmem>>
    %143 = tpu.memref_squeeze %142 : memref<1x1x128xf32, #tpu.memory_space<vmem>> -> memref<1x128xf32, #tpu.memory_space<vmem>>
    %144 = tpu.memref_slice %arg8[%c1_i32_129, %c1_i32_130] : memref<2x8x!tpu.dma_semaphore, #tpu.memory_space<semaphore_mem>> -> memref<1x1x!tpu.dma_semaphore, #tpu.memory_space<semaphore_mem>>
    %145 = tpu.memref_squeeze %144 : memref<1x1x!tpu.dma_semaphore, #tpu.memory_space<semaphore_mem>> -> memref<!tpu.dma_semaphore, #tpu.memory_space<semaphore_mem>>
    tpu.enqueue_dma source(%141 : memref<1x128xf32, #tpu.memory_space<any>>) target(%143 : memref<1x128xf32, #tpu.memory_space<vmem>>) target_semaphore(%145 : memref<!tpu.dma_semaphore, #tpu.memory_space<semaphore_mem>>)
    %c2_i32_134 = arith.constant 2 : i32
    %146 = arith.addi %2, %c2_i32_134 : i32
    %147 = arith.index_cast %146 : i32 to index
    %c1_135 = arith.constant 1 : index
    %148 = memref.load %arg2[%147, %c1_135] : memref<16x8xi32, #tpu.memory_space<smem>>
    %149 = arith.addi %3, %148 : i32
    %c1_i32_136 = arith.constant 1 : i32
    %c1_i32_137 = arith.constant 1 : i32
    %c2_i32_138 = arith.constant 2 : i32
    %c0_i32_139 = arith.constant 0 : i32
    %150 = tpu.memref_slice %arg5[%149, %c0_i32_139] : memref<512x128xf32, #tpu.memory_space<any>> -> memref<1x128xf32, #tpu.memory_space<any>>
    %c2_i32_140 = arith.constant 2 : i32
    %c0_i32_141 = arith.constant 0 : i32
    %151 = tpu.memref_slice %arg7[%c1_i32_136, %c2_i32_140, %c0_i32_141] : memref<2x8x128xf32, #tpu.memory_space<vmem>> -> memref<1x1x128xf32, #tpu.memory_space<vmem>>
    %152 = tpu.memref_squeeze %151 : memref<1x1x128xf32, #tpu.memory_space<vmem>> -> memref<1x128xf32, #tpu.memory_space<vmem>>
    %153 = tpu.memref_slice %arg8[%c1_i32_137, %c2_i32_138] : memref<2x8x!tpu.dma_semaphore, #tpu.memory_space<semaphore_mem>> -> memref<1x1x!tpu.dma_semaphore, #tpu.memory_space<semaphore_mem>>
    %154 = tpu.memref_squeeze %153 : memref<1x1x!tpu.dma_semaphore, #tpu.memory_space<semaphore_mem>> -> memref<!tpu.dma_semaphore, #tpu.memory_space<semaphore_mem>>
    tpu.enqueue_dma source(%150 : memref<1x128xf32, #tpu.memory_space<any>>) target(%152 : memref<1x128xf32, #tpu.memory_space<vmem>>) target_semaphore(%154 : memref<!tpu.dma_semaphore, #tpu.memory_space<semaphore_mem>>)
    %c3_i32_142 = arith.constant 3 : i32
    %155 = arith.addi %2, %c3_i32_142 : i32
    %156 = arith.index_cast %155 : i32 to index
    %c1_143 = arith.constant 1 : index
    %157 = memref.load %arg2[%156, %c1_143] : memref<16x8xi32, #tpu.memory_space<smem>>
    %158 = arith.addi %3, %157 : i32
    %c1_i32_144 = arith.constant 1 : i32
    %c1_i32_145 = arith.constant 1 : i32
    %c3_i32_146 = arith.constant 3 : i32
    %c0_i32_147 = arith.constant 0 : i32
    %159 = tpu.memref_slice %arg5[%158, %c0_i32_147] : memref<512x128xf32, #tpu.memory_space<any>> -> memref<1x128xf32, #tpu.memory_space<any>>
    %c3_i32_148 = arith.constant 3 : i32
    %c0_i32_149 = arith.constant 0 : i32
    %160 = tpu.memref_slice %arg7[%c1_i32_144, %c3_i32_148, %c0_i32_149] : memref<2x8x128xf32, #tpu.memory_space<vmem>> -> memref<1x1x128xf32, #tpu.memory_space<vmem>>
    %161 = tpu.memref_squeeze %160 : memref<1x1x128xf32, #tpu.memory_space<vmem>> -> memref<1x128xf32, #tpu.memory_space<vmem>>
    %162 = tpu.memref_slice %arg8[%c1_i32_145, %c3_i32_146] : memref<2x8x!tpu.dma_semaphore, #tpu.memory_space<semaphore_mem>> -> memref<1x1x!tpu.dma_semaphore, #tpu.memory_space<semaphore_mem>>
    %163 = tpu.memref_squeeze %162 : memref<1x1x!tpu.dma_semaphore, #tpu.memory_space<semaphore_mem>> -> memref<!tpu.dma_semaphore, #tpu.memory_space<semaphore_mem>>
    tpu.enqueue_dma source(%159 : memref<1x128xf32, #tpu.memory_space<any>>) target(%161 : memref<1x128xf32, #tpu.memory_space<vmem>>) target_semaphore(%163 : memref<!tpu.dma_semaphore, #tpu.memory_space<semaphore_mem>>)
    %c4_i32_150 = arith.constant 4 : i32
    %164 = arith.addi %2, %c4_i32_150 : i32
    %165 = arith.index_cast %164 : i32 to index
    %c1_151 = arith.constant 1 : index
    %166 = memref.load %arg2[%165, %c1_151] : memref<16x8xi32, #tpu.memory_space<smem>>
    %167 = arith.addi %3, %166 : i32
    %c1_i32_152 = arith.constant 1 : i32
    %c1_i32_153 = arith.constant 1 : i32
    %c4_i32_154 = arith.constant 4 : i32
    %c0_i32_155 = arith.constant 0 : i32
    %168 = tpu.memref_slice %arg5[%167, %c0_i32_155] : memref<512x128xf32, #tpu.memory_space<any>> -> memref<1x128xf32, #tpu.memory_space<any>>
    %c4_i32_156 = arith.constant 4 : i32
    %c0_i32_157 = arith.constant 0 : i32
    %169 = tpu.memref_slice %arg7[%c1_i32_152, %c4_i32_156, %c0_i32_157] : memref<2x8x128xf32, #tpu.memory_space<vmem>> -> memref<1x1x128xf32, #tpu.memory_space<vmem>>
    %170 = tpu.memref_squeeze %169 : memref<1x1x128xf32, #tpu.memory_space<vmem>> -> memref<1x128xf32, #tpu.memory_space<vmem>>
    %171 = tpu.memref_slice %arg8[%c1_i32_153, %c4_i32_154] : memref<2x8x!tpu.dma_semaphore, #tpu.memory_space<semaphore_mem>> -> memref<1x1x!tpu.dma_semaphore, #tpu.memory_space<semaphore_mem>>
    %172 = tpu.memref_squeeze %171 : memref<1x1x!tpu.dma_semaphore, #tpu.memory_space<semaphore_mem>> -> memref<!tpu.dma_semaphore, #tpu.memory_space<semaphore_mem>>
    tpu.enqueue_dma source(%168 : memref<1x128xf32, #tpu.memory_space<any>>) target(%170 : memref<1x128xf32, #tpu.memory_space<vmem>>) target_semaphore(%172 : memref<!tpu.dma_semaphore, #tpu.memory_space<semaphore_mem>>)
    %c5_i32_158 = arith.constant 5 : i32
    %173 = arith.addi %2, %c5_i32_158 : i32
    %174 = arith.index_cast %173 : i32 to index
    %c1_159 = arith.constant 1 : index
    %175 = memref.load %arg2[%174, %c1_159] : memref<16x8xi32, #tpu.memory_space<smem>>
    %176 = arith.addi %3, %175 : i32
    %c1_i32_160 = arith.constant 1 : i32
    %c1_i32_161 = arith.constant 1 : i32
    %c5_i32_162 = arith.constant 5 : i32
    %c0_i32_163 = arith.constant 0 : i32
    %177 = tpu.memref_slice %arg5[%176, %c0_i32_163] : memref<512x128xf32, #tpu.memory_space<any>> -> memref<1x128xf32, #tpu.memory_space<any>>
    %c5_i32_164 = arith.constant 5 : i32
    %c0_i32_165 = arith.constant 0 : i32
    %178 = tpu.memref_slice %arg7[%c1_i32_160, %c5_i32_164, %c0_i32_165] : memref<2x8x128xf32, #tpu.memory_space<vmem>> -> memref<1x1x128xf32, #tpu.memory_space<vmem>>
    %179 = tpu.memref_squeeze %178 : memref<1x1x128xf32, #tpu.memory_space<vmem>> -> memref<1x128xf32, #tpu.memory_space<vmem>>
    %180 = tpu.memref_slice %arg8[%c1_i32_161, %c5_i32_162] : memref<2x8x!tpu.dma_semaphore, #tpu.memory_space<semaphore_mem>> -> memref<1x1x!tpu.dma_semaphore, #tpu.memory_space<semaphore_mem>>
    %181 = tpu.memref_squeeze %180 : memref<1x1x!tpu.dma_semaphore, #tpu.memory_space<semaphore_mem>> -> memref<!tpu.dma_semaphore, #tpu.memory_space<semaphore_mem>>
    tpu.enqueue_dma source(%177 : memref<1x128xf32, #tpu.memory_space<any>>) target(%179 : memref<1x128xf32, #tpu.memory_space<vmem>>) target_semaphore(%181 : memref<!tpu.dma_semaphore, #tpu.memory_space<semaphore_mem>>)
    %c6_i32_166 = arith.constant 6 : i32
    %182 = arith.addi %2, %c6_i32_166 : i32
    %183 = arith.index_cast %182 : i32 to index
    %c1_167 = arith.constant 1 : index
    %184 = memref.load %arg2[%183, %c1_167] : memref<16x8xi32, #tpu.memory_space<smem>>
    %185 = arith.addi %3, %184 : i32
    %c1_i32_168 = arith.constant 1 : i32
    %c1_i32_169 = arith.constant 1 : i32
    %c6_i32_170 = arith.constant 6 : i32
    %c0_i32_171 = arith.constant 0 : i32
    %186 = tpu.memref_slice %arg5[%185, %c0_i32_171] : memref<512x128xf32, #tpu.memory_space<any>> -> memref<1x128xf32, #tpu.memory_space<any>>
    %c6_i32_172 = arith.constant 6 : i32
    %c0_i32_173 = arith.constant 0 : i32
    %187 = tpu.memref_slice %arg7[%c1_i32_168, %c6_i32_172, %c0_i32_173] : memref<2x8x128xf32, #tpu.memory_space<vmem>> -> memref<1x1x128xf32, #tpu.memory_space<vmem>>
    %188 = tpu.memref_squeeze %187 : memref<1x1x128xf32, #tpu.memory_space<vmem>> -> memref<1x128xf32, #tpu.memory_space<vmem>>
    %189 = tpu.memref_slice %arg8[%c1_i32_169, %c6_i32_170] : memref<2x8x!tpu.dma_semaphore, #tpu.memory_space<semaphore_mem>> -> memref<1x1x!tpu.dma_semaphore, #tpu.memory_space<semaphore_mem>>
    %190 = tpu.memref_squeeze %189 : memref<1x1x!tpu.dma_semaphore, #tpu.memory_space<semaphore_mem>> -> memref<!tpu.dma_semaphore, #tpu.memory_space<semaphore_mem>>
    tpu.enqueue_dma source(%186 : memref<1x128xf32, #tpu.memory_space<any>>) target(%188 : memref<1x128xf32, #tpu.memory_space<vmem>>) target_semaphore(%190 : memref<!tpu.dma_semaphore, #tpu.memory_space<semaphore_mem>>)
    %c7_i32_174 = arith.constant 7 : i32
    %191 = arith.addi %2, %c7_i32_174 : i32
    %192 = arith.index_cast %191 : i32 to index
    %c1_175 = arith.constant 1 : index
    %193 = memref.load %arg2[%192, %c1_175] : memref<16x8xi32, #tpu.memory_space<smem>>
    %194 = arith.addi %3, %193 : i32
    %c1_i32_176 = arith.constant 1 : i32
    %c1_i32_177 = arith.constant 1 : i32
    %c7_i32_178 = arith.constant 7 : i32
    %c0_i32_179 = arith.constant 0 : i32
    %195 = tpu.memref_slice %arg5[%194, %c0_i32_179] : memref<512x128xf32, #tpu.memory_space<any>> -> memref<1x128xf32, #tpu.memory_space<any>>
    %c7_i32_180 = arith.constant 7 : i32
    %c0_i32_181 = arith.constant 0 : i32
    %196 = tpu.memref_slice %arg7[%c1_i32_176, %c7_i32_180, %c0_i32_181] : memref<2x8x128xf32, #tpu.memory_space<vmem>> -> memref<1x1x128xf32, #tpu.memory_space<vmem>>
    %197 = tpu.memref_squeeze %196 : memref<1x1x128xf32, #tpu.memory_space<vmem>> -> memref<1x128xf32, #tpu.memory_space<vmem>>
    %198 = tpu.memref_slice %arg8[%c1_i32_177, %c7_i32_178] : memref<2x8x!tpu.dma_semaphore, #tpu.memory_space<semaphore_mem>> -> memref<1x1x!tpu.dma_semaphore, #tpu.memory_space<semaphore_mem>>
    %199 = tpu.memref_squeeze %198 : memref<1x1x!tpu.dma_semaphore, #tpu.memory_space<semaphore_mem>> -> memref<!tpu.dma_semaphore, #tpu.memory_space<semaphore_mem>>
    tpu.enqueue_dma source(%195 : memref<1x128xf32, #tpu.memory_space<any>>) target(%197 : memref<1x128xf32, #tpu.memory_space<vmem>>) target_semaphore(%199 : memref<!tpu.dma_semaphore, #tpu.memory_space<semaphore_mem>>)
    %200 = vector.extract_strided_slice %86 {offsets = [0, 0], sizes = [8, 1], strides = [1, 1]} : vector<8x8xf32> to vector<8x1xf32>
    %c0_182 = arith.constant 0 : index
    %c0_183 = arith.constant 0 : index
    %c0_184 = arith.constant 0 : index
    %201 = vector.load %arg7[%c0_182, %c0_183, %c0_184] : memref<2x8x128xf32, #tpu.memory_space<vmem>>, vector<1x8x128xf32>
    %202 = vector.shape_cast %201 : vector<1x8x128xf32> to vector<8x128xf32>
    %203 = vector.broadcast %200 : vector<8x1xf32> to vector<8x128xf32>
    %204 = arith.mulf %203, %202 : vector<8x128xf32>
    %205 = arith.addf %87, %204 : vector<8x128xf32>
    %c1_i32_185 = arith.constant 1 : i32
    %c1_i32_186 = arith.constant 1 : i32
    %c0_i32_187 = arith.constant 0 : i32
    %c0_i32_188 = arith.constant 0 : i32
    %c0_i32_189 = arith.constant 0 : i32
    %206 = tpu.memref_slice %arg5[%c0_i32_188, %c0_i32_189] : memref<512x128xf32, #tpu.memory_space<any>> -> memref<1x128xf32, #tpu.memory_space<any>>
    %c0_i32_190 = arith.constant 0 : i32
    %c0_i32_191 = arith.constant 0 : i32
    %207 = tpu.memref_slice %arg7[%c1_i32_185, %c0_i32_190, %c0_i32_191] : memref<2x8x128xf32, #tpu.memory_space<vmem>> -> memref<1x1x128xf32, #tpu.memory_space<vmem>>
    %208 = tpu.memref_squeeze %207 : memref<1x1x128xf32, #tpu.memory_space<vmem>> -> memref<1x128xf32, #tpu.memory_space<vmem>>
    %209 = tpu.memref_slice %arg8[%c1_i32_186, %c0_i32_187] : memref<2x8x!tpu.dma_semaphore, #tpu.memory_space<semaphore_mem>> -> memref<1x1x!tpu.dma_semaphore, #tpu.memory_space<semaphore_mem>>
    %210 = tpu.memref_squeeze %209 : memref<1x1x!tpu.dma_semaphore, #tpu.memory_space<semaphore_mem>> -> memref<!tpu.dma_semaphore, #tpu.memory_space<semaphore_mem>>
    tpu.wait_dma2 semaphore(%210 : memref<!tpu.dma_semaphore, #tpu.memory_space<semaphore_mem>>) src(%206 : memref<1x128xf32, #tpu.memory_space<any>>) dst(%208 : memref<1x128xf32, #tpu.memory_space<vmem>>)
    %c1_i32_192 = arith.constant 1 : i32
    %c1_i32_193 = arith.constant 1 : i32
    %c1_i32_194 = arith.constant 1 : i32
    %c0_i32_195 = arith.constant 0 : i32
    %c0_i32_196 = arith.constant 0 : i32
    %211 = tpu.memref_slice %arg5[%c0_i32_195, %c0_i32_196] : memref<512x128xf32, #tpu.memory_space<any>> -> memref<1x128xf32, #tpu.memory_space<any>>
    %c1_i32_197 = arith.constant 1 : i32
    %c0_i32_198 = arith.constant 0 : i32
    %212 = tpu.memref_slice %arg7[%c1_i32_192, %c1_i32_197, %c0_i32_198] : memref<2x8x128xf32, #tpu.memory_space<vmem>> -> memref<1x1x128xf32, #tpu.memory_space<vmem>>
    %213 = tpu.memref_squeeze %212 : memref<1x1x128xf32, #tpu.memory_space<vmem>> -> memref<1x128xf32, #tpu.memory_space<vmem>>
    %214 = tpu.memref_slice %arg8[%c1_i32_193, %c1_i32_194] : memref<2x8x!tpu.dma_semaphore, #tpu.memory_space<semaphore_mem>> -> memref<1x1x!tpu.dma_semaphore, #tpu.memory_space<semaphore_mem>>
    %215 = tpu.memref_squeeze %214 : memref<1x1x!tpu.dma_semaphore, #tpu.memory_space<semaphore_mem>> -> memref<!tpu.dma_semaphore, #tpu.memory_space<semaphore_mem>>
    tpu.wait_dma2 semaphore(%215 : memref<!tpu.dma_semaphore, #tpu.memory_space<semaphore_mem>>) src(%211 : memref<1x128xf32, #tpu.memory_space<any>>) dst(%213 : memref<1x128xf32, #tpu.memory_space<vmem>>)
    %c1_i32_199 = arith.constant 1 : i32
    %c1_i32_200 = arith.constant 1 : i32
    %c2_i32_201 = arith.constant 2 : i32
    %c0_i32_202 = arith.constant 0 : i32
    %c0_i32_203 = arith.constant 0 : i32
    %216 = tpu.memref_slice %arg5[%c0_i32_202, %c0_i32_203] : memref<512x128xf32, #tpu.memory_space<any>> -> memref<1x128xf32, #tpu.memory_space<any>>
    %c2_i32_204 = arith.constant 2 : i32
    %c0_i32_205 = arith.constant 0 : i32
    %217 = tpu.memref_slice %arg7[%c1_i32_199, %c2_i32_204, %c0_i32_205] : memref<2x8x128xf32, #tpu.memory_space<vmem>> -> memref<1x1x128xf32, #tpu.memory_space<vmem>>
    %218 = tpu.memref_squeeze %217 : memref<1x1x128xf32, #tpu.memory_space<vmem>> -> memref<1x128xf32, #tpu.memory_space<vmem>>
    %219 = tpu.memref_slice %arg8[%c1_i32_200, %c2_i32_201] : memref<2x8x!tpu.dma_semaphore, #tpu.memory_space<semaphore_mem>> -> memref<1x1x!tpu.dma_semaphore, #tpu.memory_space<semaphore_mem>>
    %220 = tpu.memref_squeeze %219 : memref<1x1x!tpu.dma_semaphore, #tpu.memory_space<semaphore_mem>> -> memref<!tpu.dma_semaphore, #tpu.memory_space<semaphore_mem>>
    tpu.wait_dma2 semaphore(%220 : memref<!tpu.dma_semaphore, #tpu.memory_space<semaphore_mem>>) src(%216 : memref<1x128xf32, #tpu.memory_space<any>>) dst(%218 : memref<1x128xf32, #tpu.memory_space<vmem>>)
    %c1_i32_206 = arith.constant 1 : i32
    %c1_i32_207 = arith.constant 1 : i32
    %c3_i32_208 = arith.constant 3 : i32
    %c0_i32_209 = arith.constant 0 : i32
    %c0_i32_210 = arith.constant 0 : i32
    %221 = tpu.memref_slice %arg5[%c0_i32_209, %c0_i32_210] : memref<512x128xf32, #tpu.memory_space<any>> -> memref<1x128xf32, #tpu.memory_space<any>>
    %c3_i32_211 = arith.constant 3 : i32
    %c0_i32_212 = arith.constant 0 : i32
    %222 = tpu.memref_slice %arg7[%c1_i32_206, %c3_i32_211, %c0_i32_212] : memref<2x8x128xf32, #tpu.memory_space<vmem>> -> memref<1x1x128xf32, #tpu.memory_space<vmem>>
    %223 = tpu.memref_squeeze %222 : memref<1x1x128xf32, #tpu.memory_space<vmem>> -> memref<1x128xf32, #tpu.memory_space<vmem>>
    %224 = tpu.memref_slice %arg8[%c1_i32_207, %c3_i32_208] : memref<2x8x!tpu.dma_semaphore, #tpu.memory_space<semaphore_mem>> -> memref<1x1x!tpu.dma_semaphore, #tpu.memory_space<semaphore_mem>>
    %225 = tpu.memref_squeeze %224 : memref<1x1x!tpu.dma_semaphore, #tpu.memory_space<semaphore_mem>> -> memref<!tpu.dma_semaphore, #tpu.memory_space<semaphore_mem>>
    tpu.wait_dma2 semaphore(%225 : memref<!tpu.dma_semaphore, #tpu.memory_space<semaphore_mem>>) src(%221 : memref<1x128xf32, #tpu.memory_space<any>>) dst(%223 : memref<1x128xf32, #tpu.memory_space<vmem>>)
    %c1_i32_213 = arith.constant 1 : i32
    %c1_i32_214 = arith.constant 1 : i32
    %c4_i32_215 = arith.constant 4 : i32
    %c0_i32_216 = arith.constant 0 : i32
    %c0_i32_217 = arith.constant 0 : i32
    %226 = tpu.memref_slice %arg5[%c0_i32_216, %c0_i32_217] : memref<512x128xf32, #tpu.memory_space<any>> -> memref<1x128xf32, #tpu.memory_space<any>>
    %c4_i32_218 = arith.constant 4 : i32
    %c0_i32_219 = arith.constant 0 : i32
    %227 = tpu.memref_slice %arg7[%c1_i32_213, %c4_i32_218, %c0_i32_219] : memref<2x8x128xf32, #tpu.memory_space<vmem>> -> memref<1x1x128xf32, #tpu.memory_space<vmem>>
    %228 = tpu.memref_squeeze %227 : memref<1x1x128xf32, #tpu.memory_space<vmem>> -> memref<1x128xf32, #tpu.memory_space<vmem>>
    %229 = tpu.memref_slice %arg8[%c1_i32_214, %c4_i32_215] : memref<2x8x!tpu.dma_semaphore, #tpu.memory_space<semaphore_mem>> -> memref<1x1x!tpu.dma_semaphore, #tpu.memory_space<semaphore_mem>>
    %230 = tpu.memref_squeeze %229 : memref<1x1x!tpu.dma_semaphore, #tpu.memory_space<semaphore_mem>> -> memref<!tpu.dma_semaphore, #tpu.memory_space<semaphore_mem>>
    tpu.wait_dma2 semaphore(%230 : memref<!tpu.dma_semaphore, #tpu.memory_space<semaphore_mem>>) src(%226 : memref<1x128xf32, #tpu.memory_space<any>>) dst(%228 : memref<1x128xf32, #tpu.memory_space<vmem>>)
    %c1_i32_220 = arith.constant 1 : i32
    %c1_i32_221 = arith.constant 1 : i32
    %c5_i32_222 = arith.constant 5 : i32
    %c0_i32_223 = arith.constant 0 : i32
    %c0_i32_224 = arith.constant 0 : i32
    %231 = tpu.memref_slice %arg5[%c0_i32_223, %c0_i32_224] : memref<512x128xf32, #tpu.memory_space<any>> -> memref<1x128xf32, #tpu.memory_space<any>>
    %c5_i32_225 = arith.constant 5 : i32
    %c0_i32_226 = arith.constant 0 : i32
    %232 = tpu.memref_slice %arg7[%c1_i32_220, %c5_i32_225, %c0_i32_226] : memref<2x8x128xf32, #tpu.memory_space<vmem>> -> memref<1x1x128xf32, #tpu.memory_space<vmem>>
    %233 = tpu.memref_squeeze %232 : memref<1x1x128xf32, #tpu.memory_space<vmem>> -> memref<1x128xf32, #tpu.memory_space<vmem>>
    %234 = tpu.memref_slice %arg8[%c1_i32_221, %c5_i32_222] : memref<2x8x!tpu.dma_semaphore, #tpu.memory_space<semaphore_mem>> -> memref<1x1x!tpu.dma_semaphore, #tpu.memory_space<semaphore_mem>>
    %235 = tpu.memref_squeeze %234 : memref<1x1x!tpu.dma_semaphore, #tpu.memory_space<semaphore_mem>> -> memref<!tpu.dma_semaphore, #tpu.memory_space<semaphore_mem>>
    tpu.wait_dma2 semaphore(%235 : memref<!tpu.dma_semaphore, #tpu.memory_space<semaphore_mem>>) src(%231 : memref<1x128xf32, #tpu.memory_space<any>>) dst(%233 : memref<1x128xf32, #tpu.memory_space<vmem>>)
    %c1_i32_227 = arith.constant 1 : i32
    %c1_i32_228 = arith.constant 1 : i32
    %c6_i32_229 = arith.constant 6 : i32
    %c0_i32_230 = arith.constant 0 : i32
    %c0_i32_231 = arith.constant 0 : i32
    %236 = tpu.memref_slice %arg5[%c0_i32_230, %c0_i32_231] : memref<512x128xf32, #tpu.memory_space<any>> -> memref<1x128xf32, #tpu.memory_space<any>>
    %c6_i32_232 = arith.constant 6 : i32
    %c0_i32_233 = arith.constant 0 : i32
    %237 = tpu.memref_slice %arg7[%c1_i32_227, %c6_i32_232, %c0_i32_233] : memref<2x8x128xf32, #tpu.memory_space<vmem>> -> memref<1x1x128xf32, #tpu.memory_space<vmem>>
    %238 = tpu.memref_squeeze %237 : memref<1x1x128xf32, #tpu.memory_space<vmem>> -> memref<1x128xf32, #tpu.memory_space<vmem>>
    %239 = tpu.memref_slice %arg8[%c1_i32_228, %c6_i32_229] : memref<2x8x!tpu.dma_semaphore, #tpu.memory_space<semaphore_mem>> -> memref<1x1x!tpu.dma_semaphore, #tpu.memory_space<semaphore_mem>>
    %240 = tpu.memref_squeeze %239 : memref<1x1x!tpu.dma_semaphore, #tpu.memory_space<semaphore_mem>> -> memref<!tpu.dma_semaphore, #tpu.memory_space<semaphore_mem>>
    tpu.wait_dma2 semaphore(%240 : memref<!tpu.dma_semaphore, #tpu.memory_space<semaphore_mem>>) src(%236 : memref<1x128xf32, #tpu.memory_space<any>>) dst(%238 : memref<1x128xf32, #tpu.memory_space<vmem>>)
    %c1_i32_234 = arith.constant 1 : i32
    %c1_i32_235 = arith.constant 1 : i32
    %c7_i32_236 = arith.constant 7 : i32
    %c0_i32_237 = arith.constant 0 : i32
    %c0_i32_238 = arith.constant 0 : i32
    %241 = tpu.memref_slice %arg5[%c0_i32_237, %c0_i32_238] : memref<512x128xf32, #tpu.memory_space<any>> -> memref<1x128xf32, #tpu.memory_space<any>>
    %c7_i32_239 = arith.constant 7 : i32
    %c0_i32_240 = arith.constant 0 : i32
    %242 = tpu.memref_slice %arg7[%c1_i32_234, %c7_i32_239, %c0_i32_240] : memref<2x8x128xf32, #tpu.memory_space<vmem>> -> memref<1x1x128xf32, #tpu.memory_space<vmem>>
    %243 = tpu.memref_squeeze %242 : memref<1x1x128xf32, #tpu.memory_space<vmem>> -> memref<1x128xf32, #tpu.memory_space<vmem>>
    %244 = tpu.memref_slice %arg8[%c1_i32_235, %c7_i32_236] : memref<2x8x!tpu.dma_semaphore, #tpu.memory_space<semaphore_mem>> -> memref<1x1x!tpu.dma_semaphore, #tpu.memory_space<semaphore_mem>>
    %245 = tpu.memref_squeeze %244 : memref<1x1x!tpu.dma_semaphore, #tpu.memory_space<semaphore_mem>> -> memref<!tpu.dma_semaphore, #tpu.memory_space<semaphore_mem>>
    tpu.wait_dma2 semaphore(%245 : memref<!tpu.dma_semaphore, #tpu.memory_space<semaphore_mem>>) src(%241 : memref<1x128xf32, #tpu.memory_space<any>>) dst(%243 : memref<1x128xf32, #tpu.memory_space<vmem>>)
    %c0_i32_241 = arith.constant 0 : i32
    %246 = arith.addi %2, %c0_i32_241 : i32
    %247 = arith.index_cast %246 : i32 to index
    %c2 = arith.constant 2 : index
    %248 = memref.load %arg2[%247, %c2] : memref<16x8xi32, #tpu.memory_space<smem>>
    %249 = arith.addi %3, %248 : i32
    %c0_i32_242 = arith.constant 0 : i32
    %c0_i32_243 = arith.constant 0 : i32
    %c0_i32_244 = arith.constant 0 : i32
    %c0_i32_245 = arith.constant 0 : i32
    %250 = tpu.memref_slice %arg5[%249, %c0_i32_245] : memref<512x128xf32, #tpu.memory_space<any>> -> memref<1x128xf32, #tpu.memory_space<any>>
    %c0_i32_246 = arith.constant 0 : i32
    %c0_i32_247 = arith.constant 0 : i32
    %251 = tpu.memref_slice %arg7[%c0_i32_242, %c0_i32_246, %c0_i32_247] : memref<2x8x128xf32, #tpu.memory_space<vmem>> -> memref<1x1x128xf32, #tpu.memory_space<vmem>>
    %252 = tpu.memref_squeeze %251 : memref<1x1x128xf32, #tpu.memory_space<vmem>> -> memref<1x128xf32, #tpu.memory_space<vmem>>
    %253 = tpu.memref_slice %arg8[%c0_i32_243, %c0_i32_244] : memref<2x8x!tpu.dma_semaphore, #tpu.memory_space<semaphore_mem>> -> memref<1x1x!tpu.dma_semaphore, #tpu.memory_space<semaphore_mem>>
    %254 = tpu.memref_squeeze %253 : memref<1x1x!tpu.dma_semaphore, #tpu.memory_space<semaphore_mem>> -> memref<!tpu.dma_semaphore, #tpu.memory_space<semaphore_mem>>
    tpu.enqueue_dma source(%250 : memref<1x128xf32, #tpu.memory_space<any>>) target(%252 : memref<1x128xf32, #tpu.memory_space<vmem>>) target_semaphore(%254 : memref<!tpu.dma_semaphore, #tpu.memory_space<semaphore_mem>>)
    %c1_i32_248 = arith.constant 1 : i32
    %255 = arith.addi %2, %c1_i32_248 : i32
    %256 = arith.index_cast %255 : i32 to index
    %c2_249 = arith.constant 2 : index
    %257 = memref.load %arg2[%256, %c2_249] : memref<16x8xi32, #tpu.memory_space<smem>>
    %258 = arith.addi %3, %257 : i32
    %c0_i32_250 = arith.constant 0 : i32
    %c0_i32_251 = arith.constant 0 : i32
    %c1_i32_252 = arith.constant 1 : i32
    %c0_i32_253 = arith.constant 0 : i32
    %259 = tpu.memref_slice %arg5[%258, %c0_i32_253] : memref<512x128xf32, #tpu.memory_space<any>> -> memref<1x128xf32, #tpu.memory_space<any>>
    %c1_i32_254 = arith.constant 1 : i32
    %c0_i32_255 = arith.constant 0 : i32
    %260 = tpu.memref_slice %arg7[%c0_i32_250, %c1_i32_254, %c0_i32_255] : memref<2x8x128xf32, #tpu.memory_space<vmem>> -> memref<1x1x128xf32, #tpu.memory_space<vmem>>
    %261 = tpu.memref_squeeze %260 : memref<1x1x128xf32, #tpu.memory_space<vmem>> -> memref<1x128xf32, #tpu.memory_space<vmem>>
    %262 = tpu.memref_slice %arg8[%c0_i32_251, %c1_i32_252] : memref<2x8x!tpu.dma_semaphore, #tpu.memory_space<semaphore_mem>> -> memref<1x1x!tpu.dma_semaphore, #tpu.memory_space<semaphore_mem>>
    %263 = tpu.memref_squeeze %262 : memref<1x1x!tpu.dma_semaphore, #tpu.memory_space<semaphore_mem>> -> memref<!tpu.dma_semaphore, #tpu.memory_space<semaphore_mem>>
    tpu.enqueue_dma source(%259 : memref<1x128xf32, #tpu.memory_space<any>>) target(%261 : memref<1x128xf32, #tpu.memory_space<vmem>>) target_semaphore(%263 : memref<!tpu.dma_semaphore, #tpu.memory_space<semaphore_mem>>)
    %c2_i32_256 = arith.constant 2 : i32
    %264 = arith.addi %2, %c2_i32_256 : i32
    %265 = arith.index_cast %264 : i32 to index
    %c2_257 = arith.constant 2 : index
    %266 = memref.load %arg2[%265, %c2_257] : memref<16x8xi32, #tpu.memory_space<smem>>
    %267 = arith.addi %3, %266 : i32
    %c0_i32_258 = arith.constant 0 : i32
    %c0_i32_259 = arith.constant 0 : i32
    %c2_i32_260 = arith.constant 2 : i32
    %c0_i32_261 = arith.constant 0 : i32
    %268 = tpu.memref_slice %arg5[%267, %c0_i32_261] : memref<512x128xf32, #tpu.memory_space<any>> -> memref<1x128xf32, #tpu.memory_space<any>>
    %c2_i32_262 = arith.constant 2 : i32
    %c0_i32_263 = arith.constant 0 : i32
    %269 = tpu.memref_slice %arg7[%c0_i32_258, %c2_i32_262, %c0_i32_263] : memref<2x8x128xf32, #tpu.memory_space<vmem>> -> memref<1x1x128xf32, #tpu.memory_space<vmem>>
    %270 = tpu.memref_squeeze %269 : memref<1x1x128xf32, #tpu.memory_space<vmem>> -> memref<1x128xf32, #tpu.memory_space<vmem>>
    %271 = tpu.memref_slice %arg8[%c0_i32_259, %c2_i32_260] : memref<2x8x!tpu.dma_semaphore, #tpu.memory_space<semaphore_mem>> -> memref<1x1x!tpu.dma_semaphore, #tpu.memory_space<semaphore_mem>>
    %272 = tpu.memref_squeeze %271 : memref<1x1x!tpu.dma_semaphore, #tpu.memory_space<semaphore_mem>> -> memref<!tpu.dma_semaphore, #tpu.memory_space<semaphore_mem>>
    tpu.enqueue_dma source(%268 : memref<1x128xf32, #tpu.memory_space<any>>) target(%270 : memref<1x128xf32, #tpu.memory_space<vmem>>) target_semaphore(%272 : memref<!tpu.dma_semaphore, #tpu.memory_space<semaphore_mem>>)
    %c3_i32_264 = arith.constant 3 : i32
    %273 = arith.addi %2, %c3_i32_264 : i32
    %274 = arith.index_cast %273 : i32 to index
    %c2_265 = arith.constant 2 : index
    %275 = memref.load %arg2[%274, %c2_265] : memref<16x8xi32, #tpu.memory_space<smem>>
    %276 = arith.addi %3, %275 : i32
    %c0_i32_266 = arith.constant 0 : i32
    %c0_i32_267 = arith.constant 0 : i32
    %c3_i32_268 = arith.constant 3 : i32
    %c0_i32_269 = arith.constant 0 : i32
    %277 = tpu.memref_slice %arg5[%276, %c0_i32_269] : memref<512x128xf32, #tpu.memory_space<any>> -> memref<1x128xf32, #tpu.memory_space<any>>
    %c3_i32_270 = arith.constant 3 : i32
    %c0_i32_271 = arith.constant 0 : i32
    %278 = tpu.memref_slice %arg7[%c0_i32_266, %c3_i32_270, %c0_i32_271] : memref<2x8x128xf32, #tpu.memory_space<vmem>> -> memref<1x1x128xf32, #tpu.memory_space<vmem>>
    %279 = tpu.memref_squeeze %278 : memref<1x1x128xf32, #tpu.memory_space<vmem>> -> memref<1x128xf32, #tpu.memory_space<vmem>>
    %280 = tpu.memref_slice %arg8[%c0_i32_267, %c3_i32_268] : memref<2x8x!tpu.dma_semaphore, #tpu.memory_space<semaphore_mem>> -> memref<1x1x!tpu.dma_semaphore, #tpu.memory_space<semaphore_mem>>
    %281 = tpu.memref_squeeze %280 : memref<1x1x!tpu.dma_semaphore, #tpu.memory_space<semaphore_mem>> -> memref<!tpu.dma_semaphore, #tpu.memory_space<semaphore_mem>>
    tpu.enqueue_dma source(%277 : memref<1x128xf32, #tpu.memory_space<any>>) target(%279 : memref<1x128xf32, #tpu.memory_space<vmem>>) target_semaphore(%281 : memref<!tpu.dma_semaphore, #tpu.memory_space<semaphore_mem>>)
    %c4_i32_272 = arith.constant 4 : i32
    %282 = arith.addi %2, %c4_i32_272 : i32
    %283 = arith.index_cast %282 : i32 to index
    %c2_273 = arith.constant 2 : index
    %284 = memref.load %arg2[%283, %c2_273] : memref<16x8xi32, #tpu.memory_space<smem>>
    %285 = arith.addi %3, %284 : i32
    %c0_i32_274 = arith.constant 0 : i32
    %c0_i32_275 = arith.constant 0 : i32
    %c4_i32_276 = arith.constant 4 : i32
    %c0_i32_277 = arith.constant 0 : i32
    %286 = tpu.memref_slice %arg5[%285, %c0_i32_277] : memref<512x128xf32, #tpu.memory_space<any>> -> memref<1x128xf32, #tpu.memory_space<any>>
    %c4_i32_278 = arith.constant 4 : i32
    %c0_i32_279 = arith.constant 0 : i32
    %287 = tpu.memref_slice %arg7[%c0_i32_274, %c4_i32_278, %c0_i32_279] : memref<2x8x128xf32, #tpu.memory_space<vmem>> -> memref<1x1x128xf32, #tpu.memory_space<vmem>>
    %288 = tpu.memref_squeeze %287 : memref<1x1x128xf32, #tpu.memory_space<vmem>> -> memref<1x128xf32, #tpu.memory_space<vmem>>
    %289 = tpu.memref_slice %arg8[%c0_i32_275, %c4_i32_276] : memref<2x8x!tpu.dma_semaphore, #tpu.memory_space<semaphore_mem>> -> memref<1x1x!tpu.dma_semaphore, #tpu.memory_space<semaphore_mem>>
    %290 = tpu.memref_squeeze %289 : memref<1x1x!tpu.dma_semaphore, #tpu.memory_space<semaphore_mem>> -> memref<!tpu.dma_semaphore, #tpu.memory_space<semaphore_mem>>
    tpu.enqueue_dma source(%286 : memref<1x128xf32, #tpu.memory_space<any>>) target(%288 : memref<1x128xf32, #tpu.memory_space<vmem>>) target_semaphore(%290 : memref<!tpu.dma_semaphore, #tpu.memory_space<semaphore_mem>>)
    %c5_i32_280 = arith.constant 5 : i32
    %291 = arith.addi %2, %c5_i32_280 : i32
    %292 = arith.index_cast %291 : i32 to index
    %c2_281 = arith.constant 2 : index
    %293 = memref.load %arg2[%292, %c2_281] : memref<16x8xi32, #tpu.memory_space<smem>>
    %294 = arith.addi %3, %293 : i32
    %c0_i32_282 = arith.constant 0 : i32
    %c0_i32_283 = arith.constant 0 : i32
    %c5_i32_284 = arith.constant 5 : i32
    %c0_i32_285 = arith.constant 0 : i32
    %295 = tpu.memref_slice %arg5[%294, %c0_i32_285] : memref<512x128xf32, #tpu.memory_space<any>> -> memref<1x128xf32, #tpu.memory_space<any>>
    %c5_i32_286 = arith.constant 5 : i32
    %c0_i32_287 = arith.constant 0 : i32
    %296 = tpu.memref_slice %arg7[%c0_i32_282, %c5_i32_286, %c0_i32_287] : memref<2x8x128xf32, #tpu.memory_space<vmem>> -> memref<1x1x128xf32, #tpu.memory_space<vmem>>
    %297 = tpu.memref_squeeze %296 : memref<1x1x128xf32, #tpu.memory_space<vmem>> -> memref<1x128xf32, #tpu.memory_space<vmem>>
    %298 = tpu.memref_slice %arg8[%c0_i32_283, %c5_i32_284] : memref<2x8x!tpu.dma_semaphore, #tpu.memory_space<semaphore_mem>> -> memref<1x1x!tpu.dma_semaphore, #tpu.memory_space<semaphore_mem>>
    %299 = tpu.memref_squeeze %298 : memref<1x1x!tpu.dma_semaphore, #tpu.memory_space<semaphore_mem>> -> memref<!tpu.dma_semaphore, #tpu.memory_space<semaphore_mem>>
    tpu.enqueue_dma source(%295 : memref<1x128xf32, #tpu.memory_space<any>>) target(%297 : memref<1x128xf32, #tpu.memory_space<vmem>>) target_semaphore(%299 : memref<!tpu.dma_semaphore, #tpu.memory_space<semaphore_mem>>)
    %c6_i32_288 = arith.constant 6 : i32
    %300 = arith.addi %2, %c6_i32_288 : i32
    %301 = arith.index_cast %300 : i32 to index
    %c2_289 = arith.constant 2 : index
    %302 = memref.load %arg2[%301, %c2_289] : memref<16x8xi32, #tpu.memory_space<smem>>
    %303 = arith.addi %3, %302 : i32
    %c0_i32_290 = arith.constant 0 : i32
    %c0_i32_291 = arith.constant 0 : i32
    %c6_i32_292 = arith.constant 6 : i32
    %c0_i32_293 = arith.constant 0 : i32
    %304 = tpu.memref_slice %arg5[%303, %c0_i32_293] : memref<512x128xf32, #tpu.memory_space<any>> -> memref<1x128xf32, #tpu.memory_space<any>>
    %c6_i32_294 = arith.constant 6 : i32
    %c0_i32_295 = arith.constant 0 : i32
    %305 = tpu.memref_slice %arg7[%c0_i32_290, %c6_i32_294, %c0_i32_295] : memref<2x8x128xf32, #tpu.memory_space<vmem>> -> memref<1x1x128xf32, #tpu.memory_space<vmem>>
    %306 = tpu.memref_squeeze %305 : memref<1x1x128xf32, #tpu.memory_space<vmem>> -> memref<1x128xf32, #tpu.memory_space<vmem>>
    %307 = tpu.memref_slice %arg8[%c0_i32_291, %c6_i32_292] : memref<2x8x!tpu.dma_semaphore, #tpu.memory_space<semaphore_mem>> -> memref<1x1x!tpu.dma_semaphore, #tpu.memory_space<semaphore_mem>>
    %308 = tpu.memref_squeeze %307 : memref<1x1x!tpu.dma_semaphore, #tpu.memory_space<semaphore_mem>> -> memref<!tpu.dma_semaphore, #tpu.memory_space<semaphore_mem>>
    tpu.enqueue_dma source(%304 : memref<1x128xf32, #tpu.memory_space<any>>) target(%306 : memref<1x128xf32, #tpu.memory_space<vmem>>) target_semaphore(%308 : memref<!tpu.dma_semaphore, #tpu.memory_space<semaphore_mem>>)
    %c7_i32_296 = arith.constant 7 : i32
    %309 = arith.addi %2, %c7_i32_296 : i32
    %310 = arith.index_cast %309 : i32 to index
    %c2_297 = arith.constant 2 : index
    %311 = memref.load %arg2[%310, %c2_297] : memref<16x8xi32, #tpu.memory_space<smem>>
    %312 = arith.addi %3, %311 : i32
    %c0_i32_298 = arith.constant 0 : i32
    %c0_i32_299 = arith.constant 0 : i32
    %c7_i32_300 = arith.constant 7 : i32
    %c0_i32_301 = arith.constant 0 : i32
    %313 = tpu.memref_slice %arg5[%312, %c0_i32_301] : memref<512x128xf32, #tpu.memory_space<any>> -> memref<1x128xf32, #tpu.memory_space<any>>
    %c7_i32_302 = arith.constant 7 : i32
    %c0_i32_303 = arith.constant 0 : i32
    %314 = tpu.memref_slice %arg7[%c0_i32_298, %c7_i32_302, %c0_i32_303] : memref<2x8x128xf32, #tpu.memory_space<vmem>> -> memref<1x1x128xf32, #tpu.memory_space<vmem>>
    %315 = tpu.memref_squeeze %314 : memref<1x1x128xf32, #tpu.memory_space<vmem>> -> memref<1x128xf32, #tpu.memory_space<vmem>>
    %316 = tpu.memref_slice %arg8[%c0_i32_299, %c7_i32_300] : memref<2x8x!tpu.dma_semaphore, #tpu.memory_space<semaphore_mem>> -> memref<1x1x!tpu.dma_semaphore, #tpu.memory_space<semaphore_mem>>
    %317 = tpu.memref_squeeze %316 : memref<1x1x!tpu.dma_semaphore, #tpu.memory_space<semaphore_mem>> -> memref<!tpu.dma_semaphore, #tpu.memory_space<semaphore_mem>>
    tpu.enqueue_dma source(%313 : memref<1x128xf32, #tpu.memory_space<any>>) target(%315 : memref<1x128xf32, #tpu.memory_space<vmem>>) target_semaphore(%317 : memref<!tpu.dma_semaphore, #tpu.memory_space<semaphore_mem>>)
    %318 = vector.extract_strided_slice %86 {offsets = [0, 1], sizes = [8, 1], strides = [1, 1]} : vector<8x8xf32> to vector<8x1xf32>
    %c1_304 = arith.constant 1 : index
    %c0_305 = arith.constant 0 : index
    %c0_306 = arith.constant 0 : index
    %319 = vector.load %arg7[%c1_304, %c0_305, %c0_306] : memref<2x8x128xf32, #tpu.memory_space<vmem>>, vector<1x8x128xf32>
    %320 = vector.shape_cast %319 : vector<1x8x128xf32> to vector<8x128xf32>
    %321 = vector.broadcast %318 : vector<8x1xf32> to vector<8x128xf32>
    %322 = arith.mulf %321, %320 : vector<8x128xf32>
    %323 = arith.addf %205, %322 : vector<8x128xf32>
    %c0_i32_307 = arith.constant 0 : i32
    %c0_i32_308 = arith.constant 0 : i32
    %c0_i32_309 = arith.constant 0 : i32
    %c0_i32_310 = arith.constant 0 : i32
    %c0_i32_311 = arith.constant 0 : i32
    %324 = tpu.memref_slice %arg5[%c0_i32_310, %c0_i32_311] : memref<512x128xf32, #tpu.memory_space<any>> -> memref<1x128xf32, #tpu.memory_space<any>>
    %c0_i32_312 = arith.constant 0 : i32
    %c0_i32_313 = arith.constant 0 : i32
    %325 = tpu.memref_slice %arg7[%c0_i32_307, %c0_i32_312, %c0_i32_313] : memref<2x8x128xf32, #tpu.memory_space<vmem>> -> memref<1x1x128xf32, #tpu.memory_space<vmem>>
    %326 = tpu.memref_squeeze %325 : memref<1x1x128xf32, #tpu.memory_space<vmem>> -> memref<1x128xf32, #tpu.memory_space<vmem>>
    %327 = tpu.memref_slice %arg8[%c0_i32_308, %c0_i32_309] : memref<2x8x!tpu.dma_semaphore, #tpu.memory_space<semaphore_mem>> -> memref<1x1x!tpu.dma_semaphore, #tpu.memory_space<semaphore_mem>>
    %328 = tpu.memref_squeeze %327 : memref<1x1x!tpu.dma_semaphore, #tpu.memory_space<semaphore_mem>> -> memref<!tpu.dma_semaphore, #tpu.memory_space<semaphore_mem>>
    tpu.wait_dma2 semaphore(%328 : memref<!tpu.dma_semaphore, #tpu.memory_space<semaphore_mem>>) src(%324 : memref<1x128xf32, #tpu.memory_space<any>>) dst(%326 : memref<1x128xf32, #tpu.memory_space<vmem>>)
    %c0_i32_314 = arith.constant 0 : i32
    %c0_i32_315 = arith.constant 0 : i32
    %c1_i32_316 = arith.constant 1 : i32
    %c0_i32_317 = arith.constant 0 : i32
    %c0_i32_318 = arith.constant 0 : i32
    %329 = tpu.memref_slice %arg5[%c0_i32_317, %c0_i32_318] : memref<512x128xf32, #tpu.memory_space<any>> -> memref<1x128xf32, #tpu.memory_space<any>>
    %c1_i32_319 = arith.constant 1 : i32
    %c0_i32_320 = arith.constant 0 : i32
    %330 = tpu.memref_slice %arg7[%c0_i32_314, %c1_i32_319, %c0_i32_320] : memref<2x8x128xf32, #tpu.memory_space<vmem>> -> memref<1x1x128xf32, #tpu.memory_space<vmem>>
    %331 = tpu.memref_squeeze %330 : memref<1x1x128xf32, #tpu.memory_space<vmem>> -> memref<1x128xf32, #tpu.memory_space<vmem>>
    %332 = tpu.memref_slice %arg8[%c0_i32_315, %c1_i32_316] : memref<2x8x!tpu.dma_semaphore, #tpu.memory_space<semaphore_mem>> -> memref<1x1x!tpu.dma_semaphore, #tpu.memory_space<semaphore_mem>>
    %333 = tpu.memref_squeeze %332 : memref<1x1x!tpu.dma_semaphore, #tpu.memory_space<semaphore_mem>> -> memref<!tpu.dma_semaphore, #tpu.memory_space<semaphore_mem>>
    tpu.wait_dma2 semaphore(%333 : memref<!tpu.dma_semaphore, #tpu.memory_space<semaphore_mem>>) src(%329 : memref<1x128xf32, #tpu.memory_space<any>>) dst(%331 : memref<1x128xf32, #tpu.memory_space<vmem>>)
    %c0_i32_321 = arith.constant 0 : i32
    %c0_i32_322 = arith.constant 0 : i32
    %c2_i32_323 = arith.constant 2 : i32
    %c0_i32_324 = arith.constant 0 : i32
    %c0_i32_325 = arith.constant 0 : i32
    %334 = tpu.memref_slice %arg5[%c0_i32_324, %c0_i32_325] : memref<512x128xf32, #tpu.memory_space<any>> -> memref<1x128xf32, #tpu.memory_space<any>>
    %c2_i32_326 = arith.constant 2 : i32
    %c0_i32_327 = arith.constant 0 : i32
    %335 = tpu.memref_slice %arg7[%c0_i32_321, %c2_i32_326, %c0_i32_327] : memref<2x8x128xf32, #tpu.memory_space<vmem>> -> memref<1x1x128xf32, #tpu.memory_space<vmem>>
    %336 = tpu.memref_squeeze %335 : memref<1x1x128xf32, #tpu.memory_space<vmem>> -> memref<1x128xf32, #tpu.memory_space<vmem>>
    %337 = tpu.memref_slice %arg8[%c0_i32_322, %c2_i32_323] : memref<2x8x!tpu.dma_semaphore, #tpu.memory_space<semaphore_mem>> -> memref<1x1x!tpu.dma_semaphore, #tpu.memory_space<semaphore_mem>>
    %338 = tpu.memref_squeeze %337 : memref<1x1x!tpu.dma_semaphore, #tpu.memory_space<semaphore_mem>> -> memref<!tpu.dma_semaphore, #tpu.memory_space<semaphore_mem>>
    tpu.wait_dma2 semaphore(%338 : memref<!tpu.dma_semaphore, #tpu.memory_space<semaphore_mem>>) src(%334 : memref<1x128xf32, #tpu.memory_space<any>>) dst(%336 : memref<1x128xf32, #tpu.memory_space<vmem>>)
    %c0_i32_328 = arith.constant 0 : i32
    %c0_i32_329 = arith.constant 0 : i32
    %c3_i32_330 = arith.constant 3 : i32
    %c0_i32_331 = arith.constant 0 : i32
    %c0_i32_332 = arith.constant 0 : i32
    %339 = tpu.memref_slice %arg5[%c0_i32_331, %c0_i32_332] : memref<512x128xf32, #tpu.memory_space<any>> -> memref<1x128xf32, #tpu.memory_space<any>>
    %c3_i32_333 = arith.constant 3 : i32
    %c0_i32_334 = arith.constant 0 : i32
    %340 = tpu.memref_slice %arg7[%c0_i32_328, %c3_i32_333, %c0_i32_334] : memref<2x8x128xf32, #tpu.memory_space<vmem>> -> memref<1x1x128xf32, #tpu.memory_space<vmem>>
    %341 = tpu.memref_squeeze %340 : memref<1x1x128xf32, #tpu.memory_space<vmem>> -> memref<1x128xf32, #tpu.memory_space<vmem>>
    %342 = tpu.memref_slice %arg8[%c0_i32_329, %c3_i32_330] : memref<2x8x!tpu.dma_semaphore, #tpu.memory_space<semaphore_mem>> -> memref<1x1x!tpu.dma_semaphore, #tpu.memory_space<semaphore_mem>>
    %343 = tpu.memref_squeeze %342 : memref<1x1x!tpu.dma_semaphore, #tpu.memory_space<semaphore_mem>> -> memref<!tpu.dma_semaphore, #tpu.memory_space<semaphore_mem>>
    tpu.wait_dma2 semaphore(%343 : memref<!tpu.dma_semaphore, #tpu.memory_space<semaphore_mem>>) src(%339 : memref<1x128xf32, #tpu.memory_space<any>>) dst(%341 : memref<1x128xf32, #tpu.memory_space<vmem>>)
    %c0_i32_335 = arith.constant 0 : i32
    %c0_i32_336 = arith.constant 0 : i32
    %c4_i32_337 = arith.constant 4 : i32
    %c0_i32_338 = arith.constant 0 : i32
    %c0_i32_339 = arith.constant 0 : i32
    %344 = tpu.memref_slice %arg5[%c0_i32_338, %c0_i32_339] : memref<512x128xf32, #tpu.memory_space<any>> -> memref<1x128xf32, #tpu.memory_space<any>>
    %c4_i32_340 = arith.constant 4 : i32
    %c0_i32_341 = arith.constant 0 : i32
    %345 = tpu.memref_slice %arg7[%c0_i32_335, %c4_i32_340, %c0_i32_341] : memref<2x8x128xf32, #tpu.memory_space<vmem>> -> memref<1x1x128xf32, #tpu.memory_space<vmem>>
    %346 = tpu.memref_squeeze %345 : memref<1x1x128xf32, #tpu.memory_space<vmem>> -> memref<1x128xf32, #tpu.memory_space<vmem>>
    %347 = tpu.memref_slice %arg8[%c0_i32_336, %c4_i32_337] : memref<2x8x!tpu.dma_semaphore, #tpu.memory_space<semaphore_mem>> -> memref<1x1x!tpu.dma_semaphore, #tpu.memory_space<semaphore_mem>>
    %348 = tpu.memref_squeeze %347 : memref<1x1x!tpu.dma_semaphore, #tpu.memory_space<semaphore_mem>> -> memref<!tpu.dma_semaphore, #tpu.memory_space<semaphore_mem>>
    tpu.wait_dma2 semaphore(%348 : memref<!tpu.dma_semaphore, #tpu.memory_space<semaphore_mem>>) src(%344 : memref<1x128xf32, #tpu.memory_space<any>>) dst(%346 : memref<1x128xf32, #tpu.memory_space<vmem>>)
    %c0_i32_342 = arith.constant 0 : i32
    %c0_i32_343 = arith.constant 0 : i32
    %c5_i32_344 = arith.constant 5 : i32
    %c0_i32_345 = arith.constant 0 : i32
    %c0_i32_346 = arith.constant 0 : i32
    %349 = tpu.memref_slice %arg5[%c0_i32_345, %c0_i32_346] : memref<512x128xf32, #tpu.memory_space<any>> -> memref<1x128xf32, #tpu.memory_space<any>>
    %c5_i32_347 = arith.constant 5 : i32
    %c0_i32_348 = arith.constant 0 : i32
    %350 = tpu.memref_slice %arg7[%c0_i32_342, %c5_i32_347, %c0_i32_348] : memref<2x8x128xf32, #tpu.memory_space<vmem>> -> memref<1x1x128xf32, #tpu.memory_space<vmem>>
    %351 = tpu.memref_squeeze %350 : memref<1x1x128xf32, #tpu.memory_space<vmem>> -> memref<1x128xf32, #tpu.memory_space<vmem>>
    %352 = tpu.memref_slice %arg8[%c0_i32_343, %c5_i32_344] : memref<2x8x!tpu.dma_semaphore, #tpu.memory_space<semaphore_mem>> -> memref<1x1x!tpu.dma_semaphore, #tpu.memory_space<semaphore_mem>>
    %353 = tpu.memref_squeeze %352 : memref<1x1x!tpu.dma_semaphore, #tpu.memory_space<semaphore_mem>> -> memref<!tpu.dma_semaphore, #tpu.memory_space<semaphore_mem>>
    tpu.wait_dma2 semaphore(%353 : memref<!tpu.dma_semaphore, #tpu.memory_space<semaphore_mem>>) src(%349 : memref<1x128xf32, #tpu.memory_space<any>>) dst(%351 : memref<1x128xf32, #tpu.memory_space<vmem>>)
    %c0_i32_349 = arith.constant 0 : i32
    %c0_i32_350 = arith.constant 0 : i32
    %c6_i32_351 = arith.constant 6 : i32
    %c0_i32_352 = arith.constant 0 : i32
    %c0_i32_353 = arith.constant 0 : i32
    %354 = tpu.memref_slice %arg5[%c0_i32_352, %c0_i32_353] : memref<512x128xf32, #tpu.memory_space<any>> -> memref<1x128xf32, #tpu.memory_space<any>>
    %c6_i32_354 = arith.constant 6 : i32
    %c0_i32_355 = arith.constant 0 : i32
    %355 = tpu.memref_slice %arg7[%c0_i32_349, %c6_i32_354, %c0_i32_355] : memref<2x8x128xf32, #tpu.memory_space<vmem>> -> memref<1x1x128xf32, #tpu.memory_space<vmem>>
    %356 = tpu.memref_squeeze %355 : memref<1x1x128xf32, #tpu.memory_space<vmem>> -> memref<1x128xf32, #tpu.memory_space<vmem>>
    %357 = tpu.memref_slice %arg8[%c0_i32_350, %c6_i32_351] : memref<2x8x!tpu.dma_semaphore, #tpu.memory_space<semaphore_mem>> -> memref<1x1x!tpu.dma_semaphore, #tpu.memory_space<semaphore_mem>>
    %358 = tpu.memref_squeeze %357 : memref<1x1x!tpu.dma_semaphore, #tpu.memory_space<semaphore_mem>> -> memref<!tpu.dma_semaphore, #tpu.memory_space<semaphore_mem>>
    tpu.wait_dma2 semaphore(%358 : memref<!tpu.dma_semaphore, #tpu.memory_space<semaphore_mem>>) src(%354 : memref<1x128xf32, #tpu.memory_space<any>>) dst(%356 : memref<1x128xf32, #tpu.memory_space<vmem>>)
    %c0_i32_356 = arith.constant 0 : i32
    %c0_i32_357 = arith.constant 0 : i32
    %c7_i32_358 = arith.constant 7 : i32
    %c0_i32_359 = arith.constant 0 : i32
    %c0_i32_360 = arith.constant 0 : i32
    %359 = tpu.memref_slice %arg5[%c0_i32_359, %c0_i32_360] : memref<512x128xf32, #tpu.memory_space<any>> -> memref<1x128xf32, #tpu.memory_space<any>>
    %c7_i32_361 = arith.constant 7 : i32
    %c0_i32_362 = arith.constant 0 : i32
    %360 = tpu.memref_slice %arg7[%c0_i32_356, %c7_i32_361, %c0_i32_362] : memref<2x8x128xf32, #tpu.memory_space<vmem>> -> memref<1x1x128xf32, #tpu.memory_space<vmem>>
    %361 = tpu.memref_squeeze %360 : memref<1x1x128xf32, #tpu.memory_space<vmem>> -> memref<1x128xf32, #tpu.memory_space<vmem>>
    %362 = tpu.memref_slice %arg8[%c0_i32_357, %c7_i32_358] : memref<2x8x!tpu.dma_semaphore, #tpu.memory_space<semaphore_mem>> -> memref<1x1x!tpu.dma_semaphore, #tpu.memory_space<semaphore_mem>>
    %363 = tpu.memref_squeeze %362 : memref<1x1x!tpu.dma_semaphore, #tpu.memory_space<semaphore_mem>> -> memref<!tpu.dma_semaphore, #tpu.memory_space<semaphore_mem>>
    tpu.wait_dma2 semaphore(%363 : memref<!tpu.dma_semaphore, #tpu.memory_space<semaphore_mem>>) src(%359 : memref<1x128xf32, #tpu.memory_space<any>>) dst(%361 : memref<1x128xf32, #tpu.memory_space<vmem>>)
    %c0_i32_363 = arith.constant 0 : i32
    %364 = arith.addi %2, %c0_i32_363 : i32
    %365 = arith.index_cast %364 : i32 to index
    %c3 = arith.constant 3 : index
    %366 = memref.load %arg2[%365, %c3] : memref<16x8xi32, #tpu.memory_space<smem>>
    %367 = arith.addi %3, %366 : i32
    %c1_i32_364 = arith.constant 1 : i32
    %c1_i32_365 = arith.constant 1 : i32
    %c0_i32_366 = arith.constant 0 : i32
    %c0_i32_367 = arith.constant 0 : i32
    %368 = tpu.memref_slice %arg5[%367, %c0_i32_367] : memref<512x128xf32, #tpu.memory_space<any>> -> memref<1x128xf32, #tpu.memory_space<any>>
    %c0_i32_368 = arith.constant 0 : i32
    %c0_i32_369 = arith.constant 0 : i32
    %369 = tpu.memref_slice %arg7[%c1_i32_364, %c0_i32_368, %c0_i32_369] : memref<2x8x128xf32, #tpu.memory_space<vmem>> -> memref<1x1x128xf32, #tpu.memory_space<vmem>>
    %370 = tpu.memref_squeeze %369 : memref<1x1x128xf32, #tpu.memory_space<vmem>> -> memref<1x128xf32, #tpu.memory_space<vmem>>
    %371 = tpu.memref_slice %arg8[%c1_i32_365, %c0_i32_366] : memref<2x8x!tpu.dma_semaphore, #tpu.memory_space<semaphore_mem>> -> memref<1x1x!tpu.dma_semaphore, #tpu.memory_space<semaphore_mem>>
    %372 = tpu.memref_squeeze %371 : memref<1x1x!tpu.dma_semaphore, #tpu.memory_space<semaphore_mem>> -> memref<!tpu.dma_semaphore, #tpu.memory_space<semaphore_mem>>
    tpu.enqueue_dma source(%368 : memref<1x128xf32, #tpu.memory_space<any>>) target(%370 : memref<1x128xf32, #tpu.memory_space<vmem>>) target_semaphore(%372 : memref<!tpu.dma_semaphore, #tpu.memory_space<semaphore_mem>>)
    %c1_i32_370 = arith.constant 1 : i32
    %373 = arith.addi %2, %c1_i32_370 : i32
    %374 = arith.index_cast %373 : i32 to index
    %c3_371 = arith.constant 3 : index
    %375 = memref.load %arg2[%374, %c3_371] : memref<16x8xi32, #tpu.memory_space<smem>>
    %376 = arith.addi %3, %375 : i32
    %c1_i32_372 = arith.constant 1 : i32
    %c1_i32_373 = arith.constant 1 : i32
    %c1_i32_374 = arith.constant 1 : i32
    %c0_i32_375 = arith.constant 0 : i32
    %377 = tpu.memref_slice %arg5[%376, %c0_i32_375] : memref<512x128xf32, #tpu.memory_space<any>> -> memref<1x128xf32, #tpu.memory_space<any>>
    %c1_i32_376 = arith.constant 1 : i32
    %c0_i32_377 = arith.constant 0 : i32
    %378 = tpu.memref_slice %arg7[%c1_i32_372, %c1_i32_376, %c0_i32_377] : memref<2x8x128xf32, #tpu.memory_space<vmem>> -> memref<1x1x128xf32, #tpu.memory_space<vmem>>
    %379 = tpu.memref_squeeze %378 : memref<1x1x128xf32, #tpu.memory_space<vmem>> -> memref<1x128xf32, #tpu.memory_space<vmem>>
    %380 = tpu.memref_slice %arg8[%c1_i32_373, %c1_i32_374] : memref<2x8x!tpu.dma_semaphore, #tpu.memory_space<semaphore_mem>> -> memref<1x1x!tpu.dma_semaphore, #tpu.memory_space<semaphore_mem>>
    %381 = tpu.memref_squeeze %380 : memref<1x1x!tpu.dma_semaphore, #tpu.memory_space<semaphore_mem>> -> memref<!tpu.dma_semaphore, #tpu.memory_space<semaphore_mem>>
    tpu.enqueue_dma source(%377 : memref<1x128xf32, #tpu.memory_space<any>>) target(%379 : memref<1x128xf32, #tpu.memory_space<vmem>>) target_semaphore(%381 : memref<!tpu.dma_semaphore, #tpu.memory_space<semaphore_mem>>)
    %c2_i32_378 = arith.constant 2 : i32
    %382 = arith.addi %2, %c2_i32_378 : i32
    %383 = arith.index_cast %382 : i32 to index
    %c3_379 = arith.constant 3 : index
    %384 = memref.load %arg2[%383, %c3_379] : memref<16x8xi32, #tpu.memory_space<smem>>
    %385 = arith.addi %3, %384 : i32
    %c1_i32_380 = arith.constant 1 : i32
    %c1_i32_381 = arith.constant 1 : i32
    %c2_i32_382 = arith.constant 2 : i32
    %c0_i32_383 = arith.constant 0 : i32
    %386 = tpu.memref_slice %arg5[%385, %c0_i32_383] : memref<512x128xf32, #tpu.memory_space<any>> -> memref<1x128xf32, #tpu.memory_space<any>>
    %c2_i32_384 = arith.constant 2 : i32
    %c0_i32_385 = arith.constant 0 : i32
    %387 = tpu.memref_slice %arg7[%c1_i32_380, %c2_i32_384, %c0_i32_385] : memref<2x8x128xf32, #tpu.memory_space<vmem>> -> memref<1x1x128xf32, #tpu.memory_space<vmem>>
    %388 = tpu.memref_squeeze %387 : memref<1x1x128xf32, #tpu.memory_space<vmem>> -> memref<1x128xf32, #tpu.memory_space<vmem>>
    %389 = tpu.memref_slice %arg8[%c1_i32_381, %c2_i32_382] : memref<2x8x!tpu.dma_semaphore, #tpu.memory_space<semaphore_mem>> -> memref<1x1x!tpu.dma_semaphore, #tpu.memory_space<semaphore_mem>>
    %390 = tpu.memref_squeeze %389 : memref<1x1x!tpu.dma_semaphore, #tpu.memory_space<semaphore_mem>> -> memref<!tpu.dma_semaphore, #tpu.memory_space<semaphore_mem>>
    tpu.enqueue_dma source(%386 : memref<1x128xf32, #tpu.memory_space<any>>) target(%388 : memref<1x128xf32, #tpu.memory_space<vmem>>) target_semaphore(%390 : memref<!tpu.dma_semaphore, #tpu.memory_space<semaphore_mem>>)
    %c3_i32_386 = arith.constant 3 : i32
    %391 = arith.addi %2, %c3_i32_386 : i32
    %392 = arith.index_cast %391 : i32 to index
    %c3_387 = arith.constant 3 : index
    %393 = memref.load %arg2[%392, %c3_387] : memref<16x8xi32, #tpu.memory_space<smem>>
    %394 = arith.addi %3, %393 : i32
    %c1_i32_388 = arith.constant 1 : i32
    %c1_i32_389 = arith.constant 1 : i32
    %c3_i32_390 = arith.constant 3 : i32
    %c0_i32_391 = arith.constant 0 : i32
    %395 = tpu.memref_slice %arg5[%394, %c0_i32_391] : memref<512x128xf32, #tpu.memory_space<any>> -> memref<1x128xf32, #tpu.memory_space<any>>
    %c3_i32_392 = arith.constant 3 : i32
    %c0_i32_393 = arith.constant 0 : i32
    %396 = tpu.memref_slice %arg7[%c1_i32_388, %c3_i32_392, %c0_i32_393] : memref<2x8x128xf32, #tpu.memory_space<vmem>> -> memref<1x1x128xf32, #tpu.memory_space<vmem>>
    %397 = tpu.memref_squeeze %396 : memref<1x1x128xf32, #tpu.memory_space<vmem>> -> memref<1x128xf32, #tpu.memory_space<vmem>>
    %398 = tpu.memref_slice %arg8[%c1_i32_389, %c3_i32_390] : memref<2x8x!tpu.dma_semaphore, #tpu.memory_space<semaphore_mem>> -> memref<1x1x!tpu.dma_semaphore, #tpu.memory_space<semaphore_mem>>
    %399 = tpu.memref_squeeze %398 : memref<1x1x!tpu.dma_semaphore, #tpu.memory_space<semaphore_mem>> -> memref<!tpu.dma_semaphore, #tpu.memory_space<semaphore_mem>>
    tpu.enqueue_dma source(%395 : memref<1x128xf32, #tpu.memory_space<any>>) target(%397 : memref<1x128xf32, #tpu.memory_space<vmem>>) target_semaphore(%399 : memref<!tpu.dma_semaphore, #tpu.memory_space<semaphore_mem>>)
    %c4_i32_394 = arith.constant 4 : i32
    %400 = arith.addi %2, %c4_i32_394 : i32
    %401 = arith.index_cast %400 : i32 to index
    %c3_395 = arith.constant 3 : index
    %402 = memref.load %arg2[%401, %c3_395] : memref<16x8xi32, #tpu.memory_space<smem>>
    %403 = arith.addi %3, %402 : i32
    %c1_i32_396 = arith.constant 1 : i32
    %c1_i32_397 = arith.constant 1 : i32
    %c4_i32_398 = arith.constant 4 : i32
    %c0_i32_399 = arith.constant 0 : i32
    %404 = tpu.memref_slice %arg5[%403, %c0_i32_399] : memref<512x128xf32, #tpu.memory_space<any>> -> memref<1x128xf32, #tpu.memory_space<any>>
    %c4_i32_400 = arith.constant 4 : i32
    %c0_i32_401 = arith.constant 0 : i32
    %405 = tpu.memref_slice %arg7[%c1_i32_396, %c4_i32_400, %c0_i32_401] : memref<2x8x128xf32, #tpu.memory_space<vmem>> -> memref<1x1x128xf32, #tpu.memory_space<vmem>>
    %406 = tpu.memref_squeeze %405 : memref<1x1x128xf32, #tpu.memory_space<vmem>> -> memref<1x128xf32, #tpu.memory_space<vmem>>
    %407 = tpu.memref_slice %arg8[%c1_i32_397, %c4_i32_398] : memref<2x8x!tpu.dma_semaphore, #tpu.memory_space<semaphore_mem>> -> memref<1x1x!tpu.dma_semaphore, #tpu.memory_space<semaphore_mem>>
    %408 = tpu.memref_squeeze %407 : memref<1x1x!tpu.dma_semaphore, #tpu.memory_space<semaphore_mem>> -> memref<!tpu.dma_semaphore, #tpu.memory_space<semaphore_mem>>
    tpu.enqueue_dma source(%404 : memref<1x128xf32, #tpu.memory_space<any>>) target(%406 : memref<1x128xf32, #tpu.memory_space<vmem>>) target_semaphore(%408 : memref<!tpu.dma_semaphore, #tpu.memory_space<semaphore_mem>>)
    %c5_i32_402 = arith.constant 5 : i32
    %409 = arith.addi %2, %c5_i32_402 : i32
    %410 = arith.index_cast %409 : i32 to index
    %c3_403 = arith.constant 3 : index
    %411 = memref.load %arg2[%410, %c3_403] : memref<16x8xi32, #tpu.memory_space<smem>>
    %412 = arith.addi %3, %411 : i32
    %c1_i32_404 = arith.constant 1 : i32
    %c1_i32_405 = arith.constant 1 : i32
    %c5_i32_406 = arith.constant 5 : i32
    %c0_i32_407 = arith.constant 0 : i32
    %413 = tpu.memref_slice %arg5[%412, %c0_i32_407] : memref<512x128xf32, #tpu.memory_space<any>> -> memref<1x128xf32, #tpu.memory_space<any>>
    %c5_i32_408 = arith.constant 5 : i32
    %c0_i32_409 = arith.constant 0 : i32
    %414 = tpu.memref_slice %arg7[%c1_i32_404, %c5_i32_408, %c0_i32_409] : memref<2x8x128xf32, #tpu.memory_space<vmem>> -> memref<1x1x128xf32, #tpu.memory_space<vmem>>
    %415 = tpu.memref_squeeze %414 : memref<1x1x128xf32, #tpu.memory_space<vmem>> -> memref<1x128xf32, #tpu.memory_space<vmem>>
    %416 = tpu.memref_slice %arg8[%c1_i32_405, %c5_i32_406] : memref<2x8x!tpu.dma_semaphore, #tpu.memory_space<semaphore_mem>> -> memref<1x1x!tpu.dma_semaphore, #tpu.memory_space<semaphore_mem>>
    %417 = tpu.memref_squeeze %416 : memref<1x1x!tpu.dma_semaphore, #tpu.memory_space<semaphore_mem>> -> memref<!tpu.dma_semaphore, #tpu.memory_space<semaphore_mem>>
    tpu.enqueue_dma source(%413 : memref<1x128xf32, #tpu.memory_space<any>>) target(%415 : memref<1x128xf32, #tpu.memory_space<vmem>>) target_semaphore(%417 : memref<!tpu.dma_semaphore, #tpu.memory_space<semaphore_mem>>)
    %c6_i32_410 = arith.constant 6 : i32
    %418 = arith.addi %2, %c6_i32_410 : i32
    %419 = arith.index_cast %418 : i32 to index
    %c3_411 = arith.constant 3 : index
    %420 = memref.load %arg2[%419, %c3_411] : memref<16x8xi32, #tpu.memory_space<smem>>
    %421 = arith.addi %3, %420 : i32
    %c1_i32_412 = arith.constant 1 : i32
    %c1_i32_413 = arith.constant 1 : i32
    %c6_i32_414 = arith.constant 6 : i32
    %c0_i32_415 = arith.constant 0 : i32
    %422 = tpu.memref_slice %arg5[%421, %c0_i32_415] : memref<512x128xf32, #tpu.memory_space<any>> -> memref<1x128xf32, #tpu.memory_space<any>>
    %c6_i32_416 = arith.constant 6 : i32
    %c0_i32_417 = arith.constant 0 : i32
    %423 = tpu.memref_slice %arg7[%c1_i32_412, %c6_i32_416, %c0_i32_417] : memref<2x8x128xf32, #tpu.memory_space<vmem>> -> memref<1x1x128xf32, #tpu.memory_space<vmem>>
    %424 = tpu.memref_squeeze %423 : memref<1x1x128xf32, #tpu.memory_space<vmem>> -> memref<1x128xf32, #tpu.memory_space<vmem>>
    %425 = tpu.memref_slice %arg8[%c1_i32_413, %c6_i32_414] : memref<2x8x!tpu.dma_semaphore, #tpu.memory_space<semaphore_mem>> -> memref<1x1x!tpu.dma_semaphore, #tpu.memory_space<semaphore_mem>>
    %426 = tpu.memref_squeeze %425 : memref<1x1x!tpu.dma_semaphore, #tpu.memory_space<semaphore_mem>> -> memref<!tpu.dma_semaphore, #tpu.memory_space<semaphore_mem>>
    tpu.enqueue_dma source(%422 : memref<1x128xf32, #tpu.memory_space<any>>) target(%424 : memref<1x128xf32, #tpu.memory_space<vmem>>) target_semaphore(%426 : memref<!tpu.dma_semaphore, #tpu.memory_space<semaphore_mem>>)
    %c7_i32_418 = arith.constant 7 : i32
    %427 = arith.addi %2, %c7_i32_418 : i32
    %428 = arith.index_cast %427 : i32 to index
    %c3_419 = arith.constant 3 : index
    %429 = memref.load %arg2[%428, %c3_419] : memref<16x8xi32, #tpu.memory_space<smem>>
    %430 = arith.addi %3, %429 : i32
    %c1_i32_420 = arith.constant 1 : i32
    %c1_i32_421 = arith.constant 1 : i32
    %c7_i32_422 = arith.constant 7 : i32
    %c0_i32_423 = arith.constant 0 : i32
    %431 = tpu.memref_slice %arg5[%430, %c0_i32_423] : memref<512x128xf32, #tpu.memory_space<any>> -> memref<1x128xf32, #tpu.memory_space<any>>
    %c7_i32_424 = arith.constant 7 : i32
    %c0_i32_425 = arith.constant 0 : i32
    %432 = tpu.memref_slice %arg7[%c1_i32_420, %c7_i32_424, %c0_i32_425] : memref<2x8x128xf32, #tpu.memory_space<vmem>> -> memref<1x1x128xf32, #tpu.memory_space<vmem>>
    %433 = tpu.memref_squeeze %432 : memref<1x1x128xf32, #tpu.memory_space<vmem>> -> memref<1x128xf32, #tpu.memory_space<vmem>>
    %434 = tpu.memref_slice %arg8[%c1_i32_421, %c7_i32_422] : memref<2x8x!tpu.dma_semaphore, #tpu.memory_space<semaphore_mem>> -> memref<1x1x!tpu.dma_semaphore, #tpu.memory_space<semaphore_mem>>
    %435 = tpu.memref_squeeze %434 : memref<1x1x!tpu.dma_semaphore, #tpu.memory_space<semaphore_mem>> -> memref<!tpu.dma_semaphore, #tpu.memory_space<semaphore_mem>>
    tpu.enqueue_dma source(%431 : memref<1x128xf32, #tpu.memory_space<any>>) target(%433 : memref<1x128xf32, #tpu.memory_space<vmem>>) target_semaphore(%435 : memref<!tpu.dma_semaphore, #tpu.memory_space<semaphore_mem>>)
    %436 = vector.extract_strided_slice %86 {offsets = [0, 2], sizes = [8, 1], strides = [1, 1]} : vector<8x8xf32> to vector<8x1xf32>
    %c0_426 = arith.constant 0 : index
    %c0_427 = arith.constant 0 : index
    %c0_428 = arith.constant 0 : index
    %437 = vector.load %arg7[%c0_426, %c0_427, %c0_428] : memref<2x8x128xf32, #tpu.memory_space<vmem>>, vector<1x8x128xf32>
    %438 = vector.shape_cast %437 : vector<1x8x128xf32> to vector<8x128xf32>
    %439 = vector.broadcast %436 : vector<8x1xf32> to vector<8x128xf32>
    %440 = arith.mulf %439, %438 : vector<8x128xf32>
    %441 = arith.addf %323, %440 : vector<8x128xf32>
    %c1_i32_429 = arith.constant 1 : i32
    %c1_i32_430 = arith.constant 1 : i32
    %c0_i32_431 = arith.constant 0 : i32
    %c0_i32_432 = arith.constant 0 : i32
    %c0_i32_433 = arith.constant 0 : i32
    %442 = tpu.memref_slice %arg5[%c0_i32_432, %c0_i32_433] : memref<512x128xf32, #tpu.memory_space<any>> -> memref<1x128xf32, #tpu.memory_space<any>>
    %c0_i32_434 = arith.constant 0 : i32
    %c0_i32_435 = arith.constant 0 : i32
    %443 = tpu.memref_slice %arg7[%c1_i32_429, %c0_i32_434, %c0_i32_435] : memref<2x8x128xf32, #tpu.memory_space<vmem>> -> memref<1x1x128xf32, #tpu.memory_space<vmem>>
    %444 = tpu.memref_squeeze %443 : memref<1x1x128xf32, #tpu.memory_space<vmem>> -> memref<1x128xf32, #tpu.memory_space<vmem>>
    %445 = tpu.memref_slice %arg8[%c1_i32_430, %c0_i32_431] : memref<2x8x!tpu.dma_semaphore, #tpu.memory_space<semaphore_mem>> -> memref<1x1x!tpu.dma_semaphore, #tpu.memory_space<semaphore_mem>>
    %446 = tpu.memref_squeeze %445 : memref<1x1x!tpu.dma_semaphore, #tpu.memory_space<semaphore_mem>> -> memref<!tpu.dma_semaphore, #tpu.memory_space<semaphore_mem>>
    tpu.wait_dma2 semaphore(%446 : memref<!tpu.dma_semaphore, #tpu.memory_space<semaphore_mem>>) src(%442 : memref<1x128xf32, #tpu.memory_space<any>>) dst(%444 : memref<1x128xf32, #tpu.memory_space<vmem>>)
    %c1_i32_436 = arith.constant 1 : i32
    %c1_i32_437 = arith.constant 1 : i32
    %c1_i32_438 = arith.constant 1 : i32
    %c0_i32_439 = arith.constant 0 : i32
    %c0_i32_440 = arith.constant 0 : i32
    %447 = tpu.memref_slice %arg5[%c0_i32_439, %c0_i32_440] : memref<512x128xf32, #tpu.memory_space<any>> -> memref<1x128xf32, #tpu.memory_space<any>>
    %c1_i32_441 = arith.constant 1 : i32
    %c0_i32_442 = arith.constant 0 : i32
    %448 = tpu.memref_slice %arg7[%c1_i32_436, %c1_i32_441, %c0_i32_442] : memref<2x8x128xf32, #tpu.memory_space<vmem>> -> memref<1x1x128xf32, #tpu.memory_space<vmem>>
    %449 = tpu.memref_squeeze %448 : memref<1x1x128xf32, #tpu.memory_space<vmem>> -> memref<1x128xf32, #tpu.memory_space<vmem>>
    %450 = tpu.memref_slice %arg8[%c1_i32_437, %c1_i32_438] : memref<2x8x!tpu.dma_semaphore, #tpu.memory_space<semaphore_mem>> -> memref<1x1x!tpu.dma_semaphore, #tpu.memory_space<semaphore_mem>>
    %451 = tpu.memref_squeeze %450 : memref<1x1x!tpu.dma_semaphore, #tpu.memory_space<semaphore_mem>> -> memref<!tpu.dma_semaphore, #tpu.memory_space<semaphore_mem>>
    tpu.wait_dma2 semaphore(%451 : memref<!tpu.dma_semaphore, #tpu.memory_space<semaphore_mem>>) src(%447 : memref<1x128xf32, #tpu.memory_space<any>>) dst(%449 : memref<1x128xf32, #tpu.memory_space<vmem>>)
    %c1_i32_443 = arith.constant 1 : i32
    %c1_i32_444 = arith.constant 1 : i32
    %c2_i32_445 = arith.constant 2 : i32
    %c0_i32_446 = arith.constant 0 : i32
    %c0_i32_447 = arith.constant 0 : i32
    %452 = tpu.memref_slice %arg5[%c0_i32_446, %c0_i32_447] : memref<512x128xf32, #tpu.memory_space<any>> -> memref<1x128xf32, #tpu.memory_space<any>>
    %c2_i32_448 = arith.constant 2 : i32
    %c0_i32_449 = arith.constant 0 : i32
    %453 = tpu.memref_slice %arg7[%c1_i32_443, %c2_i32_448, %c0_i32_449] : memref<2x8x128xf32, #tpu.memory_space<vmem>> -> memref<1x1x128xf32, #tpu.memory_space<vmem>>
    %454 = tpu.memref_squeeze %453 : memref<1x1x128xf32, #tpu.memory_space<vmem>> -> memref<1x128xf32, #tpu.memory_space<vmem>>
    %455 = tpu.memref_slice %arg8[%c1_i32_444, %c2_i32_445] : memref<2x8x!tpu.dma_semaphore, #tpu.memory_space<semaphore_mem>> -> memref<1x1x!tpu.dma_semaphore, #tpu.memory_space<semaphore_mem>>
    %456 = tpu.memref_squeeze %455 : memref<1x1x!tpu.dma_semaphore, #tpu.memory_space<semaphore_mem>> -> memref<!tpu.dma_semaphore, #tpu.memory_space<semaphore_mem>>
    tpu.wait_dma2 semaphore(%456 : memref<!tpu.dma_semaphore, #tpu.memory_space<semaphore_mem>>) src(%452 : memref<1x128xf32, #tpu.memory_space<any>>) dst(%454 : memref<1x128xf32, #tpu.memory_space<vmem>>)
    %c1_i32_450 = arith.constant 1 : i32
    %c1_i32_451 = arith.constant 1 : i32
    %c3_i32_452 = arith.constant 3 : i32
    %c0_i32_453 = arith.constant 0 : i32
    %c0_i32_454 = arith.constant 0 : i32
    %457 = tpu.memref_slice %arg5[%c0_i32_453, %c0_i32_454] : memref<512x128xf32, #tpu.memory_space<any>> -> memref<1x128xf32, #tpu.memory_space<any>>
    %c3_i32_455 = arith.constant 3 : i32
    %c0_i32_456 = arith.constant 0 : i32
    %458 = tpu.memref_slice %arg7[%c1_i32_450, %c3_i32_455, %c0_i32_456] : memref<2x8x128xf32, #tpu.memory_space<vmem>> -> memref<1x1x128xf32, #tpu.memory_space<vmem>>
    %459 = tpu.memref_squeeze %458 : memref<1x1x128xf32, #tpu.memory_space<vmem>> -> memref<1x128xf32, #tpu.memory_space<vmem>>
    %460 = tpu.memref_slice %arg8[%c1_i32_451, %c3_i32_452] : memref<2x8x!tpu.dma_semaphore, #tpu.memory_space<semaphore_mem>> -> memref<1x1x!tpu.dma_semaphore, #tpu.memory_space<semaphore_mem>>
    %461 = tpu.memref_squeeze %460 : memref<1x1x!tpu.dma_semaphore, #tpu.memory_space<semaphore_mem>> -> memref<!tpu.dma_semaphore, #tpu.memory_space<semaphore_mem>>
    tpu.wait_dma2 semaphore(%461 : memref<!tpu.dma_semaphore, #tpu.memory_space<semaphore_mem>>) src(%457 : memref<1x128xf32, #tpu.memory_space<any>>) dst(%459 : memref<1x128xf32, #tpu.memory_space<vmem>>)
    %c1_i32_457 = arith.constant 1 : i32
    %c1_i32_458 = arith.constant 1 : i32
    %c4_i32_459 = arith.constant 4 : i32
    %c0_i32_460 = arith.constant 0 : i32
    %c0_i32_461 = arith.constant 0 : i32
    %462 = tpu.memref_slice %arg5[%c0_i32_460, %c0_i32_461] : memref<512x128xf32, #tpu.memory_space<any>> -> memref<1x128xf32, #tpu.memory_space<any>>
    %c4_i32_462 = arith.constant 4 : i32
    %c0_i32_463 = arith.constant 0 : i32
    %463 = tpu.memref_slice %arg7[%c1_i32_457, %c4_i32_462, %c0_i32_463] : memref<2x8x128xf32, #tpu.memory_space<vmem>> -> memref<1x1x128xf32, #tpu.memory_space<vmem>>
    %464 = tpu.memref_squeeze %463 : memref<1x1x128xf32, #tpu.memory_space<vmem>> -> memref<1x128xf32, #tpu.memory_space<vmem>>
    %465 = tpu.memref_slice %arg8[%c1_i32_458, %c4_i32_459] : memref<2x8x!tpu.dma_semaphore, #tpu.memory_space<semaphore_mem>> -> memref<1x1x!tpu.dma_semaphore, #tpu.memory_space<semaphore_mem>>
    %466 = tpu.memref_squeeze %465 : memref<1x1x!tpu.dma_semaphore, #tpu.memory_space<semaphore_mem>> -> memref<!tpu.dma_semaphore, #tpu.memory_space<semaphore_mem>>
    tpu.wait_dma2 semaphore(%466 : memref<!tpu.dma_semaphore, #tpu.memory_space<semaphore_mem>>) src(%462 : memref<1x128xf32, #tpu.memory_space<any>>) dst(%464 : memref<1x128xf32, #tpu.memory_space<vmem>>)
    %c1_i32_464 = arith.constant 1 : i32
    %c1_i32_465 = arith.constant 1 : i32
    %c5_i32_466 = arith.constant 5 : i32
    %c0_i32_467 = arith.constant 0 : i32
    %c0_i32_468 = arith.constant 0 : i32
    %467 = tpu.memref_slice %arg5[%c0_i32_467, %c0_i32_468] : memref<512x128xf32, #tpu.memory_space<any>> -> memref<1x128xf32, #tpu.memory_space<any>>
    %c5_i32_469 = arith.constant 5 : i32
    %c0_i32_470 = arith.constant 0 : i32
    %468 = tpu.memref_slice %arg7[%c1_i32_464, %c5_i32_469, %c0_i32_470] : memref<2x8x128xf32, #tpu.memory_space<vmem>> -> memref<1x1x128xf32, #tpu.memory_space<vmem>>
    %469 = tpu.memref_squeeze %468 : memref<1x1x128xf32, #tpu.memory_space<vmem>> -> memref<1x128xf32, #tpu.memory_space<vmem>>
    %470 = tpu.memref_slice %arg8[%c1_i32_465, %c5_i32_466] : memref<2x8x!tpu.dma_semaphore, #tpu.memory_space<semaphore_mem>> -> memref<1x1x!tpu.dma_semaphore, #tpu.memory_space<semaphore_mem>>
    %471 = tpu.memref_squeeze %470 : memref<1x1x!tpu.dma_semaphore, #tpu.memory_space<semaphore_mem>> -> memref<!tpu.dma_semaphore, #tpu.memory_space<semaphore_mem>>
    tpu.wait_dma2 semaphore(%471 : memref<!tpu.dma_semaphore, #tpu.memory_space<semaphore_mem>>) src(%467 : memref<1x128xf32, #tpu.memory_space<any>>) dst(%469 : memref<1x128xf32, #tpu.memory_space<vmem>>)
    %c1_i32_471 = arith.constant 1 : i32
    %c1_i32_472 = arith.constant 1 : i32
    %c6_i32_473 = arith.constant 6 : i32
    %c0_i32_474 = arith.constant 0 : i32
    %c0_i32_475 = arith.constant 0 : i32
    %472 = tpu.memref_slice %arg5[%c0_i32_474, %c0_i32_475] : memref<512x128xf32, #tpu.memory_space<any>> -> memref<1x128xf32, #tpu.memory_space<any>>
    %c6_i32_476 = arith.constant 6 : i32
    %c0_i32_477 = arith.constant 0 : i32
    %473 = tpu.memref_slice %arg7[%c1_i32_471, %c6_i32_476, %c0_i32_477] : memref<2x8x128xf32, #tpu.memory_space<vmem>> -> memref<1x1x128xf32, #tpu.memory_space<vmem>>
    %474 = tpu.memref_squeeze %473 : memref<1x1x128xf32, #tpu.memory_space<vmem>> -> memref<1x128xf32, #tpu.memory_space<vmem>>
    %475 = tpu.memref_slice %arg8[%c1_i32_472, %c6_i32_473] : memref<2x8x!tpu.dma_semaphore, #tpu.memory_space<semaphore_mem>> -> memref<1x1x!tpu.dma_semaphore, #tpu.memory_space<semaphore_mem>>
    %476 = tpu.memref_squeeze %475 : memref<1x1x!tpu.dma_semaphore, #tpu.memory_space<semaphore_mem>> -> memref<!tpu.dma_semaphore, #tpu.memory_space<semaphore_mem>>
    tpu.wait_dma2 semaphore(%476 : memref<!tpu.dma_semaphore, #tpu.memory_space<semaphore_mem>>) src(%472 : memref<1x128xf32, #tpu.memory_space<any>>) dst(%474 : memref<1x128xf32, #tpu.memory_space<vmem>>)
    %c1_i32_478 = arith.constant 1 : i32
    %c1_i32_479 = arith.constant 1 : i32
    %c7_i32_480 = arith.constant 7 : i32
    %c0_i32_481 = arith.constant 0 : i32
    %c0_i32_482 = arith.constant 0 : i32
    %477 = tpu.memref_slice %arg5[%c0_i32_481, %c0_i32_482] : memref<512x128xf32, #tpu.memory_space<any>> -> memref<1x128xf32, #tpu.memory_space<any>>
    %c7_i32_483 = arith.constant 7 : i32
    %c0_i32_484 = arith.constant 0 : i32
    %478 = tpu.memref_slice %arg7[%c1_i32_478, %c7_i32_483, %c0_i32_484] : memref<2x8x128xf32, #tpu.memory_space<vmem>> -> memref<1x1x128xf32, #tpu.memory_space<vmem>>
    %479 = tpu.memref_squeeze %478 : memref<1x1x128xf32, #tpu.memory_space<vmem>> -> memref<1x128xf32, #tpu.memory_space<vmem>>
    %480 = tpu.memref_slice %arg8[%c1_i32_479, %c7_i32_480] : memref<2x8x!tpu.dma_semaphore, #tpu.memory_space<semaphore_mem>> -> memref<1x1x!tpu.dma_semaphore, #tpu.memory_space<semaphore_mem>>
    %481 = tpu.memref_squeeze %480 : memref<1x1x!tpu.dma_semaphore, #tpu.memory_space<semaphore_mem>> -> memref<!tpu.dma_semaphore, #tpu.memory_space<semaphore_mem>>
    tpu.wait_dma2 semaphore(%481 : memref<!tpu.dma_semaphore, #tpu.memory_space<semaphore_mem>>) src(%477 : memref<1x128xf32, #tpu.memory_space<any>>) dst(%479 : memref<1x128xf32, #tpu.memory_space<vmem>>)
    %c0_i32_485 = arith.constant 0 : i32
    %482 = arith.addi %2, %c0_i32_485 : i32
    %483 = arith.index_cast %482 : i32 to index
    %c4 = arith.constant 4 : index
    %484 = memref.load %arg2[%483, %c4] : memref<16x8xi32, #tpu.memory_space<smem>>
    %485 = arith.addi %3, %484 : i32
    %c0_i32_486 = arith.constant 0 : i32
    %c0_i32_487 = arith.constant 0 : i32
    %c0_i32_488 = arith.constant 0 : i32
    %c0_i32_489 = arith.constant 0 : i32
    %486 = tpu.memref_slice %arg5[%485, %c0_i32_489] : memref<512x128xf32, #tpu.memory_space<any>> -> memref<1x128xf32, #tpu.memory_space<any>>
    %c0_i32_490 = arith.constant 0 : i32
    %c0_i32_491 = arith.constant 0 : i32
    %487 = tpu.memref_slice %arg7[%c0_i32_486, %c0_i32_490, %c0_i32_491] : memref<2x8x128xf32, #tpu.memory_space<vmem>> -> memref<1x1x128xf32, #tpu.memory_space<vmem>>
    %488 = tpu.memref_squeeze %487 : memref<1x1x128xf32, #tpu.memory_space<vmem>> -> memref<1x128xf32, #tpu.memory_space<vmem>>
    %489 = tpu.memref_slice %arg8[%c0_i32_487, %c0_i32_488] : memref<2x8x!tpu.dma_semaphore, #tpu.memory_space<semaphore_mem>> -> memref<1x1x!tpu.dma_semaphore, #tpu.memory_space<semaphore_mem>>
    %490 = tpu.memref_squeeze %489 : memref<1x1x!tpu.dma_semaphore, #tpu.memory_space<semaphore_mem>> -> memref<!tpu.dma_semaphore, #tpu.memory_space<semaphore_mem>>
    tpu.enqueue_dma source(%486 : memref<1x128xf32, #tpu.memory_space<any>>) target(%488 : memref<1x128xf32, #tpu.memory_space<vmem>>) target_semaphore(%490 : memref<!tpu.dma_semaphore, #tpu.memory_space<semaphore_mem>>)
    %c1_i32_492 = arith.constant 1 : i32
    %491 = arith.addi %2, %c1_i32_492 : i32
    %492 = arith.index_cast %491 : i32 to index
    %c4_493 = arith.constant 4 : index
    %493 = memref.load %arg2[%492, %c4_493] : memref<16x8xi32, #tpu.memory_space<smem>>
    %494 = arith.addi %3, %493 : i32
    %c0_i32_494 = arith.constant 0 : i32
    %c0_i32_495 = arith.constant 0 : i32
    %c1_i32_496 = arith.constant 1 : i32
    %c0_i32_497 = arith.constant 0 : i32
    %495 = tpu.memref_slice %arg5[%494, %c0_i32_497] : memref<512x128xf32, #tpu.memory_space<any>> -> memref<1x128xf32, #tpu.memory_space<any>>
    %c1_i32_498 = arith.constant 1 : i32
    %c0_i32_499 = arith.constant 0 : i32
    %496 = tpu.memref_slice %arg7[%c0_i32_494, %c1_i32_498, %c0_i32_499] : memref<2x8x128xf32, #tpu.memory_space<vmem>> -> memref<1x1x128xf32, #tpu.memory_space<vmem>>
    %497 = tpu.memref_squeeze %496 : memref<1x1x128xf32, #tpu.memory_space<vmem>> -> memref<1x128xf32, #tpu.memory_space<vmem>>
    %498 = tpu.memref_slice %arg8[%c0_i32_495, %c1_i32_496] : memref<2x8x!tpu.dma_semaphore, #tpu.memory_space<semaphore_mem>> -> memref<1x1x!tpu.dma_semaphore, #tpu.memory_space<semaphore_mem>>
    %499 = tpu.memref_squeeze %498 : memref<1x1x!tpu.dma_semaphore, #tpu.memory_space<semaphore_mem>> -> memref<!tpu.dma_semaphore, #tpu.memory_space<semaphore_mem>>
    tpu.enqueue_dma source(%495 : memref<1x128xf32, #tpu.memory_space<any>>) target(%497 : memref<1x128xf32, #tpu.memory_space<vmem>>) target_semaphore(%499 : memref<!tpu.dma_semaphore, #tpu.memory_space<semaphore_mem>>)
    %c2_i32_500 = arith.constant 2 : i32
    %500 = arith.addi %2, %c2_i32_500 : i32
    %501 = arith.index_cast %500 : i32 to index
    %c4_501 = arith.constant 4 : index
    %502 = memref.load %arg2[%501, %c4_501] : memref<16x8xi32, #tpu.memory_space<smem>>
    %503 = arith.addi %3, %502 : i32
    %c0_i32_502 = arith.constant 0 : i32
    %c0_i32_503 = arith.constant 0 : i32
    %c2_i32_504 = arith.constant 2 : i32
    %c0_i32_505 = arith.constant 0 : i32
    %504 = tpu.memref_slice %arg5[%503, %c0_i32_505] : memref<512x128xf32, #tpu.memory_space<any>> -> memref<1x128xf32, #tpu.memory_space<any>>
    %c2_i32_506 = arith.constant 2 : i32
    %c0_i32_507 = arith.constant 0 : i32
    %505 = tpu.memref_slice %arg7[%c0_i32_502, %c2_i32_506, %c0_i32_507] : memref<2x8x128xf32, #tpu.memory_space<vmem>> -> memref<1x1x128xf32, #tpu.memory_space<vmem>>
    %506 = tpu.memref_squeeze %505 : memref<1x1x128xf32, #tpu.memory_space<vmem>> -> memref<1x128xf32, #tpu.memory_space<vmem>>
    %507 = tpu.memref_slice %arg8[%c0_i32_503, %c2_i32_504] : memref<2x8x!tpu.dma_semaphore, #tpu.memory_space<semaphore_mem>> -> memref<1x1x!tpu.dma_semaphore, #tpu.memory_space<semaphore_mem>>
    %508 = tpu.memref_squeeze %507 : memref<1x1x!tpu.dma_semaphore, #tpu.memory_space<semaphore_mem>> -> memref<!tpu.dma_semaphore, #tpu.memory_space<semaphore_mem>>
    tpu.enqueue_dma source(%504 : memref<1x128xf32, #tpu.memory_space<any>>) target(%506 : memref<1x128xf32, #tpu.memory_space<vmem>>) target_semaphore(%508 : memref<!tpu.dma_semaphore, #tpu.memory_space<semaphore_mem>>)
    %c3_i32_508 = arith.constant 3 : i32
    %509 = arith.addi %2, %c3_i32_508 : i32
    %510 = arith.index_cast %509 : i32 to index
    %c4_509 = arith.constant 4 : index
    %511 = memref.load %arg2[%510, %c4_509] : memref<16x8xi32, #tpu.memory_space<smem>>
    %512 = arith.addi %3, %511 : i32
    %c0_i32_510 = arith.constant 0 : i32
    %c0_i32_511 = arith.constant 0 : i32
    %c3_i32_512 = arith.constant 3 : i32
    %c0_i32_513 = arith.constant 0 : i32
    %513 = tpu.memref_slice %arg5[%512, %c0_i32_513] : memref<512x128xf32, #tpu.memory_space<any>> -> memref<1x128xf32, #tpu.memory_space<any>>
    %c3_i32_514 = arith.constant 3 : i32
    %c0_i32_515 = arith.constant 0 : i32
    %514 = tpu.memref_slice %arg7[%c0_i32_510, %c3_i32_514, %c0_i32_515] : memref<2x8x128xf32, #tpu.memory_space<vmem>> -> memref<1x1x128xf32, #tpu.memory_space<vmem>>
    %515 = tpu.memref_squeeze %514 : memref<1x1x128xf32, #tpu.memory_space<vmem>> -> memref<1x128xf32, #tpu.memory_space<vmem>>
    %516 = tpu.memref_slice %arg8[%c0_i32_511, %c3_i32_512] : memref<2x8x!tpu.dma_semaphore, #tpu.memory_space<semaphore_mem>> -> memref<1x1x!tpu.dma_semaphore, #tpu.memory_space<semaphore_mem>>
    %517 = tpu.memref_squeeze %516 : memref<1x1x!tpu.dma_semaphore, #tpu.memory_space<semaphore_mem>> -> memref<!tpu.dma_semaphore, #tpu.memory_space<semaphore_mem>>
    tpu.enqueue_dma source(%513 : memref<1x128xf32, #tpu.memory_space<any>>) target(%515 : memref<1x128xf32, #tpu.memory_space<vmem>>) target_semaphore(%517 : memref<!tpu.dma_semaphore, #tpu.memory_space<semaphore_mem>>)
    %c4_i32_516 = arith.constant 4 : i32
    %518 = arith.addi %2, %c4_i32_516 : i32
    %519 = arith.index_cast %518 : i32 to index
    %c4_517 = arith.constant 4 : index
    %520 = memref.load %arg2[%519, %c4_517] : memref<16x8xi32, #tpu.memory_space<smem>>
    %521 = arith.addi %3, %520 : i32
    %c0_i32_518 = arith.constant 0 : i32
    %c0_i32_519 = arith.constant 0 : i32
    %c4_i32_520 = arith.constant 4 : i32
    %c0_i32_521 = arith.constant 0 : i32
    %522 = tpu.memref_slice %arg5[%521, %c0_i32_521] : memref<512x128xf32, #tpu.memory_space<any>> -> memref<1x128xf32, #tpu.memory_space<any>>
    %c4_i32_522 = arith.constant 4 : i32
    %c0_i32_523 = arith.constant 0 : i32
    %523 = tpu.memref_slice %arg7[%c0_i32_518, %c4_i32_522, %c0_i32_523] : memref<2x8x128xf32, #tpu.memory_space<vmem>> -> memref<1x1x128xf32, #tpu.memory_space<vmem>>
    %524 = tpu.memref_squeeze %523 : memref<1x1x128xf32, #tpu.memory_space<vmem>> -> memref<1x128xf32, #tpu.memory_space<vmem>>
    %525 = tpu.memref_slice %arg8[%c0_i32_519, %c4_i32_520] : memref<2x8x!tpu.dma_semaphore, #tpu.memory_space<semaphore_mem>> -> memref<1x1x!tpu.dma_semaphore, #tpu.memory_space<semaphore_mem>>
    %526 = tpu.memref_squeeze %525 : memref<1x1x!tpu.dma_semaphore, #tpu.memory_space<semaphore_mem>> -> memref<!tpu.dma_semaphore, #tpu.memory_space<semaphore_mem>>
    tpu.enqueue_dma source(%522 : memref<1x128xf32, #tpu.memory_space<any>>) target(%524 : memref<1x128xf32, #tpu.memory_space<vmem>>) target_semaphore(%526 : memref<!tpu.dma_semaphore, #tpu.memory_space<semaphore_mem>>)
    %c5_i32_524 = arith.constant 5 : i32
    %527 = arith.addi %2, %c5_i32_524 : i32
    %528 = arith.index_cast %527 : i32 to index
    %c4_525 = arith.constant 4 : index
    %529 = memref.load %arg2[%528, %c4_525] : memref<16x8xi32, #tpu.memory_space<smem>>
    %530 = arith.addi %3, %529 : i32
    %c0_i32_526 = arith.constant 0 : i32
    %c0_i32_527 = arith.constant 0 : i32
    %c5_i32_528 = arith.constant 5 : i32
    %c0_i32_529 = arith.constant 0 : i32
    %531 = tpu.memref_slice %arg5[%530, %c0_i32_529] : memref<512x128xf32, #tpu.memory_space<any>> -> memref<1x128xf32, #tpu.memory_space<any>>
    %c5_i32_530 = arith.constant 5 : i32
    %c0_i32_531 = arith.constant 0 : i32
    %532 = tpu.memref_slice %arg7[%c0_i32_526, %c5_i32_530, %c0_i32_531] : memref<2x8x128xf32, #tpu.memory_space<vmem>> -> memref<1x1x128xf32, #tpu.memory_space<vmem>>
    %533 = tpu.memref_squeeze %532 : memref<1x1x128xf32, #tpu.memory_space<vmem>> -> memref<1x128xf32, #tpu.memory_space<vmem>>
    %534 = tpu.memref_slice %arg8[%c0_i32_527, %c5_i32_528] : memref<2x8x!tpu.dma_semaphore, #tpu.memory_space<semaphore_mem>> -> memref<1x1x!tpu.dma_semaphore, #tpu.memory_space<semaphore_mem>>
    %535 = tpu.memref_squeeze %534 : memref<1x1x!tpu.dma_semaphore, #tpu.memory_space<semaphore_mem>> -> memref<!tpu.dma_semaphore, #tpu.memory_space<semaphore_mem>>
    tpu.enqueue_dma source(%531 : memref<1x128xf32, #tpu.memory_space<any>>) target(%533 : memref<1x128xf32, #tpu.memory_space<vmem>>) target_semaphore(%535 : memref<!tpu.dma_semaphore, #tpu.memory_space<semaphore_mem>>)
    %c6_i32_532 = arith.constant 6 : i32
    %536 = arith.addi %2, %c6_i32_532 : i32
    %537 = arith.index_cast %536 : i32 to index
    %c4_533 = arith.constant 4 : index
    %538 = memref.load %arg2[%537, %c4_533] : memref<16x8xi32, #tpu.memory_space<smem>>
    %539 = arith.addi %3, %538 : i32
    %c0_i32_534 = arith.constant 0 : i32
    %c0_i32_535 = arith.constant 0 : i32
    %c6_i32_536 = arith.constant 6 : i32
    %c0_i32_537 = arith.constant 0 : i32
    %540 = tpu.memref_slice %arg5[%539, %c0_i32_537] : memref<512x128xf32, #tpu.memory_space<any>> -> memref<1x128xf32, #tpu.memory_space<any>>
    %c6_i32_538 = arith.constant 6 : i32
    %c0_i32_539 = arith.constant 0 : i32
    %541 = tpu.memref_slice %arg7[%c0_i32_534, %c6_i32_538, %c0_i32_539] : memref<2x8x128xf32, #tpu.memory_space<vmem>> -> memref<1x1x128xf32, #tpu.memory_space<vmem>>
    %542 = tpu.memref_squeeze %541 : memref<1x1x128xf32, #tpu.memory_space<vmem>> -> memref<1x128xf32, #tpu.memory_space<vmem>>
    %543 = tpu.memref_slice %arg8[%c0_i32_535, %c6_i32_536] : memref<2x8x!tpu.dma_semaphore, #tpu.memory_space<semaphore_mem>> -> memref<1x1x!tpu.dma_semaphore, #tpu.memory_space<semaphore_mem>>
    %544 = tpu.memref_squeeze %543 : memref<1x1x!tpu.dma_semaphore, #tpu.memory_space<semaphore_mem>> -> memref<!tpu.dma_semaphore, #tpu.memory_space<semaphore_mem>>
    tpu.enqueue_dma source(%540 : memref<1x128xf32, #tpu.memory_space<any>>) target(%542 : memref<1x128xf32, #tpu.memory_space<vmem>>) target_semaphore(%544 : memref<!tpu.dma_semaphore, #tpu.memory_space<semaphore_mem>>)
    %c7_i32_540 = arith.constant 7 : i32
    %545 = arith.addi %2, %c7_i32_540 : i32
    %546 = arith.index_cast %545 : i32 to index
    %c4_541 = arith.constant 4 : index
    %547 = memref.load %arg2[%546, %c4_541] : memref<16x8xi32, #tpu.memory_space<smem>>
    %548 = arith.addi %3, %547 : i32
    %c0_i32_542 = arith.constant 0 : i32
    %c0_i32_543 = arith.constant 0 : i32
    %c7_i32_544 = arith.constant 7 : i32
    %c0_i32_545 = arith.constant 0 : i32
    %549 = tpu.memref_slice %arg5[%548, %c0_i32_545] : memref<512x128xf32, #tpu.memory_space<any>> -> memref<1x128xf32, #tpu.memory_space<any>>
    %c7_i32_546 = arith.constant 7 : i32
    %c0_i32_547 = arith.constant 0 : i32
    %550 = tpu.memref_slice %arg7[%c0_i32_542, %c7_i32_546, %c0_i32_547] : memref<2x8x128xf32, #tpu.memory_space<vmem>> -> memref<1x1x128xf32, #tpu.memory_space<vmem>>
    %551 = tpu.memref_squeeze %550 : memref<1x1x128xf32, #tpu.memory_space<vmem>> -> memref<1x128xf32, #tpu.memory_space<vmem>>
    %552 = tpu.memref_slice %arg8[%c0_i32_543, %c7_i32_544] : memref<2x8x!tpu.dma_semaphore, #tpu.memory_space<semaphore_mem>> -> memref<1x1x!tpu.dma_semaphore, #tpu.memory_space<semaphore_mem>>
    %553 = tpu.memref_squeeze %552 : memref<1x1x!tpu.dma_semaphore, #tpu.memory_space<semaphore_mem>> -> memref<!tpu.dma_semaphore, #tpu.memory_space<semaphore_mem>>
    tpu.enqueue_dma source(%549 : memref<1x128xf32, #tpu.memory_space<any>>) target(%551 : memref<1x128xf32, #tpu.memory_space<vmem>>) target_semaphore(%553 : memref<!tpu.dma_semaphore, #tpu.memory_space<semaphore_mem>>)
    %554 = vector.extract_strided_slice %86 {offsets = [0, 3], sizes = [8, 1], strides = [1, 1]} : vector<8x8xf32> to vector<8x1xf32>
    %c1_548 = arith.constant 1 : index
    %c0_549 = arith.constant 0 : index
    %c0_550 = arith.constant 0 : index
    %555 = vector.load %arg7[%c1_548, %c0_549, %c0_550] : memref<2x8x128xf32, #tpu.memory_space<vmem>>, vector<1x8x128xf32>
    %556 = vector.shape_cast %555 : vector<1x8x128xf32> to vector<8x128xf32>
    %557 = vector.broadcast %554 : vector<8x1xf32> to vector<8x128xf32>
    %558 = arith.mulf %557, %556 : vector<8x128xf32>
    %559 = arith.addf %441, %558 : vector<8x128xf32>
    %c0_i32_551 = arith.constant 0 : i32
    %c0_i32_552 = arith.constant 0 : i32
    %c0_i32_553 = arith.constant 0 : i32
    %c0_i32_554 = arith.constant 0 : i32
    %c0_i32_555 = arith.constant 0 : i32
    %560 = tpu.memref_slice %arg5[%c0_i32_554, %c0_i32_555] : memref<512x128xf32, #tpu.memory_space<any>> -> memref<1x128xf32, #tpu.memory_space<any>>
    %c0_i32_556 = arith.constant 0 : i32
    %c0_i32_557 = arith.constant 0 : i32
    %561 = tpu.memref_slice %arg7[%c0_i32_551, %c0_i32_556, %c0_i32_557] : memref<2x8x128xf32, #tpu.memory_space<vmem>> -> memref<1x1x128xf32, #tpu.memory_space<vmem>>
    %562 = tpu.memref_squeeze %561 : memref<1x1x128xf32, #tpu.memory_space<vmem>> -> memref<1x128xf32, #tpu.memory_space<vmem>>
    %563 = tpu.memref_slice %arg8[%c0_i32_552, %c0_i32_553] : memref<2x8x!tpu.dma_semaphore, #tpu.memory_space<semaphore_mem>> -> memref<1x1x!tpu.dma_semaphore, #tpu.memory_space<semaphore_mem>>
    %564 = tpu.memref_squeeze %563 : memref<1x1x!tpu.dma_semaphore, #tpu.memory_space<semaphore_mem>> -> memref<!tpu.dma_semaphore, #tpu.memory_space<semaphore_mem>>
    tpu.wait_dma2 semaphore(%564 : memref<!tpu.dma_semaphore, #tpu.memory_space<semaphore_mem>>) src(%560 : memref<1x128xf32, #tpu.memory_space<any>>) dst(%562 : memref<1x128xf32, #tpu.memory_space<vmem>>)
    %c0_i32_558 = arith.constant 0 : i32
    %c0_i32_559 = arith.constant 0 : i32
    %c1_i32_560 = arith.constant 1 : i32
    %c0_i32_561 = arith.constant 0 : i32
    %c0_i32_562 = arith.constant 0 : i32
    %565 = tpu.memref_slice %arg5[%c0_i32_561, %c0_i32_562] : memref<512x128xf32, #tpu.memory_space<any>> -> memref<1x128xf32, #tpu.memory_space<any>>
    %c1_i32_563 = arith.constant 1 : i32
    %c0_i32_564 = arith.constant 0 : i32
    %566 = tpu.memref_slice %arg7[%c0_i32_558, %c1_i32_563, %c0_i32_564] : memref<2x8x128xf32, #tpu.memory_space<vmem>> -> memref<1x1x128xf32, #tpu.memory_space<vmem>>
    %567 = tpu.memref_squeeze %566 : memref<1x1x128xf32, #tpu.memory_space<vmem>> -> memref<1x128xf32, #tpu.memory_space<vmem>>
    %568 = tpu.memref_slice %arg8[%c0_i32_559, %c1_i32_560] : memref<2x8x!tpu.dma_semaphore, #tpu.memory_space<semaphore_mem>> -> memref<1x1x!tpu.dma_semaphore, #tpu.memory_space<semaphore_mem>>
    %569 = tpu.memref_squeeze %568 : memref<1x1x!tpu.dma_semaphore, #tpu.memory_space<semaphore_mem>> -> memref<!tpu.dma_semaphore, #tpu.memory_space<semaphore_mem>>
    tpu.wait_dma2 semaphore(%569 : memref<!tpu.dma_semaphore, #tpu.memory_space<semaphore_mem>>) src(%565 : memref<1x128xf32, #tpu.memory_space<any>>) dst(%567 : memref<1x128xf32, #tpu.memory_space<vmem>>)
    %c0_i32_565 = arith.constant 0 : i32
    %c0_i32_566 = arith.constant 0 : i32
    %c2_i32_567 = arith.constant 2 : i32
    %c0_i32_568 = arith.constant 0 : i32
    %c0_i32_569 = arith.constant 0 : i32
    %570 = tpu.memref_slice %arg5[%c0_i32_568, %c0_i32_569] : memref<512x128xf32, #tpu.memory_space<any>> -> memref<1x128xf32, #tpu.memory_space<any>>
    %c2_i32_570 = arith.constant 2 : i32
    %c0_i32_571 = arith.constant 0 : i32
    %571 = tpu.memref_slice %arg7[%c0_i32_565, %c2_i32_570, %c0_i32_571] : memref<2x8x128xf32, #tpu.memory_space<vmem>> -> memref<1x1x128xf32, #tpu.memory_space<vmem>>
    %572 = tpu.memref_squeeze %571 : memref<1x1x128xf32, #tpu.memory_space<vmem>> -> memref<1x128xf32, #tpu.memory_space<vmem>>
    %573 = tpu.memref_slice %arg8[%c0_i32_566, %c2_i32_567] : memref<2x8x!tpu.dma_semaphore, #tpu.memory_space<semaphore_mem>> -> memref<1x1x!tpu.dma_semaphore, #tpu.memory_space<semaphore_mem>>
    %574 = tpu.memref_squeeze %573 : memref<1x1x!tpu.dma_semaphore, #tpu.memory_space<semaphore_mem>> -> memref<!tpu.dma_semaphore, #tpu.memory_space<semaphore_mem>>
    tpu.wait_dma2 semaphore(%574 : memref<!tpu.dma_semaphore, #tpu.memory_space<semaphore_mem>>) src(%570 : memref<1x128xf32, #tpu.memory_space<any>>) dst(%572 : memref<1x128xf32, #tpu.memory_space<vmem>>)
    %c0_i32_572 = arith.constant 0 : i32
    %c0_i32_573 = arith.constant 0 : i32
    %c3_i32_574 = arith.constant 3 : i32
    %c0_i32_575 = arith.constant 0 : i32
    %c0_i32_576 = arith.constant 0 : i32
    %575 = tpu.memref_slice %arg5[%c0_i32_575, %c0_i32_576] : memref<512x128xf32, #tpu.memory_space<any>> -> memref<1x128xf32, #tpu.memory_space<any>>
    %c3_i32_577 = arith.constant 3 : i32
    %c0_i32_578 = arith.constant 0 : i32
    %576 = tpu.memref_slice %arg7[%c0_i32_572, %c3_i32_577, %c0_i32_578] : memref<2x8x128xf32, #tpu.memory_space<vmem>> -> memref<1x1x128xf32, #tpu.memory_space<vmem>>
    %577 = tpu.memref_squeeze %576 : memref<1x1x128xf32, #tpu.memory_space<vmem>> -> memref<1x128xf32, #tpu.memory_space<vmem>>
    %578 = tpu.memref_slice %arg8[%c0_i32_573, %c3_i32_574] : memref<2x8x!tpu.dma_semaphore, #tpu.memory_space<semaphore_mem>> -> memref<1x1x!tpu.dma_semaphore, #tpu.memory_space<semaphore_mem>>
    %579 = tpu.memref_squeeze %578 : memref<1x1x!tpu.dma_semaphore, #tpu.memory_space<semaphore_mem>> -> memref<!tpu.dma_semaphore, #tpu.memory_space<semaphore_mem>>
    tpu.wait_dma2 semaphore(%579 : memref<!tpu.dma_semaphore, #tpu.memory_space<semaphore_mem>>) src(%575 : memref<1x128xf32, #tpu.memory_space<any>>) dst(%577 : memref<1x128xf32, #tpu.memory_space<vmem>>)
    %c0_i32_579 = arith.constant 0 : i32
    %c0_i32_580 = arith.constant 0 : i32
    %c4_i32_581 = arith.constant 4 : i32
    %c0_i32_582 = arith.constant 0 : i32
    %c0_i32_583 = arith.constant 0 : i32
    %580 = tpu.memref_slice %arg5[%c0_i32_582, %c0_i32_583] : memref<512x128xf32, #tpu.memory_space<any>> -> memref<1x128xf32, #tpu.memory_space<any>>
    %c4_i32_584 = arith.constant 4 : i32
    %c0_i32_585 = arith.constant 0 : i32
    %581 = tpu.memref_slice %arg7[%c0_i32_579, %c4_i32_584, %c0_i32_585] : memref<2x8x128xf32, #tpu.memory_space<vmem>> -> memref<1x1x128xf32, #tpu.memory_space<vmem>>
    %582 = tpu.memref_squeeze %581 : memref<1x1x128xf32, #tpu.memory_space<vmem>> -> memref<1x128xf32, #tpu.memory_space<vmem>>
    %583 = tpu.memref_slice %arg8[%c0_i32_580, %c4_i32_581] : memref<2x8x!tpu.dma_semaphore, #tpu.memory_space<semaphore_mem>> -> memref<1x1x!tpu.dma_semaphore, #tpu.memory_space<semaphore_mem>>
    %584 = tpu.memref_squeeze %583 : memref<1x1x!tpu.dma_semaphore, #tpu.memory_space<semaphore_mem>> -> memref<!tpu.dma_semaphore, #tpu.memory_space<semaphore_mem>>
    tpu.wait_dma2 semaphore(%584 : memref<!tpu.dma_semaphore, #tpu.memory_space<semaphore_mem>>) src(%580 : memref<1x128xf32, #tpu.memory_space<any>>) dst(%582 : memref<1x128xf32, #tpu.memory_space<vmem>>)
    %c0_i32_586 = arith.constant 0 : i32
    %c0_i32_587 = arith.constant 0 : i32
    %c5_i32_588 = arith.constant 5 : i32
    %c0_i32_589 = arith.constant 0 : i32
    %c0_i32_590 = arith.constant 0 : i32
    %585 = tpu.memref_slice %arg5[%c0_i32_589, %c0_i32_590] : memref<512x128xf32, #tpu.memory_space<any>> -> memref<1x128xf32, #tpu.memory_space<any>>
    %c5_i32_591 = arith.constant 5 : i32
    %c0_i32_592 = arith.constant 0 : i32
    %586 = tpu.memref_slice %arg7[%c0_i32_586, %c5_i32_591, %c0_i32_592] : memref<2x8x128xf32, #tpu.memory_space<vmem>> -> memref<1x1x128xf32, #tpu.memory_space<vmem>>
    %587 = tpu.memref_squeeze %586 : memref<1x1x128xf32, #tpu.memory_space<vmem>> -> memref<1x128xf32, #tpu.memory_space<vmem>>
    %588 = tpu.memref_slice %arg8[%c0_i32_587, %c5_i32_588] : memref<2x8x!tpu.dma_semaphore, #tpu.memory_space<semaphore_mem>> -> memref<1x1x!tpu.dma_semaphore, #tpu.memory_space<semaphore_mem>>
    %589 = tpu.memref_squeeze %588 : memref<1x1x!tpu.dma_semaphore, #tpu.memory_space<semaphore_mem>> -> memref<!tpu.dma_semaphore, #tpu.memory_space<semaphore_mem>>
    tpu.wait_dma2 semaphore(%589 : memref<!tpu.dma_semaphore, #tpu.memory_space<semaphore_mem>>) src(%585 : memref<1x128xf32, #tpu.memory_space<any>>) dst(%587 : memref<1x128xf32, #tpu.memory_space<vmem>>)
    %c0_i32_593 = arith.constant 0 : i32
    %c0_i32_594 = arith.constant 0 : i32
    %c6_i32_595 = arith.constant 6 : i32
    %c0_i32_596 = arith.constant 0 : i32
    %c0_i32_597 = arith.constant 0 : i32
    %590 = tpu.memref_slice %arg5[%c0_i32_596, %c0_i32_597] : memref<512x128xf32, #tpu.memory_space<any>> -> memref<1x128xf32, #tpu.memory_space<any>>
    %c6_i32_598 = arith.constant 6 : i32
    %c0_i32_599 = arith.constant 0 : i32
    %591 = tpu.memref_slice %arg7[%c0_i32_593, %c6_i32_598, %c0_i32_599] : memref<2x8x128xf32, #tpu.memory_space<vmem>> -> memref<1x1x128xf32, #tpu.memory_space<vmem>>
    %592 = tpu.memref_squeeze %591 : memref<1x1x128xf32, #tpu.memory_space<vmem>> -> memref<1x128xf32, #tpu.memory_space<vmem>>
    %593 = tpu.memref_slice %arg8[%c0_i32_594, %c6_i32_595] : memref<2x8x!tpu.dma_semaphore, #tpu.memory_space<semaphore_mem>> -> memref<1x1x!tpu.dma_semaphore, #tpu.memory_space<semaphore_mem>>
    %594 = tpu.memref_squeeze %593 : memref<1x1x!tpu.dma_semaphore, #tpu.memory_space<semaphore_mem>> -> memref<!tpu.dma_semaphore, #tpu.memory_space<semaphore_mem>>
    tpu.wait_dma2 semaphore(%594 : memref<!tpu.dma_semaphore, #tpu.memory_space<semaphore_mem>>) src(%590 : memref<1x128xf32, #tpu.memory_space<any>>) dst(%592 : memref<1x128xf32, #tpu.memory_space<vmem>>)
    %c0_i32_600 = arith.constant 0 : i32
    %c0_i32_601 = arith.constant 0 : i32
    %c7_i32_602 = arith.constant 7 : i32
    %c0_i32_603 = arith.constant 0 : i32
    %c0_i32_604 = arith.constant 0 : i32
    %595 = tpu.memref_slice %arg5[%c0_i32_603, %c0_i32_604] : memref<512x128xf32, #tpu.memory_space<any>> -> memref<1x128xf32, #tpu.memory_space<any>>
    %c7_i32_605 = arith.constant 7 : i32
    %c0_i32_606 = arith.constant 0 : i32
    %596 = tpu.memref_slice %arg7[%c0_i32_600, %c7_i32_605, %c0_i32_606] : memref<2x8x128xf32, #tpu.memory_space<vmem>> -> memref<1x1x128xf32, #tpu.memory_space<vmem>>
    %597 = tpu.memref_squeeze %596 : memref<1x1x128xf32, #tpu.memory_space<vmem>> -> memref<1x128xf32, #tpu.memory_space<vmem>>
    %598 = tpu.memref_slice %arg8[%c0_i32_601, %c7_i32_602] : memref<2x8x!tpu.dma_semaphore, #tpu.memory_space<semaphore_mem>> -> memref<1x1x!tpu.dma_semaphore, #tpu.memory_space<semaphore_mem>>
    %599 = tpu.memref_squeeze %598 : memref<1x1x!tpu.dma_semaphore, #tpu.memory_space<semaphore_mem>> -> memref<!tpu.dma_semaphore, #tpu.memory_space<semaphore_mem>>
    tpu.wait_dma2 semaphore(%599 : memref<!tpu.dma_semaphore, #tpu.memory_space<semaphore_mem>>) src(%595 : memref<1x128xf32, #tpu.memory_space<any>>) dst(%597 : memref<1x128xf32, #tpu.memory_space<vmem>>)
    %c0_i32_607 = arith.constant 0 : i32
    %600 = arith.addi %2, %c0_i32_607 : i32
    %601 = arith.index_cast %600 : i32 to index
    %c5 = arith.constant 5 : index
    %602 = memref.load %arg2[%601, %c5] : memref<16x8xi32, #tpu.memory_space<smem>>
    %603 = arith.addi %3, %602 : i32
    %c1_i32_608 = arith.constant 1 : i32
    %c1_i32_609 = arith.constant 1 : i32
    %c0_i32_610 = arith.constant 0 : i32
    %c0_i32_611 = arith.constant 0 : i32
    %604 = tpu.memref_slice %arg5[%603, %c0_i32_611] : memref<512x128xf32, #tpu.memory_space<any>> -> memref<1x128xf32, #tpu.memory_space<any>>
    %c0_i32_612 = arith.constant 0 : i32
    %c0_i32_613 = arith.constant 0 : i32
    %605 = tpu.memref_slice %arg7[%c1_i32_608, %c0_i32_612, %c0_i32_613] : memref<2x8x128xf32, #tpu.memory_space<vmem>> -> memref<1x1x128xf32, #tpu.memory_space<vmem>>
    %606 = tpu.memref_squeeze %605 : memref<1x1x128xf32, #tpu.memory_space<vmem>> -> memref<1x128xf32, #tpu.memory_space<vmem>>
    %607 = tpu.memref_slice %arg8[%c1_i32_609, %c0_i32_610] : memref<2x8x!tpu.dma_semaphore, #tpu.memory_space<semaphore_mem>> -> memref<1x1x!tpu.dma_semaphore, #tpu.memory_space<semaphore_mem>>
    %608 = tpu.memref_squeeze %607 : memref<1x1x!tpu.dma_semaphore, #tpu.memory_space<semaphore_mem>> -> memref<!tpu.dma_semaphore, #tpu.memory_space<semaphore_mem>>
    tpu.enqueue_dma source(%604 : memref<1x128xf32, #tpu.memory_space<any>>) target(%606 : memref<1x128xf32, #tpu.memory_space<vmem>>) target_semaphore(%608 : memref<!tpu.dma_semaphore, #tpu.memory_space<semaphore_mem>>)
    %c1_i32_614 = arith.constant 1 : i32
    %609 = arith.addi %2, %c1_i32_614 : i32
    %610 = arith.index_cast %609 : i32 to index
    %c5_615 = arith.constant 5 : index
    %611 = memref.load %arg2[%610, %c5_615] : memref<16x8xi32, #tpu.memory_space<smem>>
    %612 = arith.addi %3, %611 : i32
    %c1_i32_616 = arith.constant 1 : i32
    %c1_i32_617 = arith.constant 1 : i32
    %c1_i32_618 = arith.constant 1 : i32
    %c0_i32_619 = arith.constant 0 : i32
    %613 = tpu.memref_slice %arg5[%612, %c0_i32_619] : memref<512x128xf32, #tpu.memory_space<any>> -> memref<1x128xf32, #tpu.memory_space<any>>
    %c1_i32_620 = arith.constant 1 : i32
    %c0_i32_621 = arith.constant 0 : i32
    %614 = tpu.memref_slice %arg7[%c1_i32_616, %c1_i32_620, %c0_i32_621] : memref<2x8x128xf32, #tpu.memory_space<vmem>> -> memref<1x1x128xf32, #tpu.memory_space<vmem>>
    %615 = tpu.memref_squeeze %614 : memref<1x1x128xf32, #tpu.memory_space<vmem>> -> memref<1x128xf32, #tpu.memory_space<vmem>>
    %616 = tpu.memref_slice %arg8[%c1_i32_617, %c1_i32_618] : memref<2x8x!tpu.dma_semaphore, #tpu.memory_space<semaphore_mem>> -> memref<1x1x!tpu.dma_semaphore, #tpu.memory_space<semaphore_mem>>
    %617 = tpu.memref_squeeze %616 : memref<1x1x!tpu.dma_semaphore, #tpu.memory_space<semaphore_mem>> -> memref<!tpu.dma_semaphore, #tpu.memory_space<semaphore_mem>>
    tpu.enqueue_dma source(%613 : memref<1x128xf32, #tpu.memory_space<any>>) target(%615 : memref<1x128xf32, #tpu.memory_space<vmem>>) target_semaphore(%617 : memref<!tpu.dma_semaphore, #tpu.memory_space<semaphore_mem>>)
    %c2_i32_622 = arith.constant 2 : i32
    %618 = arith.addi %2, %c2_i32_622 : i32
    %619 = arith.index_cast %618 : i32 to index
    %c5_623 = arith.constant 5 : index
    %620 = memref.load %arg2[%619, %c5_623] : memref<16x8xi32, #tpu.memory_space<smem>>
    %621 = arith.addi %3, %620 : i32
    %c1_i32_624 = arith.constant 1 : i32
    %c1_i32_625 = arith.constant 1 : i32
    %c2_i32_626 = arith.constant 2 : i32
    %c0_i32_627 = arith.constant 0 : i32
    %622 = tpu.memref_slice %arg5[%621, %c0_i32_627] : memref<512x128xf32, #tpu.memory_space<any>> -> memref<1x128xf32, #tpu.memory_space<any>>
    %c2_i32_628 = arith.constant 2 : i32
    %c0_i32_629 = arith.constant 0 : i32
    %623 = tpu.memref_slice %arg7[%c1_i32_624, %c2_i32_628, %c0_i32_629] : memref<2x8x128xf32, #tpu.memory_space<vmem>> -> memref<1x1x128xf32, #tpu.memory_space<vmem>>
    %624 = tpu.memref_squeeze %623 : memref<1x1x128xf32, #tpu.memory_space<vmem>> -> memref<1x128xf32, #tpu.memory_space<vmem>>
    %625 = tpu.memref_slice %arg8[%c1_i32_625, %c2_i32_626] : memref<2x8x!tpu.dma_semaphore, #tpu.memory_space<semaphore_mem>> -> memref<1x1x!tpu.dma_semaphore, #tpu.memory_space<semaphore_mem>>
    %626 = tpu.memref_squeeze %625 : memref<1x1x!tpu.dma_semaphore, #tpu.memory_space<semaphore_mem>> -> memref<!tpu.dma_semaphore, #tpu.memory_space<semaphore_mem>>
    tpu.enqueue_dma source(%622 : memref<1x128xf32, #tpu.memory_space<any>>) target(%624 : memref<1x128xf32, #tpu.memory_space<vmem>>) target_semaphore(%626 : memref<!tpu.dma_semaphore, #tpu.memory_space<semaphore_mem>>)
    %c3_i32_630 = arith.constant 3 : i32
    %627 = arith.addi %2, %c3_i32_630 : i32
    %628 = arith.index_cast %627 : i32 to index
    %c5_631 = arith.constant 5 : index
    %629 = memref.load %arg2[%628, %c5_631] : memref<16x8xi32, #tpu.memory_space<smem>>
    %630 = arith.addi %3, %629 : i32
    %c1_i32_632 = arith.constant 1 : i32
    %c1_i32_633 = arith.constant 1 : i32
    %c3_i32_634 = arith.constant 3 : i32
    %c0_i32_635 = arith.constant 0 : i32
    %631 = tpu.memref_slice %arg5[%630, %c0_i32_635] : memref<512x128xf32, #tpu.memory_space<any>> -> memref<1x128xf32, #tpu.memory_space<any>>
    %c3_i32_636 = arith.constant 3 : i32
    %c0_i32_637 = arith.constant 0 : i32
    %632 = tpu.memref_slice %arg7[%c1_i32_632, %c3_i32_636, %c0_i32_637] : memref<2x8x128xf32, #tpu.memory_space<vmem>> -> memref<1x1x128xf32, #tpu.memory_space<vmem>>
    %633 = tpu.memref_squeeze %632 : memref<1x1x128xf32, #tpu.memory_space<vmem>> -> memref<1x128xf32, #tpu.memory_space<vmem>>
    %634 = tpu.memref_slice %arg8[%c1_i32_633, %c3_i32_634] : memref<2x8x!tpu.dma_semaphore, #tpu.memory_space<semaphore_mem>> -> memref<1x1x!tpu.dma_semaphore, #tpu.memory_space<semaphore_mem>>
    %635 = tpu.memref_squeeze %634 : memref<1x1x!tpu.dma_semaphore, #tpu.memory_space<semaphore_mem>> -> memref<!tpu.dma_semaphore, #tpu.memory_space<semaphore_mem>>
    tpu.enqueue_dma source(%631 : memref<1x128xf32, #tpu.memory_space<any>>) target(%633 : memref<1x128xf32, #tpu.memory_space<vmem>>) target_semaphore(%635 : memref<!tpu.dma_semaphore, #tpu.memory_space<semaphore_mem>>)
    %c4_i32_638 = arith.constant 4 : i32
    %636 = arith.addi %2, %c4_i32_638 : i32
    %637 = arith.index_cast %636 : i32 to index
    %c5_639 = arith.constant 5 : index
    %638 = memref.load %arg2[%637, %c5_639] : memref<16x8xi32, #tpu.memory_space<smem>>
    %639 = arith.addi %3, %638 : i32
    %c1_i32_640 = arith.constant 1 : i32
    %c1_i32_641 = arith.constant 1 : i32
    %c4_i32_642 = arith.constant 4 : i32
    %c0_i32_643 = arith.constant 0 : i32
    %640 = tpu.memref_slice %arg5[%639, %c0_i32_643] : memref<512x128xf32, #tpu.memory_space<any>> -> memref<1x128xf32, #tpu.memory_space<any>>
    %c4_i32_644 = arith.constant 4 : i32
    %c0_i32_645 = arith.constant 0 : i32
    %641 = tpu.memref_slice %arg7[%c1_i32_640, %c4_i32_644, %c0_i32_645] : memref<2x8x128xf32, #tpu.memory_space<vmem>> -> memref<1x1x128xf32, #tpu.memory_space<vmem>>
    %642 = tpu.memref_squeeze %641 : memref<1x1x128xf32, #tpu.memory_space<vmem>> -> memref<1x128xf32, #tpu.memory_space<vmem>>
    %643 = tpu.memref_slice %arg8[%c1_i32_641, %c4_i32_642] : memref<2x8x!tpu.dma_semaphore, #tpu.memory_space<semaphore_mem>> -> memref<1x1x!tpu.dma_semaphore, #tpu.memory_space<semaphore_mem>>
    %644 = tpu.memref_squeeze %643 : memref<1x1x!tpu.dma_semaphore, #tpu.memory_space<semaphore_mem>> -> memref<!tpu.dma_semaphore, #tpu.memory_space<semaphore_mem>>
    tpu.enqueue_dma source(%640 : memref<1x128xf32, #tpu.memory_space<any>>) target(%642 : memref<1x128xf32, #tpu.memory_space<vmem>>) target_semaphore(%644 : memref<!tpu.dma_semaphore, #tpu.memory_space<semaphore_mem>>)
    %c5_i32_646 = arith.constant 5 : i32
    %645 = arith.addi %2, %c5_i32_646 : i32
    %646 = arith.index_cast %645 : i32 to index
    %c5_647 = arith.constant 5 : index
    %647 = memref.load %arg2[%646, %c5_647] : memref<16x8xi32, #tpu.memory_space<smem>>
    %648 = arith.addi %3, %647 : i32
    %c1_i32_648 = arith.constant 1 : i32
    %c1_i32_649 = arith.constant 1 : i32
    %c5_i32_650 = arith.constant 5 : i32
    %c0_i32_651 = arith.constant 0 : i32
    %649 = tpu.memref_slice %arg5[%648, %c0_i32_651] : memref<512x128xf32, #tpu.memory_space<any>> -> memref<1x128xf32, #tpu.memory_space<any>>
    %c5_i32_652 = arith.constant 5 : i32
    %c0_i32_653 = arith.constant 0 : i32
    %650 = tpu.memref_slice %arg7[%c1_i32_648, %c5_i32_652, %c0_i32_653] : memref<2x8x128xf32, #tpu.memory_space<vmem>> -> memref<1x1x128xf32, #tpu.memory_space<vmem>>
    %651 = tpu.memref_squeeze %650 : memref<1x1x128xf32, #tpu.memory_space<vmem>> -> memref<1x128xf32, #tpu.memory_space<vmem>>
    %652 = tpu.memref_slice %arg8[%c1_i32_649, %c5_i32_650] : memref<2x8x!tpu.dma_semaphore, #tpu.memory_space<semaphore_mem>> -> memref<1x1x!tpu.dma_semaphore, #tpu.memory_space<semaphore_mem>>
    %653 = tpu.memref_squeeze %652 : memref<1x1x!tpu.dma_semaphore, #tpu.memory_space<semaphore_mem>> -> memref<!tpu.dma_semaphore, #tpu.memory_space<semaphore_mem>>
    tpu.enqueue_dma source(%649 : memref<1x128xf32, #tpu.memory_space<any>>) target(%651 : memref<1x128xf32, #tpu.memory_space<vmem>>) target_semaphore(%653 : memref<!tpu.dma_semaphore, #tpu.memory_space<semaphore_mem>>)
    %c6_i32_654 = arith.constant 6 : i32
    %654 = arith.addi %2, %c6_i32_654 : i32
    %655 = arith.index_cast %654 : i32 to index
    %c5_655 = arith.constant 5 : index
    %656 = memref.load %arg2[%655, %c5_655] : memref<16x8xi32, #tpu.memory_space<smem>>
    %657 = arith.addi %3, %656 : i32
    %c1_i32_656 = arith.constant 1 : i32
    %c1_i32_657 = arith.constant 1 : i32
    %c6_i32_658 = arith.constant 6 : i32
    %c0_i32_659 = arith.constant 0 : i32
    %658 = tpu.memref_slice %arg5[%657, %c0_i32_659] : memref<512x128xf32, #tpu.memory_space<any>> -> memref<1x128xf32, #tpu.memory_space<any>>
    %c6_i32_660 = arith.constant 6 : i32
    %c0_i32_661 = arith.constant 0 : i32
    %659 = tpu.memref_slice %arg7[%c1_i32_656, %c6_i32_660, %c0_i32_661] : memref<2x8x128xf32, #tpu.memory_space<vmem>> -> memref<1x1x128xf32, #tpu.memory_space<vmem>>
    %660 = tpu.memref_squeeze %659 : memref<1x1x128xf32, #tpu.memory_space<vmem>> -> memref<1x128xf32, #tpu.memory_space<vmem>>
    %661 = tpu.memref_slice %arg8[%c1_i32_657, %c6_i32_658] : memref<2x8x!tpu.dma_semaphore, #tpu.memory_space<semaphore_mem>> -> memref<1x1x!tpu.dma_semaphore, #tpu.memory_space<semaphore_mem>>
    %662 = tpu.memref_squeeze %661 : memref<1x1x!tpu.dma_semaphore, #tpu.memory_space<semaphore_mem>> -> memref<!tpu.dma_semaphore, #tpu.memory_space<semaphore_mem>>
    tpu.enqueue_dma source(%658 : memref<1x128xf32, #tpu.memory_space<any>>) target(%660 : memref<1x128xf32, #tpu.memory_space<vmem>>) target_semaphore(%662 : memref<!tpu.dma_semaphore, #tpu.memory_space<semaphore_mem>>)
    %c7_i32_662 = arith.constant 7 : i32
    %663 = arith.addi %2, %c7_i32_662 : i32
    %664 = arith.index_cast %663 : i32 to index
    %c5_663 = arith.constant 5 : index
    %665 = memref.load %arg2[%664, %c5_663] : memref<16x8xi32, #tpu.memory_space<smem>>
    %666 = arith.addi %3, %665 : i32
    %c1_i32_664 = arith.constant 1 : i32
    %c1_i32_665 = arith.constant 1 : i32
    %c7_i32_666 = arith.constant 7 : i32
    %c0_i32_667 = arith.constant 0 : i32
    %667 = tpu.memref_slice %arg5[%666, %c0_i32_667] : memref<512x128xf32, #tpu.memory_space<any>> -> memref<1x128xf32, #tpu.memory_space<any>>
    %c7_i32_668 = arith.constant 7 : i32
    %c0_i32_669 = arith.constant 0 : i32
    %668 = tpu.memref_slice %arg7[%c1_i32_664, %c7_i32_668, %c0_i32_669] : memref<2x8x128xf32, #tpu.memory_space<vmem>> -> memref<1x1x128xf32, #tpu.memory_space<vmem>>
    %669 = tpu.memref_squeeze %668 : memref<1x1x128xf32, #tpu.memory_space<vmem>> -> memref<1x128xf32, #tpu.memory_space<vmem>>
    %670 = tpu.memref_slice %arg8[%c1_i32_665, %c7_i32_666] : memref<2x8x!tpu.dma_semaphore, #tpu.memory_space<semaphore_mem>> -> memref<1x1x!tpu.dma_semaphore, #tpu.memory_space<semaphore_mem>>
    %671 = tpu.memref_squeeze %670 : memref<1x1x!tpu.dma_semaphore, #tpu.memory_space<semaphore_mem>> -> memref<!tpu.dma_semaphore, #tpu.memory_space<semaphore_mem>>
    tpu.enqueue_dma source(%667 : memref<1x128xf32, #tpu.memory_space<any>>) target(%669 : memref<1x128xf32, #tpu.memory_space<vmem>>) target_semaphore(%671 : memref<!tpu.dma_semaphore, #tpu.memory_space<semaphore_mem>>)
    %672 = vector.extract_strided_slice %86 {offsets = [0, 4], sizes = [8, 1], strides = [1, 1]} : vector<8x8xf32> to vector<8x1xf32>
    %c0_670 = arith.constant 0 : index
    %c0_671 = arith.constant 0 : index
    %c0_672 = arith.constant 0 : index
    %673 = vector.load %arg7[%c0_670, %c0_671, %c0_672] : memref<2x8x128xf32, #tpu.memory_space<vmem>>, vector<1x8x128xf32>
    %674 = vector.shape_cast %673 : vector<1x8x128xf32> to vector<8x128xf32>
    %675 = vector.broadcast %672 : vector<8x1xf32> to vector<8x128xf32>
    %676 = arith.mulf %675, %674 : vector<8x128xf32>
    %677 = arith.addf %559, %676 : vector<8x128xf32>
    %c1_i32_673 = arith.constant 1 : i32
    %c1_i32_674 = arith.constant 1 : i32
    %c0_i32_675 = arith.constant 0 : i32
    %c0_i32_676 = arith.constant 0 : i32
    %c0_i32_677 = arith.constant 0 : i32
    %678 = tpu.memref_slice %arg5[%c0_i32_676, %c0_i32_677] : memref<512x128xf32, #tpu.memory_space<any>> -> memref<1x128xf32, #tpu.memory_space<any>>
    %c0_i32_678 = arith.constant 0 : i32
    %c0_i32_679 = arith.constant 0 : i32
    %679 = tpu.memref_slice %arg7[%c1_i32_673, %c0_i32_678, %c0_i32_679] : memref<2x8x128xf32, #tpu.memory_space<vmem>> -> memref<1x1x128xf32, #tpu.memory_space<vmem>>
    %680 = tpu.memref_squeeze %679 : memref<1x1x128xf32, #tpu.memory_space<vmem>> -> memref<1x128xf32, #tpu.memory_space<vmem>>
    %681 = tpu.memref_slice %arg8[%c1_i32_674, %c0_i32_675] : memref<2x8x!tpu.dma_semaphore, #tpu.memory_space<semaphore_mem>> -> memref<1x1x!tpu.dma_semaphore, #tpu.memory_space<semaphore_mem>>
    %682 = tpu.memref_squeeze %681 : memref<1x1x!tpu.dma_semaphore, #tpu.memory_space<semaphore_mem>> -> memref<!tpu.dma_semaphore, #tpu.memory_space<semaphore_mem>>
    tpu.wait_dma2 semaphore(%682 : memref<!tpu.dma_semaphore, #tpu.memory_space<semaphore_mem>>) src(%678 : memref<1x128xf32, #tpu.memory_space<any>>) dst(%680 : memref<1x128xf32, #tpu.memory_space<vmem>>)
    %c1_i32_680 = arith.constant 1 : i32
    %c1_i32_681 = arith.constant 1 : i32
    %c1_i32_682 = arith.constant 1 : i32
    %c0_i32_683 = arith.constant 0 : i32
    %c0_i32_684 = arith.constant 0 : i32
    %683 = tpu.memref_slice %arg5[%c0_i32_683, %c0_i32_684] : memref<512x128xf32, #tpu.memory_space<any>> -> memref<1x128xf32, #tpu.memory_space<any>>
    %c1_i32_685 = arith.constant 1 : i32
    %c0_i32_686 = arith.constant 0 : i32
    %684 = tpu.memref_slice %arg7[%c1_i32_680, %c1_i32_685, %c0_i32_686] : memref<2x8x128xf32, #tpu.memory_space<vmem>> -> memref<1x1x128xf32, #tpu.memory_space<vmem>>
    %685 = tpu.memref_squeeze %684 : memref<1x1x128xf32, #tpu.memory_space<vmem>> -> memref<1x128xf32, #tpu.memory_space<vmem>>
    %686 = tpu.memref_slice %arg8[%c1_i32_681, %c1_i32_682] : memref<2x8x!tpu.dma_semaphore, #tpu.memory_space<semaphore_mem>> -> memref<1x1x!tpu.dma_semaphore, #tpu.memory_space<semaphore_mem>>
    %687 = tpu.memref_squeeze %686 : memref<1x1x!tpu.dma_semaphore, #tpu.memory_space<semaphore_mem>> -> memref<!tpu.dma_semaphore, #tpu.memory_space<semaphore_mem>>
    tpu.wait_dma2 semaphore(%687 : memref<!tpu.dma_semaphore, #tpu.memory_space<semaphore_mem>>) src(%683 : memref<1x128xf32, #tpu.memory_space<any>>) dst(%685 : memref<1x128xf32, #tpu.memory_space<vmem>>)
    %c1_i32_687 = arith.constant 1 : i32
    %c1_i32_688 = arith.constant 1 : i32
    %c2_i32_689 = arith.constant 2 : i32
    %c0_i32_690 = arith.constant 0 : i32
    %c0_i32_691 = arith.constant 0 : i32
    %688 = tpu.memref_slice %arg5[%c0_i32_690, %c0_i32_691] : memref<512x128xf32, #tpu.memory_space<any>> -> memref<1x128xf32, #tpu.memory_space<any>>
    %c2_i32_692 = arith.constant 2 : i32
    %c0_i32_693 = arith.constant 0 : i32
    %689 = tpu.memref_slice %arg7[%c1_i32_687, %c2_i32_692, %c0_i32_693] : memref<2x8x128xf32, #tpu.memory_space<vmem>> -> memref<1x1x128xf32, #tpu.memory_space<vmem>>
    %690 = tpu.memref_squeeze %689 : memref<1x1x128xf32, #tpu.memory_space<vmem>> -> memref<1x128xf32, #tpu.memory_space<vmem>>
    %691 = tpu.memref_slice %arg8[%c1_i32_688, %c2_i32_689] : memref<2x8x!tpu.dma_semaphore, #tpu.memory_space<semaphore_mem>> -> memref<1x1x!tpu.dma_semaphore, #tpu.memory_space<semaphore_mem>>
    %692 = tpu.memref_squeeze %691 : memref<1x1x!tpu.dma_semaphore, #tpu.memory_space<semaphore_mem>> -> memref<!tpu.dma_semaphore, #tpu.memory_space<semaphore_mem>>
    tpu.wait_dma2 semaphore(%692 : memref<!tpu.dma_semaphore, #tpu.memory_space<semaphore_mem>>) src(%688 : memref<1x128xf32, #tpu.memory_space<any>>) dst(%690 : memref<1x128xf32, #tpu.memory_space<vmem>>)
    %c1_i32_694 = arith.constant 1 : i32
    %c1_i32_695 = arith.constant 1 : i32
    %c3_i32_696 = arith.constant 3 : i32
    %c0_i32_697 = arith.constant 0 : i32
    %c0_i32_698 = arith.constant 0 : i32
    %693 = tpu.memref_slice %arg5[%c0_i32_697, %c0_i32_698] : memref<512x128xf32, #tpu.memory_space<any>> -> memref<1x128xf32, #tpu.memory_space<any>>
    %c3_i32_699 = arith.constant 3 : i32
    %c0_i32_700 = arith.constant 0 : i32
    %694 = tpu.memref_slice %arg7[%c1_i32_694, %c3_i32_699, %c0_i32_700] : memref<2x8x128xf32, #tpu.memory_space<vmem>> -> memref<1x1x128xf32, #tpu.memory_space<vmem>>
    %695 = tpu.memref_squeeze %694 : memref<1x1x128xf32, #tpu.memory_space<vmem>> -> memref<1x128xf32, #tpu.memory_space<vmem>>
    %696 = tpu.memref_slice %arg8[%c1_i32_695, %c3_i32_696] : memref<2x8x!tpu.dma_semaphore, #tpu.memory_space<semaphore_mem>> -> memref<1x1x!tpu.dma_semaphore, #tpu.memory_space<semaphore_mem>>
    %697 = tpu.memref_squeeze %696 : memref<1x1x!tpu.dma_semaphore, #tpu.memory_space<semaphore_mem>> -> memref<!tpu.dma_semaphore, #tpu.memory_space<semaphore_mem>>
    tpu.wait_dma2 semaphore(%697 : memref<!tpu.dma_semaphore, #tpu.memory_space<semaphore_mem>>) src(%693 : memref<1x128xf32, #tpu.memory_space<any>>) dst(%695 : memref<1x128xf32, #tpu.memory_space<vmem>>)
    %c1_i32_701 = arith.constant 1 : i32
    %c1_i32_702 = arith.constant 1 : i32
    %c4_i32_703 = arith.constant 4 : i32
    %c0_i32_704 = arith.constant 0 : i32
    %c0_i32_705 = arith.constant 0 : i32
    %698 = tpu.memref_slice %arg5[%c0_i32_704, %c0_i32_705] : memref<512x128xf32, #tpu.memory_space<any>> -> memref<1x128xf32, #tpu.memory_space<any>>
    %c4_i32_706 = arith.constant 4 : i32
    %c0_i32_707 = arith.constant 0 : i32
    %699 = tpu.memref_slice %arg7[%c1_i32_701, %c4_i32_706, %c0_i32_707] : memref<2x8x128xf32, #tpu.memory_space<vmem>> -> memref<1x1x128xf32, #tpu.memory_space<vmem>>
    %700 = tpu.memref_squeeze %699 : memref<1x1x128xf32, #tpu.memory_space<vmem>> -> memref<1x128xf32, #tpu.memory_space<vmem>>
    %701 = tpu.memref_slice %arg8[%c1_i32_702, %c4_i32_703] : memref<2x8x!tpu.dma_semaphore, #tpu.memory_space<semaphore_mem>> -> memref<1x1x!tpu.dma_semaphore, #tpu.memory_space<semaphore_mem>>
    %702 = tpu.memref_squeeze %701 : memref<1x1x!tpu.dma_semaphore, #tpu.memory_space<semaphore_mem>> -> memref<!tpu.dma_semaphore, #tpu.memory_space<semaphore_mem>>
    tpu.wait_dma2 semaphore(%702 : memref<!tpu.dma_semaphore, #tpu.memory_space<semaphore_mem>>) src(%698 : memref<1x128xf32, #tpu.memory_space<any>>) dst(%700 : memref<1x128xf32, #tpu.memory_space<vmem>>)
    %c1_i32_708 = arith.constant 1 : i32
    %c1_i32_709 = arith.constant 1 : i32
    %c5_i32_710 = arith.constant 5 : i32
    %c0_i32_711 = arith.constant 0 : i32
    %c0_i32_712 = arith.constant 0 : i32
    %703 = tpu.memref_slice %arg5[%c0_i32_711, %c0_i32_712] : memref<512x128xf32, #tpu.memory_space<any>> -> memref<1x128xf32, #tpu.memory_space<any>>
    %c5_i32_713 = arith.constant 5 : i32
    %c0_i32_714 = arith.constant 0 : i32
    %704 = tpu.memref_slice %arg7[%c1_i32_708, %c5_i32_713, %c0_i32_714] : memref<2x8x128xf32, #tpu.memory_space<vmem>> -> memref<1x1x128xf32, #tpu.memory_space<vmem>>
    %705 = tpu.memref_squeeze %704 : memref<1x1x128xf32, #tpu.memory_space<vmem>> -> memref<1x128xf32, #tpu.memory_space<vmem>>
    %706 = tpu.memref_slice %arg8[%c1_i32_709, %c5_i32_710] : memref<2x8x!tpu.dma_semaphore, #tpu.memory_space<semaphore_mem>> -> memref<1x1x!tpu.dma_semaphore, #tpu.memory_space<semaphore_mem>>
    %707 = tpu.memref_squeeze %706 : memref<1x1x!tpu.dma_semaphore, #tpu.memory_space<semaphore_mem>> -> memref<!tpu.dma_semaphore, #tpu.memory_space<semaphore_mem>>
    tpu.wait_dma2 semaphore(%707 : memref<!tpu.dma_semaphore, #tpu.memory_space<semaphore_mem>>) src(%703 : memref<1x128xf32, #tpu.memory_space<any>>) dst(%705 : memref<1x128xf32, #tpu.memory_space<vmem>>)
    %c1_i32_715 = arith.constant 1 : i32
    %c1_i32_716 = arith.constant 1 : i32
    %c6_i32_717 = arith.constant 6 : i32
    %c0_i32_718 = arith.constant 0 : i32
    %c0_i32_719 = arith.constant 0 : i32
    %708 = tpu.memref_slice %arg5[%c0_i32_718, %c0_i32_719] : memref<512x128xf32, #tpu.memory_space<any>> -> memref<1x128xf32, #tpu.memory_space<any>>
    %c6_i32_720 = arith.constant 6 : i32
    %c0_i32_721 = arith.constant 0 : i32
    %709 = tpu.memref_slice %arg7[%c1_i32_715, %c6_i32_720, %c0_i32_721] : memref<2x8x128xf32, #tpu.memory_space<vmem>> -> memref<1x1x128xf32, #tpu.memory_space<vmem>>
    %710 = tpu.memref_squeeze %709 : memref<1x1x128xf32, #tpu.memory_space<vmem>> -> memref<1x128xf32, #tpu.memory_space<vmem>>
    %711 = tpu.memref_slice %arg8[%c1_i32_716, %c6_i32_717] : memref<2x8x!tpu.dma_semaphore, #tpu.memory_space<semaphore_mem>> -> memref<1x1x!tpu.dma_semaphore, #tpu.memory_space<semaphore_mem>>
    %712 = tpu.memref_squeeze %711 : memref<1x1x!tpu.dma_semaphore, #tpu.memory_space<semaphore_mem>> -> memref<!tpu.dma_semaphore, #tpu.memory_space<semaphore_mem>>
    tpu.wait_dma2 semaphore(%712 : memref<!tpu.dma_semaphore, #tpu.memory_space<semaphore_mem>>) src(%708 : memref<1x128xf32, #tpu.memory_space<any>>) dst(%710 : memref<1x128xf32, #tpu.memory_space<vmem>>)
    %c1_i32_722 = arith.constant 1 : i32
    %c1_i32_723 = arith.constant 1 : i32
    %c7_i32_724 = arith.constant 7 : i32
    %c0_i32_725 = arith.constant 0 : i32
    %c0_i32_726 = arith.constant 0 : i32
    %713 = tpu.memref_slice %arg5[%c0_i32_725, %c0_i32_726] : memref<512x128xf32, #tpu.memory_space<any>> -> memref<1x128xf32, #tpu.memory_space<any>>
    %c7_i32_727 = arith.constant 7 : i32
    %c0_i32_728 = arith.constant 0 : i32
    %714 = tpu.memref_slice %arg7[%c1_i32_722, %c7_i32_727, %c0_i32_728] : memref<2x8x128xf32, #tpu.memory_space<vmem>> -> memref<1x1x128xf32, #tpu.memory_space<vmem>>
    %715 = tpu.memref_squeeze %714 : memref<1x1x128xf32, #tpu.memory_space<vmem>> -> memref<1x128xf32, #tpu.memory_space<vmem>>
    %716 = tpu.memref_slice %arg8[%c1_i32_723, %c7_i32_724] : memref<2x8x!tpu.dma_semaphore, #tpu.memory_space<semaphore_mem>> -> memref<1x1x!tpu.dma_semaphore, #tpu.memory_space<semaphore_mem>>
    %717 = tpu.memref_squeeze %716 : memref<1x1x!tpu.dma_semaphore, #tpu.memory_space<semaphore_mem>> -> memref<!tpu.dma_semaphore, #tpu.memory_space<semaphore_mem>>
    tpu.wait_dma2 semaphore(%717 : memref<!tpu.dma_semaphore, #tpu.memory_space<semaphore_mem>>) src(%713 : memref<1x128xf32, #tpu.memory_space<any>>) dst(%715 : memref<1x128xf32, #tpu.memory_space<vmem>>)
    %c0_i32_729 = arith.constant 0 : i32
    %718 = arith.addi %2, %c0_i32_729 : i32
    %719 = arith.index_cast %718 : i32 to index
    %c6 = arith.constant 6 : index
    %720 = memref.load %arg2[%719, %c6] : memref<16x8xi32, #tpu.memory_space<smem>>
    %721 = arith.addi %3, %720 : i32
    %c0_i32_730 = arith.constant 0 : i32
    %c0_i32_731 = arith.constant 0 : i32
    %c0_i32_732 = arith.constant 0 : i32
    %c0_i32_733 = arith.constant 0 : i32
    %722 = tpu.memref_slice %arg5[%721, %c0_i32_733] : memref<512x128xf32, #tpu.memory_space<any>> -> memref<1x128xf32, #tpu.memory_space<any>>
    %c0_i32_734 = arith.constant 0 : i32
    %c0_i32_735 = arith.constant 0 : i32
    %723 = tpu.memref_slice %arg7[%c0_i32_730, %c0_i32_734, %c0_i32_735] : memref<2x8x128xf32, #tpu.memory_space<vmem>> -> memref<1x1x128xf32, #tpu.memory_space<vmem>>
    %724 = tpu.memref_squeeze %723 : memref<1x1x128xf32, #tpu.memory_space<vmem>> -> memref<1x128xf32, #tpu.memory_space<vmem>>
    %725 = tpu.memref_slice %arg8[%c0_i32_731, %c0_i32_732] : memref<2x8x!tpu.dma_semaphore, #tpu.memory_space<semaphore_mem>> -> memref<1x1x!tpu.dma_semaphore, #tpu.memory_space<semaphore_mem>>
    %726 = tpu.memref_squeeze %725 : memref<1x1x!tpu.dma_semaphore, #tpu.memory_space<semaphore_mem>> -> memref<!tpu.dma_semaphore, #tpu.memory_space<semaphore_mem>>
    tpu.enqueue_dma source(%722 : memref<1x128xf32, #tpu.memory_space<any>>) target(%724 : memref<1x128xf32, #tpu.memory_space<vmem>>) target_semaphore(%726 : memref<!tpu.dma_semaphore, #tpu.memory_space<semaphore_mem>>)
    %c1_i32_736 = arith.constant 1 : i32
    %727 = arith.addi %2, %c1_i32_736 : i32
    %728 = arith.index_cast %727 : i32 to index
    %c6_737 = arith.constant 6 : index
    %729 = memref.load %arg2[%728, %c6_737] : memref<16x8xi32, #tpu.memory_space<smem>>
    %730 = arith.addi %3, %729 : i32
    %c0_i32_738 = arith.constant 0 : i32
    %c0_i32_739 = arith.constant 0 : i32
    %c1_i32_740 = arith.constant 1 : i32
    %c0_i32_741 = arith.constant 0 : i32
    %731 = tpu.memref_slice %arg5[%730, %c0_i32_741] : memref<512x128xf32, #tpu.memory_space<any>> -> memref<1x128xf32, #tpu.memory_space<any>>
    %c1_i32_742 = arith.constant 1 : i32
    %c0_i32_743 = arith.constant 0 : i32
    %732 = tpu.memref_slice %arg7[%c0_i32_738, %c1_i32_742, %c0_i32_743] : memref<2x8x128xf32, #tpu.memory_space<vmem>> -> memref<1x1x128xf32, #tpu.memory_space<vmem>>
    %733 = tpu.memref_squeeze %732 : memref<1x1x128xf32, #tpu.memory_space<vmem>> -> memref<1x128xf32, #tpu.memory_space<vmem>>
    %734 = tpu.memref_slice %arg8[%c0_i32_739, %c1_i32_740] : memref<2x8x!tpu.dma_semaphore, #tpu.memory_space<semaphore_mem>> -> memref<1x1x!tpu.dma_semaphore, #tpu.memory_space<semaphore_mem>>
    %735 = tpu.memref_squeeze %734 : memref<1x1x!tpu.dma_semaphore, #tpu.memory_space<semaphore_mem>> -> memref<!tpu.dma_semaphore, #tpu.memory_space<semaphore_mem>>
    tpu.enqueue_dma source(%731 : memref<1x128xf32, #tpu.memory_space<any>>) target(%733 : memref<1x128xf32, #tpu.memory_space<vmem>>) target_semaphore(%735 : memref<!tpu.dma_semaphore, #tpu.memory_space<semaphore_mem>>)
    %c2_i32_744 = arith.constant 2 : i32
    %736 = arith.addi %2, %c2_i32_744 : i32
    %737 = arith.index_cast %736 : i32 to index
    %c6_745 = arith.constant 6 : index
    %738 = memref.load %arg2[%737, %c6_745] : memref<16x8xi32, #tpu.memory_space<smem>>
    %739 = arith.addi %3, %738 : i32
    %c0_i32_746 = arith.constant 0 : i32
    %c0_i32_747 = arith.constant 0 : i32
    %c2_i32_748 = arith.constant 2 : i32
    %c0_i32_749 = arith.constant 0 : i32
    %740 = tpu.memref_slice %arg5[%739, %c0_i32_749] : memref<512x128xf32, #tpu.memory_space<any>> -> memref<1x128xf32, #tpu.memory_space<any>>
    %c2_i32_750 = arith.constant 2 : i32
    %c0_i32_751 = arith.constant 0 : i32
    %741 = tpu.memref_slice %arg7[%c0_i32_746, %c2_i32_750, %c0_i32_751] : memref<2x8x128xf32, #tpu.memory_space<vmem>> -> memref<1x1x128xf32, #tpu.memory_space<vmem>>
    %742 = tpu.memref_squeeze %741 : memref<1x1x128xf32, #tpu.memory_space<vmem>> -> memref<1x128xf32, #tpu.memory_space<vmem>>
    %743 = tpu.memref_slice %arg8[%c0_i32_747, %c2_i32_748] : memref<2x8x!tpu.dma_semaphore, #tpu.memory_space<semaphore_mem>> -> memref<1x1x!tpu.dma_semaphore, #tpu.memory_space<semaphore_mem>>
    %744 = tpu.memref_squeeze %743 : memref<1x1x!tpu.dma_semaphore, #tpu.memory_space<semaphore_mem>> -> memref<!tpu.dma_semaphore, #tpu.memory_space<semaphore_mem>>
    tpu.enqueue_dma source(%740 : memref<1x128xf32, #tpu.memory_space<any>>) target(%742 : memref<1x128xf32, #tpu.memory_space<vmem>>) target_semaphore(%744 : memref<!tpu.dma_semaphore, #tpu.memory_space<semaphore_mem>>)
    %c3_i32_752 = arith.constant 3 : i32
    %745 = arith.addi %2, %c3_i32_752 : i32
    %746 = arith.index_cast %745 : i32 to index
    %c6_753 = arith.constant 6 : index
    %747 = memref.load %arg2[%746, %c6_753] : memref<16x8xi32, #tpu.memory_space<smem>>
    %748 = arith.addi %3, %747 : i32
    %c0_i32_754 = arith.constant 0 : i32
    %c0_i32_755 = arith.constant 0 : i32
    %c3_i32_756 = arith.constant 3 : i32
    %c0_i32_757 = arith.constant 0 : i32
    %749 = tpu.memref_slice %arg5[%748, %c0_i32_757] : memref<512x128xf32, #tpu.memory_space<any>> -> memref<1x128xf32, #tpu.memory_space<any>>
    %c3_i32_758 = arith.constant 3 : i32
    %c0_i32_759 = arith.constant 0 : i32
    %750 = tpu.memref_slice %arg7[%c0_i32_754, %c3_i32_758, %c0_i32_759] : memref<2x8x128xf32, #tpu.memory_space<vmem>> -> memref<1x1x128xf32, #tpu.memory_space<vmem>>
    %751 = tpu.memref_squeeze %750 : memref<1x1x128xf32, #tpu.memory_space<vmem>> -> memref<1x128xf32, #tpu.memory_space<vmem>>
    %752 = tpu.memref_slice %arg8[%c0_i32_755, %c3_i32_756] : memref<2x8x!tpu.dma_semaphore, #tpu.memory_space<semaphore_mem>> -> memref<1x1x!tpu.dma_semaphore, #tpu.memory_space<semaphore_mem>>
    %753 = tpu.memref_squeeze %752 : memref<1x1x!tpu.dma_semaphore, #tpu.memory_space<semaphore_mem>> -> memref<!tpu.dma_semaphore, #tpu.memory_space<semaphore_mem>>
    tpu.enqueue_dma source(%749 : memref<1x128xf32, #tpu.memory_space<any>>) target(%751 : memref<1x128xf32, #tpu.memory_space<vmem>>) target_semaphore(%753 : memref<!tpu.dma_semaphore, #tpu.memory_space<semaphore_mem>>)
    %c4_i32_760 = arith.constant 4 : i32
    %754 = arith.addi %2, %c4_i32_760 : i32
    %755 = arith.index_cast %754 : i32 to index
    %c6_761 = arith.constant 6 : index
    %756 = memref.load %arg2[%755, %c6_761] : memref<16x8xi32, #tpu.memory_space<smem>>
    %757 = arith.addi %3, %756 : i32
    %c0_i32_762 = arith.constant 0 : i32
    %c0_i32_763 = arith.constant 0 : i32
    %c4_i32_764 = arith.constant 4 : i32
    %c0_i32_765 = arith.constant 0 : i32
    %758 = tpu.memref_slice %arg5[%757, %c0_i32_765] : memref<512x128xf32, #tpu.memory_space<any>> -> memref<1x128xf32, #tpu.memory_space<any>>
    %c4_i32_766 = arith.constant 4 : i32
    %c0_i32_767 = arith.constant 0 : i32
    %759 = tpu.memref_slice %arg7[%c0_i32_762, %c4_i32_766, %c0_i32_767] : memref<2x8x128xf32, #tpu.memory_space<vmem>> -> memref<1x1x128xf32, #tpu.memory_space<vmem>>
    %760 = tpu.memref_squeeze %759 : memref<1x1x128xf32, #tpu.memory_space<vmem>> -> memref<1x128xf32, #tpu.memory_space<vmem>>
    %761 = tpu.memref_slice %arg8[%c0_i32_763, %c4_i32_764] : memref<2x8x!tpu.dma_semaphore, #tpu.memory_space<semaphore_mem>> -> memref<1x1x!tpu.dma_semaphore, #tpu.memory_space<semaphore_mem>>
    %762 = tpu.memref_squeeze %761 : memref<1x1x!tpu.dma_semaphore, #tpu.memory_space<semaphore_mem>> -> memref<!tpu.dma_semaphore, #tpu.memory_space<semaphore_mem>>
    tpu.enqueue_dma source(%758 : memref<1x128xf32, #tpu.memory_space<any>>) target(%760 : memref<1x128xf32, #tpu.memory_space<vmem>>) target_semaphore(%762 : memref<!tpu.dma_semaphore, #tpu.memory_space<semaphore_mem>>)
    %c5_i32_768 = arith.constant 5 : i32
    %763 = arith.addi %2, %c5_i32_768 : i32
    %764 = arith.index_cast %763 : i32 to index
    %c6_769 = arith.constant 6 : index
    %765 = memref.load %arg2[%764, %c6_769] : memref<16x8xi32, #tpu.memory_space<smem>>
    %766 = arith.addi %3, %765 : i32
    %c0_i32_770 = arith.constant 0 : i32
    %c0_i32_771 = arith.constant 0 : i32
    %c5_i32_772 = arith.constant 5 : i32
    %c0_i32_773 = arith.constant 0 : i32
    %767 = tpu.memref_slice %arg5[%766, %c0_i32_773] : memref<512x128xf32, #tpu.memory_space<any>> -> memref<1x128xf32, #tpu.memory_space<any>>
    %c5_i32_774 = arith.constant 5 : i32
    %c0_i32_775 = arith.constant 0 : i32
    %768 = tpu.memref_slice %arg7[%c0_i32_770, %c5_i32_774, %c0_i32_775] : memref<2x8x128xf32, #tpu.memory_space<vmem>> -> memref<1x1x128xf32, #tpu.memory_space<vmem>>
    %769 = tpu.memref_squeeze %768 : memref<1x1x128xf32, #tpu.memory_space<vmem>> -> memref<1x128xf32, #tpu.memory_space<vmem>>
    %770 = tpu.memref_slice %arg8[%c0_i32_771, %c5_i32_772] : memref<2x8x!tpu.dma_semaphore, #tpu.memory_space<semaphore_mem>> -> memref<1x1x!tpu.dma_semaphore, #tpu.memory_space<semaphore_mem>>
    %771 = tpu.memref_squeeze %770 : memref<1x1x!tpu.dma_semaphore, #tpu.memory_space<semaphore_mem>> -> memref<!tpu.dma_semaphore, #tpu.memory_space<semaphore_mem>>
    tpu.enqueue_dma source(%767 : memref<1x128xf32, #tpu.memory_space<any>>) target(%769 : memref<1x128xf32, #tpu.memory_space<vmem>>) target_semaphore(%771 : memref<!tpu.dma_semaphore, #tpu.memory_space<semaphore_mem>>)
    %c6_i32_776 = arith.constant 6 : i32
    %772 = arith.addi %2, %c6_i32_776 : i32
    %773 = arith.index_cast %772 : i32 to index
    %c6_777 = arith.constant 6 : index
    %774 = memref.load %arg2[%773, %c6_777] : memref<16x8xi32, #tpu.memory_space<smem>>
    %775 = arith.addi %3, %774 : i32
    %c0_i32_778 = arith.constant 0 : i32
    %c0_i32_779 = arith.constant 0 : i32
    %c6_i32_780 = arith.constant 6 : i32
    %c0_i32_781 = arith.constant 0 : i32
    %776 = tpu.memref_slice %arg5[%775, %c0_i32_781] : memref<512x128xf32, #tpu.memory_space<any>> -> memref<1x128xf32, #tpu.memory_space<any>>
    %c6_i32_782 = arith.constant 6 : i32
    %c0_i32_783 = arith.constant 0 : i32
    %777 = tpu.memref_slice %arg7[%c0_i32_778, %c6_i32_782, %c0_i32_783] : memref<2x8x128xf32, #tpu.memory_space<vmem>> -> memref<1x1x128xf32, #tpu.memory_space<vmem>>
    %778 = tpu.memref_squeeze %777 : memref<1x1x128xf32, #tpu.memory_space<vmem>> -> memref<1x128xf32, #tpu.memory_space<vmem>>
    %779 = tpu.memref_slice %arg8[%c0_i32_779, %c6_i32_780] : memref<2x8x!tpu.dma_semaphore, #tpu.memory_space<semaphore_mem>> -> memref<1x1x!tpu.dma_semaphore, #tpu.memory_space<semaphore_mem>>
    %780 = tpu.memref_squeeze %779 : memref<1x1x!tpu.dma_semaphore, #tpu.memory_space<semaphore_mem>> -> memref<!tpu.dma_semaphore, #tpu.memory_space<semaphore_mem>>
    tpu.enqueue_dma source(%776 : memref<1x128xf32, #tpu.memory_space<any>>) target(%778 : memref<1x128xf32, #tpu.memory_space<vmem>>) target_semaphore(%780 : memref<!tpu.dma_semaphore, #tpu.memory_space<semaphore_mem>>)
    %c7_i32_784 = arith.constant 7 : i32
    %781 = arith.addi %2, %c7_i32_784 : i32
    %782 = arith.index_cast %781 : i32 to index
    %c6_785 = arith.constant 6 : index
    %783 = memref.load %arg2[%782, %c6_785] : memref<16x8xi32, #tpu.memory_space<smem>>
    %784 = arith.addi %3, %783 : i32
    %c0_i32_786 = arith.constant 0 : i32
    %c0_i32_787 = arith.constant 0 : i32
    %c7_i32_788 = arith.constant 7 : i32
    %c0_i32_789 = arith.constant 0 : i32
    %785 = tpu.memref_slice %arg5[%784, %c0_i32_789] : memref<512x128xf32, #tpu.memory_space<any>> -> memref<1x128xf32, #tpu.memory_space<any>>
    %c7_i32_790 = arith.constant 7 : i32
    %c0_i32_791 = arith.constant 0 : i32
    %786 = tpu.memref_slice %arg7[%c0_i32_786, %c7_i32_790, %c0_i32_791] : memref<2x8x128xf32, #tpu.memory_space<vmem>> -> memref<1x1x128xf32, #tpu.memory_space<vmem>>
    %787 = tpu.memref_squeeze %786 : memref<1x1x128xf32, #tpu.memory_space<vmem>> -> memref<1x128xf32, #tpu.memory_space<vmem>>
    %788 = tpu.memref_slice %arg8[%c0_i32_787, %c7_i32_788] : memref<2x8x!tpu.dma_semaphore, #tpu.memory_space<semaphore_mem>> -> memref<1x1x!tpu.dma_semaphore, #tpu.memory_space<semaphore_mem>>
    %789 = tpu.memref_squeeze %788 : memref<1x1x!tpu.dma_semaphore, #tpu.memory_space<semaphore_mem>> -> memref<!tpu.dma_semaphore, #tpu.memory_space<semaphore_mem>>
    tpu.enqueue_dma source(%785 : memref<1x128xf32, #tpu.memory_space<any>>) target(%787 : memref<1x128xf32, #tpu.memory_space<vmem>>) target_semaphore(%789 : memref<!tpu.dma_semaphore, #tpu.memory_space<semaphore_mem>>)
    %790 = vector.extract_strided_slice %86 {offsets = [0, 5], sizes = [8, 1], strides = [1, 1]} : vector<8x8xf32> to vector<8x1xf32>
    %c1_792 = arith.constant 1 : index
    %c0_793 = arith.constant 0 : index
    %c0_794 = arith.constant 0 : index
    %791 = vector.load %arg7[%c1_792, %c0_793, %c0_794] : memref<2x8x128xf32, #tpu.memory_space<vmem>>, vector<1x8x128xf32>
    %792 = vector.shape_cast %791 : vector<1x8x128xf32> to vector<8x128xf32>
    %793 = vector.broadcast %790 : vector<8x1xf32> to vector<8x128xf32>
    %794 = arith.mulf %793, %792 : vector<8x128xf32>
    %795 = arith.addf %677, %794 : vector<8x128xf32>
    %c0_i32_795 = arith.constant 0 : i32
    %c0_i32_796 = arith.constant 0 : i32
    %c0_i32_797 = arith.constant 0 : i32
    %c0_i32_798 = arith.constant 0 : i32
    %c0_i32_799 = arith.constant 0 : i32
    %796 = tpu.memref_slice %arg5[%c0_i32_798, %c0_i32_799] : memref<512x128xf32, #tpu.memory_space<any>> -> memref<1x128xf32, #tpu.memory_space<any>>
    %c0_i32_800 = arith.constant 0 : i32
    %c0_i32_801 = arith.constant 0 : i32
    %797 = tpu.memref_slice %arg7[%c0_i32_795, %c0_i32_800, %c0_i32_801] : memref<2x8x128xf32, #tpu.memory_space<vmem>> -> memref<1x1x128xf32, #tpu.memory_space<vmem>>
    %798 = tpu.memref_squeeze %797 : memref<1x1x128xf32, #tpu.memory_space<vmem>> -> memref<1x128xf32, #tpu.memory_space<vmem>>
    %799 = tpu.memref_slice %arg8[%c0_i32_796, %c0_i32_797] : memref<2x8x!tpu.dma_semaphore, #tpu.memory_space<semaphore_mem>> -> memref<1x1x!tpu.dma_semaphore, #tpu.memory_space<semaphore_mem>>
    %800 = tpu.memref_squeeze %799 : memref<1x1x!tpu.dma_semaphore, #tpu.memory_space<semaphore_mem>> -> memref<!tpu.dma_semaphore, #tpu.memory_space<semaphore_mem>>
    tpu.wait_dma2 semaphore(%800 : memref<!tpu.dma_semaphore, #tpu.memory_space<semaphore_mem>>) src(%796 : memref<1x128xf32, #tpu.memory_space<any>>) dst(%798 : memref<1x128xf32, #tpu.memory_space<vmem>>)
    %c0_i32_802 = arith.constant 0 : i32
    %c0_i32_803 = arith.constant 0 : i32
    %c1_i32_804 = arith.constant 1 : i32
    %c0_i32_805 = arith.constant 0 : i32
    %c0_i32_806 = arith.constant 0 : i32
    %801 = tpu.memref_slice %arg5[%c0_i32_805, %c0_i32_806] : memref<512x128xf32, #tpu.memory_space<any>> -> memref<1x128xf32, #tpu.memory_space<any>>
    %c1_i32_807 = arith.constant 1 : i32
    %c0_i32_808 = arith.constant 0 : i32
    %802 = tpu.memref_slice %arg7[%c0_i32_802, %c1_i32_807, %c0_i32_808] : memref<2x8x128xf32, #tpu.memory_space<vmem>> -> memref<1x1x128xf32, #tpu.memory_space<vmem>>
    %803 = tpu.memref_squeeze %802 : memref<1x1x128xf32, #tpu.memory_space<vmem>> -> memref<1x128xf32, #tpu.memory_space<vmem>>
    %804 = tpu.memref_slice %arg8[%c0_i32_803, %c1_i32_804] : memref<2x8x!tpu.dma_semaphore, #tpu.memory_space<semaphore_mem>> -> memref<1x1x!tpu.dma_semaphore, #tpu.memory_space<semaphore_mem>>
    %805 = tpu.memref_squeeze %804 : memref<1x1x!tpu.dma_semaphore, #tpu.memory_space<semaphore_mem>> -> memref<!tpu.dma_semaphore, #tpu.memory_space<semaphore_mem>>
    tpu.wait_dma2 semaphore(%805 : memref<!tpu.dma_semaphore, #tpu.memory_space<semaphore_mem>>) src(%801 : memref<1x128xf32, #tpu.memory_space<any>>) dst(%803 : memref<1x128xf32, #tpu.memory_space<vmem>>)
    %c0_i32_809 = arith.constant 0 : i32
    %c0_i32_810 = arith.constant 0 : i32
    %c2_i32_811 = arith.constant 2 : i32
    %c0_i32_812 = arith.constant 0 : i32
    %c0_i32_813 = arith.constant 0 : i32
    %806 = tpu.memref_slice %arg5[%c0_i32_812, %c0_i32_813] : memref<512x128xf32, #tpu.memory_space<any>> -> memref<1x128xf32, #tpu.memory_space<any>>
    %c2_i32_814 = arith.constant 2 : i32
    %c0_i32_815 = arith.constant 0 : i32
    %807 = tpu.memref_slice %arg7[%c0_i32_809, %c2_i32_814, %c0_i32_815] : memref<2x8x128xf32, #tpu.memory_space<vmem>> -> memref<1x1x128xf32, #tpu.memory_space<vmem>>
    %808 = tpu.memref_squeeze %807 : memref<1x1x128xf32, #tpu.memory_space<vmem>> -> memref<1x128xf32, #tpu.memory_space<vmem>>
    %809 = tpu.memref_slice %arg8[%c0_i32_810, %c2_i32_811] : memref<2x8x!tpu.dma_semaphore, #tpu.memory_space<semaphore_mem>> -> memref<1x1x!tpu.dma_semaphore, #tpu.memory_space<semaphore_mem>>
    %810 = tpu.memref_squeeze %809 : memref<1x1x!tpu.dma_semaphore, #tpu.memory_space<semaphore_mem>> -> memref<!tpu.dma_semaphore, #tpu.memory_space<semaphore_mem>>
    tpu.wait_dma2 semaphore(%810 : memref<!tpu.dma_semaphore, #tpu.memory_space<semaphore_mem>>) src(%806 : memref<1x128xf32, #tpu.memory_space<any>>) dst(%808 : memref<1x128xf32, #tpu.memory_space<vmem>>)
    %c0_i32_816 = arith.constant 0 : i32
    %c0_i32_817 = arith.constant 0 : i32
    %c3_i32_818 = arith.constant 3 : i32
    %c0_i32_819 = arith.constant 0 : i32
    %c0_i32_820 = arith.constant 0 : i32
    %811 = tpu.memref_slice %arg5[%c0_i32_819, %c0_i32_820] : memref<512x128xf32, #tpu.memory_space<any>> -> memref<1x128xf32, #tpu.memory_space<any>>
    %c3_i32_821 = arith.constant 3 : i32
    %c0_i32_822 = arith.constant 0 : i32
    %812 = tpu.memref_slice %arg7[%c0_i32_816, %c3_i32_821, %c0_i32_822] : memref<2x8x128xf32, #tpu.memory_space<vmem>> -> memref<1x1x128xf32, #tpu.memory_space<vmem>>
    %813 = tpu.memref_squeeze %812 : memref<1x1x128xf32, #tpu.memory_space<vmem>> -> memref<1x128xf32, #tpu.memory_space<vmem>>
    %814 = tpu.memref_slice %arg8[%c0_i32_817, %c3_i32_818] : memref<2x8x!tpu.dma_semaphore, #tpu.memory_space<semaphore_mem>> -> memref<1x1x!tpu.dma_semaphore, #tpu.memory_space<semaphore_mem>>
    %815 = tpu.memref_squeeze %814 : memref<1x1x!tpu.dma_semaphore, #tpu.memory_space<semaphore_mem>> -> memref<!tpu.dma_semaphore, #tpu.memory_space<semaphore_mem>>
    tpu.wait_dma2 semaphore(%815 : memref<!tpu.dma_semaphore, #tpu.memory_space<semaphore_mem>>) src(%811 : memref<1x128xf32, #tpu.memory_space<any>>) dst(%813 : memref<1x128xf32, #tpu.memory_space<vmem>>)
    %c0_i32_823 = arith.constant 0 : i32
    %c0_i32_824 = arith.constant 0 : i32
    %c4_i32_825 = arith.constant 4 : i32
    %c0_i32_826 = arith.constant 0 : i32
    %c0_i32_827 = arith.constant 0 : i32
    %816 = tpu.memref_slice %arg5[%c0_i32_826, %c0_i32_827] : memref<512x128xf32, #tpu.memory_space<any>> -> memref<1x128xf32, #tpu.memory_space<any>>
    %c4_i32_828 = arith.constant 4 : i32
    %c0_i32_829 = arith.constant 0 : i32
    %817 = tpu.memref_slice %arg7[%c0_i32_823, %c4_i32_828, %c0_i32_829] : memref<2x8x128xf32, #tpu.memory_space<vmem>> -> memref<1x1x128xf32, #tpu.memory_space<vmem>>
    %818 = tpu.memref_squeeze %817 : memref<1x1x128xf32, #tpu.memory_space<vmem>> -> memref<1x128xf32, #tpu.memory_space<vmem>>
    %819 = tpu.memref_slice %arg8[%c0_i32_824, %c4_i32_825] : memref<2x8x!tpu.dma_semaphore, #tpu.memory_space<semaphore_mem>> -> memref<1x1x!tpu.dma_semaphore, #tpu.memory_space<semaphore_mem>>
    %820 = tpu.memref_squeeze %819 : memref<1x1x!tpu.dma_semaphore, #tpu.memory_space<semaphore_mem>> -> memref<!tpu.dma_semaphore, #tpu.memory_space<semaphore_mem>>
    tpu.wait_dma2 semaphore(%820 : memref<!tpu.dma_semaphore, #tpu.memory_space<semaphore_mem>>) src(%816 : memref<1x128xf32, #tpu.memory_space<any>>) dst(%818 : memref<1x128xf32, #tpu.memory_space<vmem>>)
    %c0_i32_830 = arith.constant 0 : i32
    %c0_i32_831 = arith.constant 0 : i32
    %c5_i32_832 = arith.constant 5 : i32
    %c0_i32_833 = arith.constant 0 : i32
    %c0_i32_834 = arith.constant 0 : i32
    %821 = tpu.memref_slice %arg5[%c0_i32_833, %c0_i32_834] : memref<512x128xf32, #tpu.memory_space<any>> -> memref<1x128xf32, #tpu.memory_space<any>>
    %c5_i32_835 = arith.constant 5 : i32
    %c0_i32_836 = arith.constant 0 : i32
    %822 = tpu.memref_slice %arg7[%c0_i32_830, %c5_i32_835, %c0_i32_836] : memref<2x8x128xf32, #tpu.memory_space<vmem>> -> memref<1x1x128xf32, #tpu.memory_space<vmem>>
    %823 = tpu.memref_squeeze %822 : memref<1x1x128xf32, #tpu.memory_space<vmem>> -> memref<1x128xf32, #tpu.memory_space<vmem>>
    %824 = tpu.memref_slice %arg8[%c0_i32_831, %c5_i32_832] : memref<2x8x!tpu.dma_semaphore, #tpu.memory_space<semaphore_mem>> -> memref<1x1x!tpu.dma_semaphore, #tpu.memory_space<semaphore_mem>>
    %825 = tpu.memref_squeeze %824 : memref<1x1x!tpu.dma_semaphore, #tpu.memory_space<semaphore_mem>> -> memref<!tpu.dma_semaphore, #tpu.memory_space<semaphore_mem>>
    tpu.wait_dma2 semaphore(%825 : memref<!tpu.dma_semaphore, #tpu.memory_space<semaphore_mem>>) src(%821 : memref<1x128xf32, #tpu.memory_space<any>>) dst(%823 : memref<1x128xf32, #tpu.memory_space<vmem>>)
    %c0_i32_837 = arith.constant 0 : i32
    %c0_i32_838 = arith.constant 0 : i32
    %c6_i32_839 = arith.constant 6 : i32
    %c0_i32_840 = arith.constant 0 : i32
    %c0_i32_841 = arith.constant 0 : i32
    %826 = tpu.memref_slice %arg5[%c0_i32_840, %c0_i32_841] : memref<512x128xf32, #tpu.memory_space<any>> -> memref<1x128xf32, #tpu.memory_space<any>>
    %c6_i32_842 = arith.constant 6 : i32
    %c0_i32_843 = arith.constant 0 : i32
    %827 = tpu.memref_slice %arg7[%c0_i32_837, %c6_i32_842, %c0_i32_843] : memref<2x8x128xf32, #tpu.memory_space<vmem>> -> memref<1x1x128xf32, #tpu.memory_space<vmem>>
    %828 = tpu.memref_squeeze %827 : memref<1x1x128xf32, #tpu.memory_space<vmem>> -> memref<1x128xf32, #tpu.memory_space<vmem>>
    %829 = tpu.memref_slice %arg8[%c0_i32_838, %c6_i32_839] : memref<2x8x!tpu.dma_semaphore, #tpu.memory_space<semaphore_mem>> -> memref<1x1x!tpu.dma_semaphore, #tpu.memory_space<semaphore_mem>>
    %830 = tpu.memref_squeeze %829 : memref<1x1x!tpu.dma_semaphore, #tpu.memory_space<semaphore_mem>> -> memref<!tpu.dma_semaphore, #tpu.memory_space<semaphore_mem>>
    tpu.wait_dma2 semaphore(%830 : memref<!tpu.dma_semaphore, #tpu.memory_space<semaphore_mem>>) src(%826 : memref<1x128xf32, #tpu.memory_space<any>>) dst(%828 : memref<1x128xf32, #tpu.memory_space<vmem>>)
    %c0_i32_844 = arith.constant 0 : i32
    %c0_i32_845 = arith.constant 0 : i32
    %c7_i32_846 = arith.constant 7 : i32
    %c0_i32_847 = arith.constant 0 : i32
    %c0_i32_848 = arith.constant 0 : i32
    %831 = tpu.memref_slice %arg5[%c0_i32_847, %c0_i32_848] : memref<512x128xf32, #tpu.memory_space<any>> -> memref<1x128xf32, #tpu.memory_space<any>>
    %c7_i32_849 = arith.constant 7 : i32
    %c0_i32_850 = arith.constant 0 : i32
    %832 = tpu.memref_slice %arg7[%c0_i32_844, %c7_i32_849, %c0_i32_850] : memref<2x8x128xf32, #tpu.memory_space<vmem>> -> memref<1x1x128xf32, #tpu.memory_space<vmem>>
    %833 = tpu.memref_squeeze %832 : memref<1x1x128xf32, #tpu.memory_space<vmem>> -> memref<1x128xf32, #tpu.memory_space<vmem>>
    %834 = tpu.memref_slice %arg8[%c0_i32_845, %c7_i32_846] : memref<2x8x!tpu.dma_semaphore, #tpu.memory_space<semaphore_mem>> -> memref<1x1x!tpu.dma_semaphore, #tpu.memory_space<semaphore_mem>>
    %835 = tpu.memref_squeeze %834 : memref<1x1x!tpu.dma_semaphore, #tpu.memory_space<semaphore_mem>> -> memref<!tpu.dma_semaphore, #tpu.memory_space<semaphore_mem>>
    tpu.wait_dma2 semaphore(%835 : memref<!tpu.dma_semaphore, #tpu.memory_space<semaphore_mem>>) src(%831 : memref<1x128xf32, #tpu.memory_space<any>>) dst(%833 : memref<1x128xf32, #tpu.memory_space<vmem>>)
    %c0_i32_851 = arith.constant 0 : i32
    %836 = arith.addi %2, %c0_i32_851 : i32
    %837 = arith.index_cast %836 : i32 to index
    %c7 = arith.constant 7 : index
    %838 = memref.load %arg2[%837, %c7] : memref<16x8xi32, #tpu.memory_space<smem>>
    %839 = arith.addi %3, %838 : i32
    %c1_i32_852 = arith.constant 1 : i32
    %c1_i32_853 = arith.constant 1 : i32
    %c0_i32_854 = arith.constant 0 : i32
    %c0_i32_855 = arith.constant 0 : i32
    %840 = tpu.memref_slice %arg5[%839, %c0_i32_855] : memref<512x128xf32, #tpu.memory_space<any>> -> memref<1x128xf32, #tpu.memory_space<any>>
    %c0_i32_856 = arith.constant 0 : i32
    %c0_i32_857 = arith.constant 0 : i32
    %841 = tpu.memref_slice %arg7[%c1_i32_852, %c0_i32_856, %c0_i32_857] : memref<2x8x128xf32, #tpu.memory_space<vmem>> -> memref<1x1x128xf32, #tpu.memory_space<vmem>>
    %842 = tpu.memref_squeeze %841 : memref<1x1x128xf32, #tpu.memory_space<vmem>> -> memref<1x128xf32, #tpu.memory_space<vmem>>
    %843 = tpu.memref_slice %arg8[%c1_i32_853, %c0_i32_854] : memref<2x8x!tpu.dma_semaphore, #tpu.memory_space<semaphore_mem>> -> memref<1x1x!tpu.dma_semaphore, #tpu.memory_space<semaphore_mem>>
    %844 = tpu.memref_squeeze %843 : memref<1x1x!tpu.dma_semaphore, #tpu.memory_space<semaphore_mem>> -> memref<!tpu.dma_semaphore, #tpu.memory_space<semaphore_mem>>
    tpu.enqueue_dma source(%840 : memref<1x128xf32, #tpu.memory_space<any>>) target(%842 : memref<1x128xf32, #tpu.memory_space<vmem>>) target_semaphore(%844 : memref<!tpu.dma_semaphore, #tpu.memory_space<semaphore_mem>>)
    %c1_i32_858 = arith.constant 1 : i32
    %845 = arith.addi %2, %c1_i32_858 : i32
    %846 = arith.index_cast %845 : i32 to index
    %c7_859 = arith.constant 7 : index
    %847 = memref.load %arg2[%846, %c7_859] : memref<16x8xi32, #tpu.memory_space<smem>>
    %848 = arith.addi %3, %847 : i32
    %c1_i32_860 = arith.constant 1 : i32
    %c1_i32_861 = arith.constant 1 : i32
    %c1_i32_862 = arith.constant 1 : i32
    %c0_i32_863 = arith.constant 0 : i32
    %849 = tpu.memref_slice %arg5[%848, %c0_i32_863] : memref<512x128xf32, #tpu.memory_space<any>> -> memref<1x128xf32, #tpu.memory_space<any>>
    %c1_i32_864 = arith.constant 1 : i32
    %c0_i32_865 = arith.constant 0 : i32
    %850 = tpu.memref_slice %arg7[%c1_i32_860, %c1_i32_864, %c0_i32_865] : memref<2x8x128xf32, #tpu.memory_space<vmem>> -> memref<1x1x128xf32, #tpu.memory_space<vmem>>
    %851 = tpu.memref_squeeze %850 : memref<1x1x128xf32, #tpu.memory_space<vmem>> -> memref<1x128xf32, #tpu.memory_space<vmem>>
    %852 = tpu.memref_slice %arg8[%c1_i32_861, %c1_i32_862] : memref<2x8x!tpu.dma_semaphore, #tpu.memory_space<semaphore_mem>> -> memref<1x1x!tpu.dma_semaphore, #tpu.memory_space<semaphore_mem>>
    %853 = tpu.memref_squeeze %852 : memref<1x1x!tpu.dma_semaphore, #tpu.memory_space<semaphore_mem>> -> memref<!tpu.dma_semaphore, #tpu.memory_space<semaphore_mem>>
    tpu.enqueue_dma source(%849 : memref<1x128xf32, #tpu.memory_space<any>>) target(%851 : memref<1x128xf32, #tpu.memory_space<vmem>>) target_semaphore(%853 : memref<!tpu.dma_semaphore, #tpu.memory_space<semaphore_mem>>)
    %c2_i32_866 = arith.constant 2 : i32
    %854 = arith.addi %2, %c2_i32_866 : i32
    %855 = arith.index_cast %854 : i32 to index
    %c7_867 = arith.constant 7 : index
    %856 = memref.load %arg2[%855, %c7_867] : memref<16x8xi32, #tpu.memory_space<smem>>
    %857 = arith.addi %3, %856 : i32
    %c1_i32_868 = arith.constant 1 : i32
    %c1_i32_869 = arith.constant 1 : i32
    %c2_i32_870 = arith.constant 2 : i32
    %c0_i32_871 = arith.constant 0 : i32
    %858 = tpu.memref_slice %arg5[%857, %c0_i32_871] : memref<512x128xf32, #tpu.memory_space<any>> -> memref<1x128xf32, #tpu.memory_space<any>>
    %c2_i32_872 = arith.constant 2 : i32
    %c0_i32_873 = arith.constant 0 : i32
    %859 = tpu.memref_slice %arg7[%c1_i32_868, %c2_i32_872, %c0_i32_873] : memref<2x8x128xf32, #tpu.memory_space<vmem>> -> memref<1x1x128xf32, #tpu.memory_space<vmem>>
    %860 = tpu.memref_squeeze %859 : memref<1x1x128xf32, #tpu.memory_space<vmem>> -> memref<1x128xf32, #tpu.memory_space<vmem>>
    %861 = tpu.memref_slice %arg8[%c1_i32_869, %c2_i32_870] : memref<2x8x!tpu.dma_semaphore, #tpu.memory_space<semaphore_mem>> -> memref<1x1x!tpu.dma_semaphore, #tpu.memory_space<semaphore_mem>>
    %862 = tpu.memref_squeeze %861 : memref<1x1x!tpu.dma_semaphore, #tpu.memory_space<semaphore_mem>> -> memref<!tpu.dma_semaphore, #tpu.memory_space<semaphore_mem>>
    tpu.enqueue_dma source(%858 : memref<1x128xf32, #tpu.memory_space<any>>) target(%860 : memref<1x128xf32, #tpu.memory_space<vmem>>) target_semaphore(%862 : memref<!tpu.dma_semaphore, #tpu.memory_space<semaphore_mem>>)
    %c3_i32_874 = arith.constant 3 : i32
    %863 = arith.addi %2, %c3_i32_874 : i32
    %864 = arith.index_cast %863 : i32 to index
    %c7_875 = arith.constant 7 : index
    %865 = memref.load %arg2[%864, %c7_875] : memref<16x8xi32, #tpu.memory_space<smem>>
    %866 = arith.addi %3, %865 : i32
    %c1_i32_876 = arith.constant 1 : i32
    %c1_i32_877 = arith.constant 1 : i32
    %c3_i32_878 = arith.constant 3 : i32
    %c0_i32_879 = arith.constant 0 : i32
    %867 = tpu.memref_slice %arg5[%866, %c0_i32_879] : memref<512x128xf32, #tpu.memory_space<any>> -> memref<1x128xf32, #tpu.memory_space<any>>
    %c3_i32_880 = arith.constant 3 : i32
    %c0_i32_881 = arith.constant 0 : i32
    %868 = tpu.memref_slice %arg7[%c1_i32_876, %c3_i32_880, %c0_i32_881] : memref<2x8x128xf32, #tpu.memory_space<vmem>> -> memref<1x1x128xf32, #tpu.memory_space<vmem>>
    %869 = tpu.memref_squeeze %868 : memref<1x1x128xf32, #tpu.memory_space<vmem>> -> memref<1x128xf32, #tpu.memory_space<vmem>>
    %870 = tpu.memref_slice %arg8[%c1_i32_877, %c3_i32_878] : memref<2x8x!tpu.dma_semaphore, #tpu.memory_space<semaphore_mem>> -> memref<1x1x!tpu.dma_semaphore, #tpu.memory_space<semaphore_mem>>
    %871 = tpu.memref_squeeze %870 : memref<1x1x!tpu.dma_semaphore, #tpu.memory_space<semaphore_mem>> -> memref<!tpu.dma_semaphore, #tpu.memory_space<semaphore_mem>>
    tpu.enqueue_dma source(%867 : memref<1x128xf32, #tpu.memory_space<any>>) target(%869 : memref<1x128xf32, #tpu.memory_space<vmem>>) target_semaphore(%871 : memref<!tpu.dma_semaphore, #tpu.memory_space<semaphore_mem>>)
    %c4_i32_882 = arith.constant 4 : i32
    %872 = arith.addi %2, %c4_i32_882 : i32
    %873 = arith.index_cast %872 : i32 to index
    %c7_883 = arith.constant 7 : index
    %874 = memref.load %arg2[%873, %c7_883] : memref<16x8xi32, #tpu.memory_space<smem>>
    %875 = arith.addi %3, %874 : i32
    %c1_i32_884 = arith.constant 1 : i32
    %c1_i32_885 = arith.constant 1 : i32
    %c4_i32_886 = arith.constant 4 : i32
    %c0_i32_887 = arith.constant 0 : i32
    %876 = tpu.memref_slice %arg5[%875, %c0_i32_887] : memref<512x128xf32, #tpu.memory_space<any>> -> memref<1x128xf32, #tpu.memory_space<any>>
    %c4_i32_888 = arith.constant 4 : i32
    %c0_i32_889 = arith.constant 0 : i32
    %877 = tpu.memref_slice %arg7[%c1_i32_884, %c4_i32_888, %c0_i32_889] : memref<2x8x128xf32, #tpu.memory_space<vmem>> -> memref<1x1x128xf32, #tpu.memory_space<vmem>>
    %878 = tpu.memref_squeeze %877 : memref<1x1x128xf32, #tpu.memory_space<vmem>> -> memref<1x128xf32, #tpu.memory_space<vmem>>
    %879 = tpu.memref_slice %arg8[%c1_i32_885, %c4_i32_886] : memref<2x8x!tpu.dma_semaphore, #tpu.memory_space<semaphore_mem>> -> memref<1x1x!tpu.dma_semaphore, #tpu.memory_space<semaphore_mem>>
    %880 = tpu.memref_squeeze %879 : memref<1x1x!tpu.dma_semaphore, #tpu.memory_space<semaphore_mem>> -> memref<!tpu.dma_semaphore, #tpu.memory_space<semaphore_mem>>
    tpu.enqueue_dma source(%876 : memref<1x128xf32, #tpu.memory_space<any>>) target(%878 : memref<1x128xf32, #tpu.memory_space<vmem>>) target_semaphore(%880 : memref<!tpu.dma_semaphore, #tpu.memory_space<semaphore_mem>>)
    %c5_i32_890 = arith.constant 5 : i32
    %881 = arith.addi %2, %c5_i32_890 : i32
    %882 = arith.index_cast %881 : i32 to index
    %c7_891 = arith.constant 7 : index
    %883 = memref.load %arg2[%882, %c7_891] : memref<16x8xi32, #tpu.memory_space<smem>>
    %884 = arith.addi %3, %883 : i32
    %c1_i32_892 = arith.constant 1 : i32
    %c1_i32_893 = arith.constant 1 : i32
    %c5_i32_894 = arith.constant 5 : i32
    %c0_i32_895 = arith.constant 0 : i32
    %885 = tpu.memref_slice %arg5[%884, %c0_i32_895] : memref<512x128xf32, #tpu.memory_space<any>> -> memref<1x128xf32, #tpu.memory_space<any>>
    %c5_i32_896 = arith.constant 5 : i32
    %c0_i32_897 = arith.constant 0 : i32
    %886 = tpu.memref_slice %arg7[%c1_i32_892, %c5_i32_896, %c0_i32_897] : memref<2x8x128xf32, #tpu.memory_space<vmem>> -> memref<1x1x128xf32, #tpu.memory_space<vmem>>
    %887 = tpu.memref_squeeze %886 : memref<1x1x128xf32, #tpu.memory_space<vmem>> -> memref<1x128xf32, #tpu.memory_space<vmem>>
    %888 = tpu.memref_slice %arg8[%c1_i32_893, %c5_i32_894] : memref<2x8x!tpu.dma_semaphore, #tpu.memory_space<semaphore_mem>> -> memref<1x1x!tpu.dma_semaphore, #tpu.memory_space<semaphore_mem>>
    %889 = tpu.memref_squeeze %888 : memref<1x1x!tpu.dma_semaphore, #tpu.memory_space<semaphore_mem>> -> memref<!tpu.dma_semaphore, #tpu.memory_space<semaphore_mem>>
    tpu.enqueue_dma source(%885 : memref<1x128xf32, #tpu.memory_space<any>>) target(%887 : memref<1x128xf32, #tpu.memory_space<vmem>>) target_semaphore(%889 : memref<!tpu.dma_semaphore, #tpu.memory_space<semaphore_mem>>)
    %c6_i32_898 = arith.constant 6 : i32
    %890 = arith.addi %2, %c6_i32_898 : i32
    %891 = arith.index_cast %890 : i32 to index
    %c7_899 = arith.constant 7 : index
    %892 = memref.load %arg2[%891, %c7_899] : memref<16x8xi32, #tpu.memory_space<smem>>
    %893 = arith.addi %3, %892 : i32
    %c1_i32_900 = arith.constant 1 : i32
    %c1_i32_901 = arith.constant 1 : i32
    %c6_i32_902 = arith.constant 6 : i32
    %c0_i32_903 = arith.constant 0 : i32
    %894 = tpu.memref_slice %arg5[%893, %c0_i32_903] : memref<512x128xf32, #tpu.memory_space<any>> -> memref<1x128xf32, #tpu.memory_space<any>>
    %c6_i32_904 = arith.constant 6 : i32
    %c0_i32_905 = arith.constant 0 : i32
    %895 = tpu.memref_slice %arg7[%c1_i32_900, %c6_i32_904, %c0_i32_905] : memref<2x8x128xf32, #tpu.memory_space<vmem>> -> memref<1x1x128xf32, #tpu.memory_space<vmem>>
    %896 = tpu.memref_squeeze %895 : memref<1x1x128xf32, #tpu.memory_space<vmem>> -> memref<1x128xf32, #tpu.memory_space<vmem>>
    %897 = tpu.memref_slice %arg8[%c1_i32_901, %c6_i32_902] : memref<2x8x!tpu.dma_semaphore, #tpu.memory_space<semaphore_mem>> -> memref<1x1x!tpu.dma_semaphore, #tpu.memory_space<semaphore_mem>>
    %898 = tpu.memref_squeeze %897 : memref<1x1x!tpu.dma_semaphore, #tpu.memory_space<semaphore_mem>> -> memref<!tpu.dma_semaphore, #tpu.memory_space<semaphore_mem>>
    tpu.enqueue_dma source(%894 : memref<1x128xf32, #tpu.memory_space<any>>) target(%896 : memref<1x128xf32, #tpu.memory_space<vmem>>) target_semaphore(%898 : memref<!tpu.dma_semaphore, #tpu.memory_space<semaphore_mem>>)
    %c7_i32_906 = arith.constant 7 : i32
    %899 = arith.addi %2, %c7_i32_906 : i32
    %900 = arith.index_cast %899 : i32 to index
    %c7_907 = arith.constant 7 : index
    %901 = memref.load %arg2[%900, %c7_907] : memref<16x8xi32, #tpu.memory_space<smem>>
    %902 = arith.addi %3, %901 : i32
    %c1_i32_908 = arith.constant 1 : i32
    %c1_i32_909 = arith.constant 1 : i32
    %c7_i32_910 = arith.constant 7 : i32
    %c0_i32_911 = arith.constant 0 : i32
    %903 = tpu.memref_slice %arg5[%902, %c0_i32_911] : memref<512x128xf32, #tpu.memory_space<any>> -> memref<1x128xf32, #tpu.memory_space<any>>
    %c7_i32_912 = arith.constant 7 : i32
    %c0_i32_913 = arith.constant 0 : i32
    %904 = tpu.memref_slice %arg7[%c1_i32_908, %c7_i32_912, %c0_i32_913] : memref<2x8x128xf32, #tpu.memory_space<vmem>> -> memref<1x1x128xf32, #tpu.memory_space<vmem>>
    %905 = tpu.memref_squeeze %904 : memref<1x1x128xf32, #tpu.memory_space<vmem>> -> memref<1x128xf32, #tpu.memory_space<vmem>>
    %906 = tpu.memref_slice %arg8[%c1_i32_909, %c7_i32_910] : memref<2x8x!tpu.dma_semaphore, #tpu.memory_space<semaphore_mem>> -> memref<1x1x!tpu.dma_semaphore, #tpu.memory_space<semaphore_mem>>
    %907 = tpu.memref_squeeze %906 : memref<1x1x!tpu.dma_semaphore, #tpu.memory_space<semaphore_mem>> -> memref<!tpu.dma_semaphore, #tpu.memory_space<semaphore_mem>>
    tpu.enqueue_dma source(%903 : memref<1x128xf32, #tpu.memory_space<any>>) target(%905 : memref<1x128xf32, #tpu.memory_space<vmem>>) target_semaphore(%907 : memref<!tpu.dma_semaphore, #tpu.memory_space<semaphore_mem>>)
    %908 = vector.extract_strided_slice %86 {offsets = [0, 6], sizes = [8, 1], strides = [1, 1]} : vector<8x8xf32> to vector<8x1xf32>
    %c0_914 = arith.constant 0 : index
    %c0_915 = arith.constant 0 : index
    %c0_916 = arith.constant 0 : index
    %909 = vector.load %arg7[%c0_914, %c0_915, %c0_916] : memref<2x8x128xf32, #tpu.memory_space<vmem>>, vector<1x8x128xf32>
    %910 = vector.shape_cast %909 : vector<1x8x128xf32> to vector<8x128xf32>
    %911 = vector.broadcast %908 : vector<8x1xf32> to vector<8x128xf32>
    %912 = arith.mulf %911, %910 : vector<8x128xf32>
    %913 = arith.addf %795, %912 : vector<8x128xf32>
    %c1_i32_917 = arith.constant 1 : i32
    %c1_i32_918 = arith.constant 1 : i32
    %c0_i32_919 = arith.constant 0 : i32
    %c0_i32_920 = arith.constant 0 : i32
    %c0_i32_921 = arith.constant 0 : i32
    %914 = tpu.memref_slice %arg5[%c0_i32_920, %c0_i32_921] : memref<512x128xf32, #tpu.memory_space<any>> -> memref<1x128xf32, #tpu.memory_space<any>>
    %c0_i32_922 = arith.constant 0 : i32
    %c0_i32_923 = arith.constant 0 : i32
    %915 = tpu.memref_slice %arg7[%c1_i32_917, %c0_i32_922, %c0_i32_923] : memref<2x8x128xf32, #tpu.memory_space<vmem>> -> memref<1x1x128xf32, #tpu.memory_space<vmem>>
    %916 = tpu.memref_squeeze %915 : memref<1x1x128xf32, #tpu.memory_space<vmem>> -> memref<1x128xf32, #tpu.memory_space<vmem>>
    %917 = tpu.memref_slice %arg8[%c1_i32_918, %c0_i32_919] : memref<2x8x!tpu.dma_semaphore, #tpu.memory_space<semaphore_mem>> -> memref<1x1x!tpu.dma_semaphore, #tpu.memory_space<semaphore_mem>>
    %918 = tpu.memref_squeeze %917 : memref<1x1x!tpu.dma_semaphore, #tpu.memory_space<semaphore_mem>> -> memref<!tpu.dma_semaphore, #tpu.memory_space<semaphore_mem>>
    tpu.wait_dma2 semaphore(%918 : memref<!tpu.dma_semaphore, #tpu.memory_space<semaphore_mem>>) src(%914 : memref<1x128xf32, #tpu.memory_space<any>>) dst(%916 : memref<1x128xf32, #tpu.memory_space<vmem>>)
    %c1_i32_924 = arith.constant 1 : i32
    %c1_i32_925 = arith.constant 1 : i32
    %c1_i32_926 = arith.constant 1 : i32
    %c0_i32_927 = arith.constant 0 : i32
    %c0_i32_928 = arith.constant 0 : i32
    %919 = tpu.memref_slice %arg5[%c0_i32_927, %c0_i32_928] : memref<512x128xf32, #tpu.memory_space<any>> -> memref<1x128xf32, #tpu.memory_space<any>>
    %c1_i32_929 = arith.constant 1 : i32
    %c0_i32_930 = arith.constant 0 : i32
    %920 = tpu.memref_slice %arg7[%c1_i32_924, %c1_i32_929, %c0_i32_930] : memref<2x8x128xf32, #tpu.memory_space<vmem>> -> memref<1x1x128xf32, #tpu.memory_space<vmem>>
    %921 = tpu.memref_squeeze %920 : memref<1x1x128xf32, #tpu.memory_space<vmem>> -> memref<1x128xf32, #tpu.memory_space<vmem>>
    %922 = tpu.memref_slice %arg8[%c1_i32_925, %c1_i32_926] : memref<2x8x!tpu.dma_semaphore, #tpu.memory_space<semaphore_mem>> -> memref<1x1x!tpu.dma_semaphore, #tpu.memory_space<semaphore_mem>>
    %923 = tpu.memref_squeeze %922 : memref<1x1x!tpu.dma_semaphore, #tpu.memory_space<semaphore_mem>> -> memref<!tpu.dma_semaphore, #tpu.memory_space<semaphore_mem>>
    tpu.wait_dma2 semaphore(%923 : memref<!tpu.dma_semaphore, #tpu.memory_space<semaphore_mem>>) src(%919 : memref<1x128xf32, #tpu.memory_space<any>>) dst(%921 : memref<1x128xf32, #tpu.memory_space<vmem>>)
    %c1_i32_931 = arith.constant 1 : i32
    %c1_i32_932 = arith.constant 1 : i32
    %c2_i32_933 = arith.constant 2 : i32
    %c0_i32_934 = arith.constant 0 : i32
    %c0_i32_935 = arith.constant 0 : i32
    %924 = tpu.memref_slice %arg5[%c0_i32_934, %c0_i32_935] : memref<512x128xf32, #tpu.memory_space<any>> -> memref<1x128xf32, #tpu.memory_space<any>>
    %c2_i32_936 = arith.constant 2 : i32
    %c0_i32_937 = arith.constant 0 : i32
    %925 = tpu.memref_slice %arg7[%c1_i32_931, %c2_i32_936, %c0_i32_937] : memref<2x8x128xf32, #tpu.memory_space<vmem>> -> memref<1x1x128xf32, #tpu.memory_space<vmem>>
    %926 = tpu.memref_squeeze %925 : memref<1x1x128xf32, #tpu.memory_space<vmem>> -> memref<1x128xf32, #tpu.memory_space<vmem>>
    %927 = tpu.memref_slice %arg8[%c1_i32_932, %c2_i32_933] : memref<2x8x!tpu.dma_semaphore, #tpu.memory_space<semaphore_mem>> -> memref<1x1x!tpu.dma_semaphore, #tpu.memory_space<semaphore_mem>>
    %928 = tpu.memref_squeeze %927 : memref<1x1x!tpu.dma_semaphore, #tpu.memory_space<semaphore_mem>> -> memref<!tpu.dma_semaphore, #tpu.memory_space<semaphore_mem>>
    tpu.wait_dma2 semaphore(%928 : memref<!tpu.dma_semaphore, #tpu.memory_space<semaphore_mem>>) src(%924 : memref<1x128xf32, #tpu.memory_space<any>>) dst(%926 : memref<1x128xf32, #tpu.memory_space<vmem>>)
    %c1_i32_938 = arith.constant 1 : i32
    %c1_i32_939 = arith.constant 1 : i32
    %c3_i32_940 = arith.constant 3 : i32
    %c0_i32_941 = arith.constant 0 : i32
    %c0_i32_942 = arith.constant 0 : i32
    %929 = tpu.memref_slice %arg5[%c0_i32_941, %c0_i32_942] : memref<512x128xf32, #tpu.memory_space<any>> -> memref<1x128xf32, #tpu.memory_space<any>>
    %c3_i32_943 = arith.constant 3 : i32
    %c0_i32_944 = arith.constant 0 : i32
    %930 = tpu.memref_slice %arg7[%c1_i32_938, %c3_i32_943, %c0_i32_944] : memref<2x8x128xf32, #tpu.memory_space<vmem>> -> memref<1x1x128xf32, #tpu.memory_space<vmem>>
    %931 = tpu.memref_squeeze %930 : memref<1x1x128xf32, #tpu.memory_space<vmem>> -> memref<1x128xf32, #tpu.memory_space<vmem>>
    %932 = tpu.memref_slice %arg8[%c1_i32_939, %c3_i32_940] : memref<2x8x!tpu.dma_semaphore, #tpu.memory_space<semaphore_mem>> -> memref<1x1x!tpu.dma_semaphore, #tpu.memory_space<semaphore_mem>>
    %933 = tpu.memref_squeeze %932 : memref<1x1x!tpu.dma_semaphore, #tpu.memory_space<semaphore_mem>> -> memref<!tpu.dma_semaphore, #tpu.memory_space<semaphore_mem>>
    tpu.wait_dma2 semaphore(%933 : memref<!tpu.dma_semaphore, #tpu.memory_space<semaphore_mem>>) src(%929 : memref<1x128xf32, #tpu.memory_space<any>>) dst(%931 : memref<1x128xf32, #tpu.memory_space<vmem>>)
    %c1_i32_945 = arith.constant 1 : i32
    %c1_i32_946 = arith.constant 1 : i32
    %c4_i32_947 = arith.constant 4 : i32
    %c0_i32_948 = arith.constant 0 : i32
    %c0_i32_949 = arith.constant 0 : i32
    %934 = tpu.memref_slice %arg5[%c0_i32_948, %c0_i32_949] : memref<512x128xf32, #tpu.memory_space<any>> -> memref<1x128xf32, #tpu.memory_space<any>>
    %c4_i32_950 = arith.constant 4 : i32
    %c0_i32_951 = arith.constant 0 : i32
    %935 = tpu.memref_slice %arg7[%c1_i32_945, %c4_i32_950, %c0_i32_951] : memref<2x8x128xf32, #tpu.memory_space<vmem>> -> memref<1x1x128xf32, #tpu.memory_space<vmem>>
    %936 = tpu.memref_squeeze %935 : memref<1x1x128xf32, #tpu.memory_space<vmem>> -> memref<1x128xf32, #tpu.memory_space<vmem>>
    %937 = tpu.memref_slice %arg8[%c1_i32_946, %c4_i32_947] : memref<2x8x!tpu.dma_semaphore, #tpu.memory_space<semaphore_mem>> -> memref<1x1x!tpu.dma_semaphore, #tpu.memory_space<semaphore_mem>>
    %938 = tpu.memref_squeeze %937 : memref<1x1x!tpu.dma_semaphore, #tpu.memory_space<semaphore_mem>> -> memref<!tpu.dma_semaphore, #tpu.memory_space<semaphore_mem>>
    tpu.wait_dma2 semaphore(%938 : memref<!tpu.dma_semaphore, #tpu.memory_space<semaphore_mem>>) src(%934 : memref<1x128xf32, #tpu.memory_space<any>>) dst(%936 : memref<1x128xf32, #tpu.memory_space<vmem>>)
    %c1_i32_952 = arith.constant 1 : i32
    %c1_i32_953 = arith.constant 1 : i32
    %c5_i32_954 = arith.constant 5 : i32
    %c0_i32_955 = arith.constant 0 : i32
    %c0_i32_956 = arith.constant 0 : i32
    %939 = tpu.memref_slice %arg5[%c0_i32_955, %c0_i32_956] : memref<512x128xf32, #tpu.memory_space<any>> -> memref<1x128xf32, #tpu.memory_space<any>>
    %c5_i32_957 = arith.constant 5 : i32
    %c0_i32_958 = arith.constant 0 : i32
    %940 = tpu.memref_slice %arg7[%c1_i32_952, %c5_i32_957, %c0_i32_958] : memref<2x8x128xf32, #tpu.memory_space<vmem>> -> memref<1x1x128xf32, #tpu.memory_space<vmem>>
    %941 = tpu.memref_squeeze %940 : memref<1x1x128xf32, #tpu.memory_space<vmem>> -> memref<1x128xf32, #tpu.memory_space<vmem>>
    %942 = tpu.memref_slice %arg8[%c1_i32_953, %c5_i32_954] : memref<2x8x!tpu.dma_semaphore, #tpu.memory_space<semaphore_mem>> -> memref<1x1x!tpu.dma_semaphore, #tpu.memory_space<semaphore_mem>>
    %943 = tpu.memref_squeeze %942 : memref<1x1x!tpu.dma_semaphore, #tpu.memory_space<semaphore_mem>> -> memref<!tpu.dma_semaphore, #tpu.memory_space<semaphore_mem>>
    tpu.wait_dma2 semaphore(%943 : memref<!tpu.dma_semaphore, #tpu.memory_space<semaphore_mem>>) src(%939 : memref<1x128xf32, #tpu.memory_space<any>>) dst(%941 : memref<1x128xf32, #tpu.memory_space<vmem>>)
    %c1_i32_959 = arith.constant 1 : i32
    %c1_i32_960 = arith.constant 1 : i32
    %c6_i32_961 = arith.constant 6 : i32
    %c0_i32_962 = arith.constant 0 : i32
    %c0_i32_963 = arith.constant 0 : i32
    %944 = tpu.memref_slice %arg5[%c0_i32_962, %c0_i32_963] : memref<512x128xf32, #tpu.memory_space<any>> -> memref<1x128xf32, #tpu.memory_space<any>>
    %c6_i32_964 = arith.constant 6 : i32
    %c0_i32_965 = arith.constant 0 : i32
    %945 = tpu.memref_slice %arg7[%c1_i32_959, %c6_i32_964, %c0_i32_965] : memref<2x8x128xf32, #tpu.memory_space<vmem>> -> memref<1x1x128xf32, #tpu.memory_space<vmem>>
    %946 = tpu.memref_squeeze %945 : memref<1x1x128xf32, #tpu.memory_space<vmem>> -> memref<1x128xf32, #tpu.memory_space<vmem>>
    %947 = tpu.memref_slice %arg8[%c1_i32_960, %c6_i32_961] : memref<2x8x!tpu.dma_semaphore, #tpu.memory_space<semaphore_mem>> -> memref<1x1x!tpu.dma_semaphore, #tpu.memory_space<semaphore_mem>>
    %948 = tpu.memref_squeeze %947 : memref<1x1x!tpu.dma_semaphore, #tpu.memory_space<semaphore_mem>> -> memref<!tpu.dma_semaphore, #tpu.memory_space<semaphore_mem>>
    tpu.wait_dma2 semaphore(%948 : memref<!tpu.dma_semaphore, #tpu.memory_space<semaphore_mem>>) src(%944 : memref<1x128xf32, #tpu.memory_space<any>>) dst(%946 : memref<1x128xf32, #tpu.memory_space<vmem>>)
    %c1_i32_966 = arith.constant 1 : i32
    %c1_i32_967 = arith.constant 1 : i32
    %c7_i32_968 = arith.constant 7 : i32
    %c0_i32_969 = arith.constant 0 : i32
    %c0_i32_970 = arith.constant 0 : i32
    %949 = tpu.memref_slice %arg5[%c0_i32_969, %c0_i32_970] : memref<512x128xf32, #tpu.memory_space<any>> -> memref<1x128xf32, #tpu.memory_space<any>>
    %c7_i32_971 = arith.constant 7 : i32
    %c0_i32_972 = arith.constant 0 : i32
    %950 = tpu.memref_slice %arg7[%c1_i32_966, %c7_i32_971, %c0_i32_972] : memref<2x8x128xf32, #tpu.memory_space<vmem>> -> memref<1x1x128xf32, #tpu.memory_space<vmem>>
    %951 = tpu.memref_squeeze %950 : memref<1x1x128xf32, #tpu.memory_space<vmem>> -> memref<1x128xf32, #tpu.memory_space<vmem>>
    %952 = tpu.memref_slice %arg8[%c1_i32_967, %c7_i32_968] : memref<2x8x!tpu.dma_semaphore, #tpu.memory_space<semaphore_mem>> -> memref<1x1x!tpu.dma_semaphore, #tpu.memory_space<semaphore_mem>>
    %953 = tpu.memref_squeeze %952 : memref<1x1x!tpu.dma_semaphore, #tpu.memory_space<semaphore_mem>> -> memref<!tpu.dma_semaphore, #tpu.memory_space<semaphore_mem>>
    tpu.wait_dma2 semaphore(%953 : memref<!tpu.dma_semaphore, #tpu.memory_space<semaphore_mem>>) src(%949 : memref<1x128xf32, #tpu.memory_space<any>>) dst(%951 : memref<1x128xf32, #tpu.memory_space<vmem>>)
    %954 = vector.extract_strided_slice %86 {offsets = [0, 7], sizes = [8, 1], strides = [1, 1]} : vector<8x8xf32> to vector<8x1xf32>
    %c1_973 = arith.constant 1 : index
    %c0_974 = arith.constant 0 : index
    %c0_975 = arith.constant 0 : index
    %955 = vector.load %arg7[%c1_973, %c0_974, %c0_975] : memref<2x8x128xf32, #tpu.memory_space<vmem>>, vector<1x8x128xf32>
    %956 = vector.shape_cast %955 : vector<1x8x128xf32> to vector<8x128xf32>
    %957 = vector.broadcast %954 : vector<8x1xf32> to vector<8x128xf32>
    %958 = arith.mulf %957, %956 : vector<8x128xf32>
    %959 = arith.addf %913, %958 : vector<8x128xf32>
    %c0_976 = arith.constant 0 : index
    %c0_977 = arith.constant 0 : index
    %960 = vector.load %arg6[%c0_976, %c0_977] : memref<8x128xf32, #tpu.memory_space<vmem>>, vector<8x128xf32>
    tpu.vector_store %arg6[%c0_976, %c0_977], %959 {strides = array<i32>} : memref<8x128xf32, #tpu.memory_space<vmem>>, vector<8x128xf32>,
    return
  }
  func.func @transform_0(%arg0: i32, %arg1: i32, %arg2: memref<16x8xi32, #tpu.memory_space<smem>>) -> (i32, i32, i32) {
    %c0_i32 = arith.constant 0 : i32
    %c0_i32_0 = arith.constant 0 : i32
    return %arg0, %arg1, %c0_i32 : i32, i32, i32
  }
  func.func @transform_1(%arg0: i32, %arg1: i32, %arg2: memref<16x8xi32, #tpu.memory_space<smem>>) -> (i32, i32, i32) {
    %c0_i32 = arith.constant 0 : i32
    %c0_i32_0 = arith.constant 0 : i32
    %c0_i32_1 = arith.constant 0 : i32
    return %arg0, %c0_i32, %c0_i32_0 : i32, i32, i32
  }
  func.func @transform_3(%arg0: i32, %arg1: i32, %arg2: memref<16x8xi32, #tpu.memory_space<smem>>) -> (i32, i32) {
    %c0_i32 = arith.constant 0 : i32
    return %arg1, %arg0 : i32, i32
  }
}

</mosaic_0001>

<llo_original>
// kernel: tpu_custom_call.1
$region0: #{tpu_custom_call.1}
  #allocation0 [shape = 'u32[]', space=smem, size = 0x4, offset = 0x4, fixed_abs, tag = 'smem constant byte address 0x4 - core index']
  #allocation1 [shape = 'u32[144,128]{1,0:T(1,128)}', space=vmem, size = 0x12000, scoped, tag = 'internal scratch']
  #allocation2 [shape = 'f32[2,8,128]{2,1,0:T(8,128)}', space=vmem, size = 0x2000, scoped, tag = 'scratch operand']
  #allocation3 [shape = 's32[16]{0}', space=sflag, size = 0x40, scoped, tag = 'scratch operand']
  #allocation4 [shape = 's32[1]{0}', space=sflag, size = 0x4, scoped, tag = 'scoped memory for tpu_custom_call.1']
  #allocation5 [shape = 'u8[8192]{0}', space=smem, size = 0x2000, scoped, tag = 'prefetched SMEM operand 0']
  #allocation8 [shape = 's32[]', space=sflag, size = 0x4, offset = 0, fixed_abs, tag = 'sflag constant byte address 0x0 - dummy sync flag']
  #allocation9 [shape = 's32[]', space=sflag, size = 0x4, offset = 0, fixed_abs, tag = 'sflag constant byte address 0x0 - dummy sync flag']
  #allocation10 [shape = 'u32[]', space=smem, size = 0x4, offset = 0x44, fixed_abs, tag = 'smem constant byte address 0x44 - assertion arg 0']
  #allocation11 [shape = 'u32[]', space=smem, size = 0x4, offset = 0x48, fixed_abs, tag = 'smem constant byte address 0x48 - assertion arg 1']
  #allocation12 [shape = 's32[]', space=sflag, size = 0x4, offset = 0, fixed_abs, tag = 'sflag constant byte address 0x0 - dummy sync flag']
  #allocation13 [shape = 's32[]', space=sflag, size = 0x4, offset = 0, fixed_abs, tag = 'sflag constant byte address 0x0 - dummy sync flag']
  #allocation14 [shape = 's32[]', space=sflag, size = 0x4, offset = 0, fixed_abs, tag = 'sflag constant byte address 0x0 - dummy sync flag']
  #allocation15 [shape = 's32[]', space=sflag, size = 0x4, offset = 0, fixed_abs, tag = 'sflag constant byte address 0x0 - dummy sync flag']
  #allocation16 [shape = 's32[]', space=sflag, size = 0x4, offset = 0, fixed_abs, tag = 'sflag constant byte address 0x0 - dummy sync flag']
  #allocation17 [shape = 's32[]', space=sflag, size = 0x4, offset = 0, fixed_abs, tag = 'sflag constant byte address 0x0 - dummy sync flag']
  #allocation18 [shape = 's32[]', space=sflag, size = 0x4, offset = 0, fixed_abs, tag = 'sflag constant byte address 0x0 - dummy sync flag']
  #allocation19 [shape = 's32[]', space=sflag, size = 0x4, offset = 0, fixed_abs, tag = 'sflag constant byte address 0x0 - dummy sync flag']
  #allocation20 [shape = 's32[]', space=sflag, size = 0x4, offset = 0, fixed_abs, tag = 'sflag constant byte address 0x0 - dummy sync flag']
  #allocation21 [shape = 's32[]', space=sflag, size = 0x4, offset = 0, fixed_abs, tag = 'sflag constant byte address 0x0 - dummy sync flag']
  #allocation22 [shape = 's32[]', space=sflag, size = 0x4, offset = 0, fixed_abs, tag = 'sflag constant byte address 0x0 - dummy sync flag']
  #allocation23 [shape = 's32[]', space=sflag, size = 0x4, offset = 0, fixed_abs, tag = 'sflag constant byte address 0x0 - dummy sync flag']
  #allocation24 [shape = 's32[]', space=sflag, size = 0x4, offset = 0, fixed_abs, tag = 'sflag constant byte address 0x0 - dummy sync flag']
  #allocation25 [shape = 's32[]', space=sflag, size = 0x4, offset = 0, fixed_abs, tag = 'sflag constant byte address 0x0 - dummy sync flag']
  #allocation26 [shape = 's32[]', space=sflag, size = 0x4, offset = 0, fixed_abs, tag = 'sflag constant byte address 0x0 - dummy sync flag']
  #allocation27 [shape = 's32[]', space=sflag, size = 0x4, offset = 0, fixed_abs, tag = 'sflag constant byte address 0x0 - dummy sync flag']
  #allocation28 [shape = 's32[]', space=sflag, size = 0x4, offset = 0, fixed_abs, tag = 'sflag constant byte address 0x0 - dummy sync flag']
  #allocation29 [shape = 's32[]', space=sflag, size = 0x4, offset = 0, fixed_abs, tag = 'sflag constant byte address 0x0 - dummy sync flag']
  #allocation30 [shape = 's32[]', space=sflag, size = 0x4, offset = 0, fixed_abs, tag = 'sflag constant byte address 0x0 - dummy sync flag']
  #allocation31 [shape = 's32[]', space=sflag, size = 0x4, offset = 0, fixed_abs, tag = 'sflag constant byte address 0x0 - dummy sync flag']
  #allocation32 [shape = 's32[]', space=sflag, size = 0x4, offset = 0, fixed_abs, tag = 'sflag constant byte address 0x0 - dummy sync flag']
  #allocation33 [shape = 's32[]', space=sflag, size = 0x4, offset = 0, fixed_abs, tag = 'sflag constant byte address 0x0 - dummy sync flag']
  #allocation34 [shape = 's32[]', space=sflag, size = 0x4, offset = 0, fixed_abs, tag = 'sflag constant byte address 0x0 - dummy sync flag']
  #allocation35 [shape = 's32[]', space=sflag, size = 0x4, offset = 0, fixed_abs, tag = 'sflag constant byte address 0x0 - dummy sync flag']
  #allocation36 [shape = 's32[]', space=sflag, size = 0x4, offset = 0, fixed_abs, tag = 'sflag constant byte address 0x0 - dummy sync flag']
  #allocation37 [shape = 's32[]', space=sflag, size = 0x4, offset = 0, fixed_abs, tag = 'sflag constant byte address 0x0 - dummy sync flag']
  #allocation38 [shape = 's32[]', space=sflag, size = 0x4, offset = 0, fixed_abs, tag = 'sflag constant byte address 0x0 - dummy sync flag']
  #allocation39 [shape = 's32[]', space=sflag, size = 0x4, offset = 0, fixed_abs, tag = 'sflag constant byte address 0x0 - dummy sync flag']
  #allocation40 [shape = 's32[]', space=sflag, size = 0x4, offset = 0, fixed_abs, tag = 'sflag constant byte address 0x0 - dummy sync flag']
  #allocation41 [shape = 's32[]', space=sflag, size = 0x4, offset = 0, fixed_abs, tag = 'sflag constant byte address 0x0 - dummy sync flag']
  #allocation42 [shape = 's32[]', space=sflag, size = 0x4, offset = 0, fixed_abs, tag = 'sflag constant byte address 0x0 - dummy sync flag']
  #allocation43 [shape = 's32[]', space=sflag, size = 0x4, offset = 0, fixed_abs, tag = 'sflag constant byte address 0x0 - dummy sync flag']
  #allocation44 [shape = 's32[]', space=sflag, size = 0x4, offset = 0, fixed_abs, tag = 'sflag constant byte address 0x0 - dummy sync flag']
  #allocation45 [shape = 's32[]', space=sflag, size = 0x4, offset = 0, fixed_abs, tag = 'sflag constant byte address 0x0 - dummy sync flag']
  #allocation46 [shape = 's32[]', space=sflag, size = 0x4, offset = 0, fixed_abs, tag = 'sflag constant byte address 0x0 - dummy sync flag']
  #allocation47 [shape = 's32[]', space=sflag, size = 0x4, offset = 0, fixed_abs, tag = 'sflag constant byte address 0x0 - dummy sync flag']
  #allocation48 [shape = 's32[]', space=sflag, size = 0x4, offset = 0, fixed_abs, tag = 'sflag constant byte address 0x0 - dummy sync flag']
  #allocation49 [shape = 's32[]', space=sflag, size = 0x4, offset = 0, fixed_abs, tag = 'sflag constant byte address 0x0 - dummy sync flag']
  #allocation50 [shape = 's32[]', space=sflag, size = 0x4, offset = 0, fixed_abs, tag = 'sflag constant byte address 0x0 - dummy sync flag']
  #allocation51 [shape = 's32[]', space=sflag, size = 0x4, offset = 0, fixed_abs, tag = 'sflag constant byte address 0x0 - dummy sync flag']
  #allocation52 [shape = 's32[]', space=sflag, size = 0x4, offset = 0, fixed_abs, tag = 'sflag constant byte address 0x0 - dummy sync flag']
  #allocation53 [shape = 's32[]', space=sflag, size = 0x4, offset = 0, fixed_abs, tag = 'sflag constant byte address 0x0 - dummy sync flag']
  #allocation54 [shape = 's32[]', space=sflag, size = 0x4, offset = 0, fixed_abs, tag = 'sflag constant byte address 0x0 - dummy sync flag']
  #allocation55 [shape = 's32[]', space=sflag, size = 0x4, offset = 0, fixed_abs, tag = 'sflag constant byte address 0x0 - dummy sync flag']
  #allocation56 [shape = 's32[]', space=sflag, size = 0x4, offset = 0, fixed_abs, tag = 'sflag constant byte address 0x0 - dummy sync flag']
  #allocation57 [shape = 's32[]', space=sflag, size = 0x4, offset = 0, fixed_abs, tag = 'sflag constant byte address 0x0 - dummy sync flag']
  #allocation58 [shape = 's32[]', space=sflag, size = 0x4, offset = 0, fixed_abs, tag = 'sflag constant byte address 0x0 - dummy sync flag']
  #allocation59 [shape = 's32[]', space=sflag, size = 0x4, offset = 0, fixed_abs, tag = 'sflag constant byte address 0x0 - dummy sync flag']
  #allocation60 [shape = 's32[]', space=sflag, size = 0x4, offset = 0, fixed_abs, tag = 'sflag constant byte address 0x0 - dummy sync flag']
  #allocation61 [shape = 's32[]', space=sflag, size = 0x4, offset = 0, fixed_abs, tag = 'sflag constant byte address 0x0 - dummy sync flag']
  #allocation62 [shape = 's32[]', space=sflag, size = 0x4, offset = 0, fixed_abs, tag = 'sflag constant byte address 0x0 - dummy sync flag']
  #allocation63 [shape = 's32[]', space=sflag, size = 0x4, offset = 0, fixed_abs, tag = 'sflag constant byte address 0x0 - dummy sync flag']
  #allocation64 [shape = 's32[]', space=sflag, size = 0x4, offset = 0, fixed_abs, tag = 'sflag constant byte address 0x0 - dummy sync flag']
  #allocation65 [shape = 's32[]', space=sflag, size = 0x4, offset = 0, fixed_abs, tag = 'sflag constant byte address 0x0 - dummy sync flag']
  #allocation66 [shape = 's32[]', space=sflag, size = 0x4, offset = 0, fixed_abs, tag = 'sflag constant byte address 0x0 - dummy sync flag']
  #allocation67 [shape = 's32[]', space=sflag, size = 0x4, offset = 0, fixed_abs, tag = 'sflag constant byte address 0x0 - dummy sync flag']
  #allocation68 [shape = 's32[]', space=sflag, size = 0x4, offset = 0, fixed_abs, tag = 'sflag constant byte address 0x0 - dummy sync flag']
  #allocation69 [shape = 's32[]', space=sflag, size = 0x4, offset = 0, fixed_abs, tag = 'sflag constant byte address 0x0 - dummy sync flag']
  #allocation70 [shape = 's32[]', space=sflag, size = 0x4, offset = 0, fixed_abs, tag = 'sflag constant byte address 0x0 - dummy sync flag']
  #allocation71 [shape = 's32[]', space=sflag, size = 0x4, offset = 0, fixed_abs, tag = 'sflag constant byte address 0x0 - dummy sync flag']
  #allocation72 [shape = 's32[]', space=sflag, size = 0x4, offset = 0, fixed_abs, tag = 'sflag constant byte address 0x0 - dummy sync flag']
  #allocation73 [shape = 's32[]', space=sflag, size = 0x4, offset = 0, fixed_abs, tag = 'sflag constant byte address 0x0 - dummy sync flag']
  #allocation74 [shape = 's32[]', space=sflag, size = 0x4, offset = 0, fixed_abs, tag = 'sflag constant byte address 0x0 - dummy sync flag']
  #allocation75 [shape = 's32[]', space=sflag, size = 0x4, offset = 0, fixed_abs, tag = 'sflag constant byte address 0x0 - dummy sync flag']
  #allocation76 [shape = 's32[]', space=sflag, size = 0x4, offset = 0, fixed_abs, tag = 'sflag constant byte address 0x0 - dummy sync flag']
  #allocation77 [shape = 's32[]', space=sflag, size = 0x4, offset = 0, fixed_abs, tag = 'sflag constant byte address 0x0 - dummy sync flag']
  #allocation78 [shape = 's32[]', space=sflag, size = 0x4, offset = 0, fixed_abs, tag = 'sflag constant byte address 0x0 - dummy sync flag']
  #allocation79 [shape = 's32[]', space=sflag, size = 0x4, offset = 0, fixed_abs, tag = 'sflag constant byte address 0x0 - dummy sync flag']
  #allocation80 [shape = 's32[]', space=sflag, size = 0x4, offset = 0, fixed_abs, tag = 'sflag constant byte address 0x0 - dummy sync flag']
  #allocation81 [shape = 's32[]', space=sflag, size = 0x4, offset = 0, fixed_abs, tag = 'sflag constant byte address 0x0 - dummy sync flag']
  #allocation82 [shape = 's32[]', space=sflag, size = 0x4, offset = 0, fixed_abs, tag = 'sflag constant byte address 0x0 - dummy sync flag']
  #allocation83 [shape = 's32[]', space=sflag, size = 0x4, offset = 0, fixed_abs, tag = 'sflag constant byte address 0x0 - dummy sync flag']
  #allocation84 [shape = 's32[]', space=sflag, size = 0x4, offset = 0, fixed_abs, tag = 'sflag constant byte address 0x0 - dummy sync flag']
  #allocation85 [shape = 's32[]', space=sflag, size = 0x4, offset = 0, fixed_abs, tag = 'sflag constant byte address 0x0 - dummy sync flag']
  #allocation86 [shape = 's32[]', space=sflag, size = 0x4, offset = 0, fixed_abs, tag = 'sflag constant byte address 0x0 - dummy sync flag']
  #allocation87 [shape = 's32[]', space=sflag, size = 0x4, offset = 0, fixed_abs, tag = 'sflag constant byte address 0x0 - dummy sync flag']
  #allocation88 [shape = 's32[]', space=sflag, size = 0x4, offset = 0, fixed_abs, tag = 'sflag constant byte address 0x0 - dummy sync flag']
  #allocation89 [shape = 's32[]', space=sflag, size = 0x4, offset = 0, fixed_abs, tag = 'sflag constant byte address 0x0 - dummy sync flag']
  #allocation90 [shape = 's32[]', space=sflag, size = 0x4, offset = 0, fixed_abs, tag = 'sflag constant byte address 0x0 - dummy sync flag']
  #allocation91 [shape = 's32[]', space=sflag, size = 0x4, offset = 0, fixed_abs, tag = 'sflag constant byte address 0x0 - dummy sync flag']
  #allocation92 [shape = 's32[]', space=sflag, size = 0x4, offset = 0, fixed_abs, tag = 'sflag constant byte address 0x0 - dummy sync flag']
  #allocation93 [shape = 's32[]', space=sflag, size = 0x4, offset = 0, fixed_abs, tag = 'sflag constant byte address 0x0 - dummy sync flag']
  #allocation94 [shape = 's32[]', space=sflag, size = 0x4, offset = 0, fixed_abs, tag = 'sflag constant byte address 0x0 - dummy sync flag']
  #allocation95 [shape = 's32[]', space=sflag, size = 0x4, offset = 0, fixed_abs, tag = 'sflag constant byte address 0x0 - dummy sync flag']
  #allocation96 [shape = 's32[]', space=sflag, size = 0x4, offset = 0, fixed_abs, tag = 'sflag constant byte address 0x0 - dummy sync flag']
  #allocation97 [shape = 's32[]', space=sflag, size = 0x4, offset = 0, fixed_abs, tag = 'sflag constant byte address 0x0 - dummy sync flag']
  #allocation98 [shape = 's32[]', space=sflag, size = 0x4, offset = 0, fixed_abs, tag = 'sflag constant byte address 0x0 - dummy sync flag']
  #allocation99 [shape = 's32[]', space=sflag, size = 0x4, offset = 0, fixed_abs, tag = 'sflag constant byte address 0x0 - dummy sync flag']
  #allocation100 [shape = 's32[]', space=sflag, size = 0x4, offset = 0, fixed_abs, tag = 'sflag constant byte address 0x0 - dummy sync flag']
  #allocation101 [shape = 's32[]', space=sflag, size = 0x4, offset = 0, fixed_abs, tag = 'sflag constant byte address 0x0 - dummy sync flag']
  #allocation102 [shape = 's32[]', space=sflag, size = 0x4, offset = 0, fixed_abs, tag = 'sflag constant byte address 0x0 - dummy sync flag']
  #allocation103 [shape = 's32[]', space=sflag, size = 0x4, offset = 0, fixed_abs, tag = 'sflag constant byte address 0x0 - dummy sync flag']
  #allocation104 [shape = 's32[]', space=sflag, size = 0x4, offset = 0, fixed_abs, tag = 'sflag constant byte address 0x0 - dummy sync flag']
  #allocation105 [shape = 's32[]', space=sflag, size = 0x4, offset = 0, fixed_abs, tag = 'sflag constant byte address 0x0 - dummy sync flag']
  #allocation106 [shape = 's32[]', space=sflag, size = 0x4, offset = 0, fixed_abs, tag = 'sflag constant byte address 0x0 - dummy sync flag']
  #allocation107 [shape = 's32[]', space=sflag, size = 0x4, offset = 0, fixed_abs, tag = 'sflag constant byte address 0x0 - dummy sync flag']
  #allocation108 [shape = 's32[]', space=sflag, size = 0x4, offset = 0, fixed_abs, tag = 'sflag constant byte address 0x0 - dummy sync flag']
  #allocation109 [shape = 's32[]', space=sflag, size = 0x4, offset = 0, fixed_abs, tag = 'sflag constant byte address 0x0 - dummy sync flag']
  #allocation110 [shape = 's32[]', space=sflag, size = 0x4, offset = 0, fixed_abs, tag = 'sflag constant byte address 0x0 - dummy sync flag']
  #allocation111 [shape = 's32[]', space=sflag, size = 0x4, offset = 0, fixed_abs, tag = 'sflag constant byte address 0x0 - dummy sync flag']
  #allocation112 [shape = 's32[]', space=sflag, size = 0x4, offset = 0, fixed_abs, tag = 'sflag constant byte address 0x0 - dummy sync flag']
  #allocation113 [shape = 's32[]', space=sflag, size = 0x4, offset = 0, fixed_abs, tag = 'sflag constant byte address 0x0 - dummy sync flag']
  #allocation114 [shape = 's32[]', space=sflag, size = 0x4, offset = 0, fixed_abs, tag = 'sflag constant byte address 0x0 - dummy sync flag']
  #allocation115 [shape = 's32[]', space=sflag, size = 0x4, offset = 0, fixed_abs, tag = 'sflag constant byte address 0x0 - dummy sync flag']
  #allocation116 [shape = 's32[]', space=sflag, size = 0x4, offset = 0, fixed_abs, tag = 'sflag constant byte address 0x0 - dummy sync flag']
  #allocation117 [shape = 's32[]', space=sflag, size = 0x4, offset = 0, fixed_abs, tag = 'sflag constant byte address 0x0 - dummy sync flag']
  #allocation118 [shape = 's32[]', space=sflag, size = 0x4, offset = 0, fixed_abs, tag = 'sflag constant byte address 0x0 - dummy sync flag']
  #allocation119 [shape = 's32[]', space=sflag, size = 0x4, offset = 0, fixed_abs, tag = 'sflag constant byte address 0x0 - dummy sync flag']
  #allocation120 [shape = 's32[]', space=sflag, size = 0x4, offset = 0, fixed_abs, tag = 'sflag constant byte address 0x0 - dummy sync flag']
  #allocation121 [shape = 's32[]', space=sflag, size = 0x4, offset = 0, fixed_abs, tag = 'sflag constant byte address 0x0 - dummy sync flag']
  #allocation122 [shape = 's32[]', space=sflag, size = 0x4, offset = 0, fixed_abs, tag = 'sflag constant byte address 0x0 - dummy sync flag']
  #allocation123 [shape = 's32[]', space=sflag, size = 0x4, offset = 0, fixed_abs, tag = 'sflag constant byte address 0x0 - dummy sync flag']
  #allocation124 [shape = 's32[]', space=sflag, size = 0x4, offset = 0, fixed_abs, tag = 'sflag constant byte address 0x0 - dummy sync flag']
  #allocation125 [shape = 's32[]', space=sflag, size = 0x4, offset = 0, fixed_abs, tag = 'sflag constant byte address 0x0 - dummy sync flag']
  #allocation126 [shape = 's32[]', space=sflag, size = 0x4, offset = 0, fixed_abs, tag = 'sflag constant byte address 0x0 - dummy sync flag']
  #allocation127 [shape = 's32[]', space=sflag, size = 0x4, offset = 0, fixed_abs, tag = 'sflag constant byte address 0x0 - dummy sync flag']
  #allocation128 [shape = 's32[]', space=sflag, size = 0x4, offset = 0, fixed_abs, tag = 'sflag constant byte address 0x0 - dummy sync flag']
  #allocation129 [shape = 's32[]', space=sflag, size = 0x4, offset = 0, fixed_abs, tag = 'sflag constant byte address 0x0 - dummy sync flag']
  #allocation130 [shape = 's32[]', space=sflag, size = 0x4, offset = 0, fixed_abs, tag = 'sflag constant byte address 0x0 - dummy sync flag']
  #allocation131 [shape = 's32[]', space=sflag, size = 0x4, offset = 0, fixed_abs, tag = 'sflag constant byte address 0x0 - dummy sync flag']
  #allocation132 [shape = 's32[]', space=sflag, size = 0x4, offset = 0, fixed_abs, tag = 'sflag constant byte address 0x0 - dummy sync flag']
  #allocation133 [shape = 's32[]', space=sflag, size = 0x4, offset = 0, fixed_abs, tag = 'sflag constant byte address 0x0 - dummy sync flag']
  #allocation134 [shape = 's32[]', space=sflag, size = 0x4, offset = 0, fixed_abs, tag = 'sflag constant byte address 0x0 - dummy sync flag']
  #allocation135 [shape = 's32[]', space=sflag, size = 0x4, offset = 0, fixed_abs, tag = 'sflag constant byte address 0x0 - dummy sync flag']
  #allocation136 [shape = 's32[]', space=sflag, size = 0x4, offset = 0, fixed_abs, tag = 'sflag constant byte address 0x0 - dummy sync flag']
  #allocation137 [shape = 's32[]', space=sflag, size = 0x4, offset = 0, fixed_abs, tag = 'sflag constant byte address 0x0 - dummy sync flag']
  %s0 = inlined_call_operand.vmem [shape: s32[16,8], index: 0, kind: input, shape index: {}]
  %s1 = inlined_call_operand.vmem [shape: s32[2,8,1], index: 1, kind: input, shape index: {}]
  %s2 = inlined_call_operand.vmem [shape: f32[2,1,8], index: 2, kind: input, shape index: {}]
  %s3 = inlined_call_operand.hbm [shape: f32[512,128], index: 3, kind: input, shape index: {}]
  %s4 = inlined_call_operand.hbm [shape: f32[8,256], index: 4, kind: output, shape index: {}]
  %s5 = sld [smem:[#allocation0]]
  $region297: #{tpu_custom_call.1} parent=0
    _
  %s7 = ssub.s32 1, %s5
  %s8 = scalar_select 0, %s7, %s5
  %s9 = sshll.u32 %s0, 4
  %s10 = int_to_ptr.vmem [resolvable:$true] %s9
  %12 = dma.vmem_to_smem %s10, 256, [#allocation5], [#allocation4]
  %13 = dma.done [#allocation4], 256
  %14 = sfence
  $region1: #{tpu_custom_call.1} parent=0
    #allocation6 [shape = 'u8[8192]{0}', space=vmem, size = 0x2000, scoped, tag = 'output window, operand 0']
    #allocation7 [shape = 's32[2]{0}', space=sflag, size = 0x8, scoped, tag = 'scoped memory for tpu_custom_call.1']
    %15 = vsyncpa [#allocation7], 0
    %s16 = scalar_lea.sflag [#allocation7], 1
    %17 = vsyncpa %s16, 0
    loop: start=0, step=1, limit=4
    $region2: #{tpu_custom_call.1} parent=1 // loop_pre_header
      _
    $region3: #{tpu_custom_call.1} parent=1 // loop_header
      %s19 = sphi 0, %s23
      %p20 = scmp.ge.s32.totalorder %s19, 4
      %s26 = sphi 0, %s38
      %s27 = sphi 0, %s34
      %s28 = sphi 0, %s26
      %s29 = sphi 0, %s27
      %s30 = sphi 0, %s28
      %s31 = sphi 0, %s29
      %s43 = sphi 0, %s45
      %s46 = sphi 0, %s43
      %s47 = sphi 0, %s46
      %s63 = sphi 0, %s47
      %s69 = sphi 0, %s71
      %s72 = sphi 0, %s69
      %s73 = sphi 0, %s72
      %s89 = sphi 0, %s73
      %s97 = sphi 0, %s99
      %s100 = sphi 0, %s97
      %s101 = sphi 0, %s100
      %s117 = sphi 0, %s101
    $region4: #{tpu_custom_call.1} parent=1 // loop_header_branch
      %22 = sbr.rel (%p20) target = $region8
    $region5: #{tpu_custom_call.1} parent=1 // loop_body
      %s24 = ssub.s32 %s19, 1
      %s25 = ssub.s32 %s19, 2
      %s32 = sadd.s32 1, %s27
      %p33 = scmp.ge.s32.totalorder %s32, 1
      %s34 = scalar_select %p33, 0, %s32
      %s35 = sadd.s32 1, %s26
      %s36 = scalar_select %p33, %s35, %s26
      %p37 = scmp.ge.s32.totalorder %s36, 2
      %s38 = scalar_select %p37, 0, %s36
      %s39 = ssub.s32 %s26, %s38
      %s40 = ssub.s32 %s27, %s34
      %s41 = sor.u32 %s39, %s40
      %p42 = scmp.eq.s32.totalorder %s41, 0
      %s44 = sadd.s32 %s43, 1
      %s45 = scalar_select %p42, %s43, %s44
      %p48 = pneg %p42
      %p49 = scmp.eq.s32.totalorder %s19, 1
      %p50 = por %p48, %p49
      %p51 = scmp.ne.s32.totalorder %s43, %s46
      %p52 = scmp.eq.s32.totalorder %s19, 0
      %p53 = por %p51, %p52
      %p54 = scmp.ne.s32.totalorder %s43, %s46
      %p55 = scmp.eq.s32.totalorder %s24, 1
      %p56 = por %p54, %p55
      %p57 = scmp.ne.s32.totalorder %s46, %s47
      %p58 = scmp.eq.s32.totalorder %s24, 0
      %p59 = por %p57, %p58
      %p60 = scmp.ne.s32.totalorder %s46, %s47
      %p61 = scmp.eq.s32.totalorder %s25, 1
      %p62 = por %p60, %p61
      %p64 = scmp.ne.s32.totalorder %s47, %s63
      %p65 = scmp.eq.s32.totalorder %s25, 0
      %p66 = por %p64, %p65
      %s67 = ssub.s32 %s26, %s38
      %p68 = scmp.eq.s32.totalorder %s67, 0
      %s70 = sadd.s32 %s69, 1
      %s71 = scalar_select %p68, %s69, %s70
      %p74 = pneg %p68
      %p75 = scmp.eq.s32.totalorder %s19, 1
      %p76 = por %p74, %p75
      %p77 = scmp.ne.s32.totalorder %s69, %s72
      %p78 = scmp.eq.s32.totalorder %s19, 0
      %p79 = por %p77, %p78
      %p80 = scmp.ne.s32.totalorder %s69, %s72
      %p81 = scmp.eq.s32.totalorder %s24, 1
      %p82 = por %p80, %p81
      %p83 = scmp.ne.s32.totalorder %s72, %s73
      %p84 = scmp.eq.s32.totalorder %s24, 0
      %p85 = por %p83, %p84
      %p86 = scmp.ne.s32.totalorder %s72, %s73
      %p87 = scmp.eq.s32.totalorder %s25, 1
      %p88 = por %p86, %p87
      %p90 = scmp.ne.s32.totalorder %s73, %s89
      %p91 = scmp.eq.s32.totalorder %s25, 0
      %p92 = por %p90, %p91
      %s93 = ssub.s32 %s27, %s34
      %s94 = ssub.s32 %s26, %s38
      %s95 = sor.u32 %s93, %s94
      %p96 = scmp.eq.s32.totalorder %s95, 0
      %s98 = sadd.s32 %s97, 1
      %s99 = scalar_select %p96, %s97, %s98
      %p102 = pneg %p96
      %p103 = scmp.eq.s32.totalorder %s19, 1
      %p104 = por %p102, %p103
      %p105 = scmp.ne.s32.totalorder %s97, %s100
      %p106 = scmp.eq.s32.totalorder %s19, 0
      %p107 = por %p105, %p106
      %p108 = scmp.ne.s32.totalorder %s97, %s100
      %p109 = scmp.eq.s32.totalorder %s24, 1
      %p110 = por %p108, %p109
      %p111 = scmp.ne.s32.totalorder %s100, %s101
      %p112 = scmp.eq.s32.totalorder %s24, 0
      %p113 = por %p111, %p112
      %p114 = scmp.ne.s32.totalorder %s100, %s101
      %p115 = scmp.eq.s32.totalorder %s25, 1
      %p116 = por %p114, %p115
      %p118 = scmp.ne.s32.totalorder %s101, %s117
      %p119 = scmp.eq.s32.totalorder %s25, 0
      %p120 = por %p118, %p119
      %p121 = scmp.le.s32.totalorder 1, %s19
      %p122 = scmp.lt.s32.totalorder %s19, 3
      %p123 = pnand %p121, %p122
      %p124 = pneg %p123
      // Predicated region
      $region9: #{tpu_custom_call.1} parent=5 // pred_check
        _
      $region10: #{tpu_custom_call.1} parent=5 // pred_check_branch
        %126 = sbr.rel (%p123) target = $region12
      $region11: #{tpu_custom_call.1} parent=5 // pred_region
        %s127 = ssub.s32 %s19, 1
      $region12: #{tpu_custom_call.1} parent=5 // pred_fallthru
        _
      %p128 = scmp.lt.s32.totalorder %s19, 2
      // Predicated region
      $region13: #{tpu_custom_call.1} parent=5 // pred_check
        %p129 = pneg %p128
      $region14: #{tpu_custom_call.1} parent=5 // pred_check_branch
        %131 = sbr.rel (%p129) target = $region16
      $region15: #{tpu_custom_call.1} parent=5 // pred_region
        // Predicated region
        $region17: #{tpu_custom_call.1} parent=15 // pred_check
          %p132 = pneg %p53
        $region18: #{tpu_custom_call.1} parent=15 // pred_check_branch
          %134 = sbr.rel (%p132) target = $region20
        $region19: #{tpu_custom_call.1} parent=15 // pred_region
          %p135 = scmp.lt.s32.totalorder %s26, 1
          %s136 = scalar_select %p135, %s26, 1
          %p137 = scmp.lt.s32.totalorder %s27, 0
          %s138 = scalar_select %p137, %s27, 0
          %s139 = sadd.s32 %s138, %s136
          %s140 = smul.addr %s139, 8
          %s141 = scalar_lea.vmem %s1, %s140
        $region20: #{tpu_custom_call.1} parent=15 // pred_fallthru
          _
        // Predicated region
        $region21: #{tpu_custom_call.1} parent=15 // pred_check
          %p142 = pneg %p79
        $region22: #{tpu_custom_call.1} parent=15 // pred_check_branch
          %144 = sbr.rel (%p142) target = $region24
        $region23: #{tpu_custom_call.1} parent=15 // pred_region
          %p145 = scmp.lt.s32.totalorder %s26, 1
          %s146 = scalar_select %p145, %s26, 1
          %s147 = scalar_lea.vmem %s2, %s146
        $region24: #{tpu_custom_call.1} parent=15 // pred_fallthru
          _
      $region16: #{tpu_custom_call.1} parent=5 // pred_fallthru
        _
      %p148 = scmp.le.s32.totalorder 1, %s19
      %p149 = scmp.lt.s32.totalorder %s19, 3
      %p150 = pnand %p148, %p149
      %p151 = pneg %p150
      // Predicated region
      $region25: #{tpu_custom_call.1} parent=5 // pred_check
        _
      $region26: #{tpu_custom_call.1} parent=5 // pred_check_branch
        %153 = sbr.rel (%p150) target = $region28
      $region27: #{tpu_custom_call.1} parent=5 // pred_region
        %s154 = ssub.s32 %s19, 1
        %p155 = scmp.lt.s32.totalorder %s28, 1
        %s156 = scalar_select %p155, %s28, 1
        %p157 = scmp.lt.s32.totalorder %s29, 0
        %s158 = scalar_select %p157, %s29, 0
        %s159 = sadd.s32 %s158, %s156
        %s160 = smul.addr %s159, 8
        %s161 = scalar_lea.vmem %s1, %s160
        %p162 = pneg %p59
        %p163 = pneg %p56
        %p164 = scmp.lt.s32.totalorder %s28, 1
        %s165 = scalar_select %p164, %s28, 1
        %s166 = scalar_lea.vmem %s2, %s165
        %p167 = pneg %p85
        %p168 = pneg %p82
        %p169 = pneg %p113
        %p170 = pneg %p110
        %s171 = sand.u32 %s100, 1
        %s172 = scalar_lea.sflag [#allocation7], %s171
        %s173 = sand.u32 %s100, 1
        %s174 = smul.addr %s173, 8
        %s175 = scalar_lea.vmem [#allocation6], %s174
        %p176 = scmp.lt.s32.totalorder %s28, 1
        %s177 = scalar_select %p176, %s28, 1
        %p178 = scmp.lt.s32.totalorder %s29, 0
        %s179 = scalar_select %p178, %s29, 0
        %s180 = sadd.s32 %s179, %s177
        %s181 = smul.addr %s180, 8
        %s182 = scalar_lea.vmem %s1, %s181
        %p183 = scmp.lt.s32.totalorder %s28, 1
        %s184 = scalar_select %p183, %s28, 1
        %s185 = scalar_lea.vmem %s2, %s184
        %s186 = smul.u32 %s28, 8
        %s187 = smul.u32 %s29, 8
        %s188 = sadd.s32 %s186, %s187
        %s189 = smul.u32 %s28, 256
        %s190 = smul.u32 %s188, 128
        %s191 = sld [smem:[#allocation5 + %s190]]
        %s192 = sadd.s32 %s189, %s191
        %s193 = smul.addr %s192, 16
        %s194 = scalar_lea.hbm %s3, %s193
        // Predicated region
        $region29: #{tpu_custom_call.1} parent=27 // pred_check
          _
        $region30: #{tpu_custom_call.1} parent=27 // pred_check_branch
          %196 = sbr.rel target = $region32
        $region31: #{tpu_custom_call.1} parent=27 // pred_region
          %197 = sst [smem:[#allocation10]] [#allocation9]
          %198 = sst [smem:[#allocation11]] [#allocation8]
        $region32: #{tpu_custom_call.1} parent=27 // pred_fallthru
          _
        %200 = shalt.err (0)
        %s202 = sshll.u32 [#allocation2], 4
        %s203 = int_to_ptr.vmem [resolvable:$true] %s202
        %205 = dma.hbm_to_vmem [thread:$0]  %s194, 16, %s203, [#allocation3]
        %s206 = sadd.s32 %s188, 1
        %s207 = smul.u32 %s206, 128
        %s208 = sld [smem:[#allocation5 + %s207]]
        %s209 = sadd.s32 %s189, %s208
        %s210 = smul.addr %s209, 16
        %s211 = scalar_lea.hbm %s3, %s210
        %s212 = scalar_lea.vmem [#allocation2], 1
        %s213 = scalar_lea.sflag [#allocation3], 1
        // Predicated region
        $region33: #{tpu_custom_call.1} parent=27 // pred_check
          _
        $region34: #{tpu_custom_call.1} parent=27 // pred_check_branch
          %215 = sbr.rel target = $region36
        $region35: #{tpu_custom_call.1} parent=27 // pred_region
          %216 = sst [smem:[#allocation10]] [#allocation13]
          %217 = sst [smem:[#allocation11]] [#allocation12]
        $region36: #{tpu_custom_call.1} parent=27 // pred_fallthru
          _
        %219 = shalt.err (0)
        %s221 = sshll.u32 %s212, 4
        %s222 = int_to_ptr.vmem [resolvable:$true] %s221
        %224 = dma.hbm_to_vmem [thread:$0]  %s211, 16, %s222, %s213
        %s225 = sadd.s32 %s188, 2
        %s226 = smul.u32 %s225, 128
        %s227 = sld [smem:[#allocation5 + %s226]]
        %s228 = sadd.s32 %s189, %s227
        %s229 = smul.addr %s228, 16
        %s230 = scalar_lea.hbm %s3, %s229
        %s231 = scalar_lea.vmem [#allocation2], 2
        %s232 = scalar_lea.sflag [#allocation3], 2
        // Predicated region
        $region37: #{tpu_custom_call.1} parent=27 // pred_check
          _
        $region38: #{tpu_custom_call.1} parent=27 // pred_check_branch
          %234 = sbr.rel target = $region40
        $region39: #{tpu_custom_call.1} parent=27 // pred_region
          %235 = sst [smem:[#allocation10]] [#allocation15]
          %236 = sst [smem:[#allocation11]] [#allocation14]
        $region40: #{tpu_custom_call.1} parent=27 // pred_fallthru
          _
        %238 = shalt.err (0)
        %s240 = sshll.u32 %s231, 4
        %s241 = int_to_ptr.vmem [resolvable:$true] %s240
        %243 = dma.hbm_to_vmem [thread:$0]  %s230, 16, %s241, %s232
        %s244 = sadd.s32 %s188, 3
        %s245 = smul.u32 %s244, 128
        %s246 = sld [smem:[#allocation5 + %s245]]
        %s247 = sadd.s32 %s189, %s246
        %s248 = smul.addr %s247, 16
        %s249 = scalar_lea.hbm %s3, %s248
        %s250 = scalar_lea.vmem [#allocation2], 3
        %s251 = scalar_lea.sflag [#allocation3], 3
        // Predicated region
        $region41: #{tpu_custom_call.1} parent=27 // pred_check
          _
        $region42: #{tpu_custom_call.1} parent=27 // pred_check_branch
          %253 = sbr.rel target = $region44
        $region43: #{tpu_custom_call.1} parent=27 // pred_region
          %254 = sst [smem:[#allocation10]] [#allocation17]
          %255 = sst [smem:[#allocation11]] [#allocation16]
        $region44: #{tpu_custom_call.1} parent=27 // pred_fallthru
          _
        %257 = shalt.err (0)
        %s259 = sshll.u32 %s250, 4
        %s260 = int_to_ptr.vmem [resolvable:$true] %s259
        %262 = dma.hbm_to_vmem [thread:$0]  %s249, 16, %s260, %s251
        %s263 = sadd.s32 %s188, 4
        %s264 = smul.u32 %s263, 128
        %s265 = sld [smem:[#allocation5 + %s264]]
        %s266 = sadd.s32 %s189, %s265
        %s267 = smul.addr %s266, 16
        %s268 = scalar_lea.hbm %s3, %s267
        %s269 = scalar_lea.vmem [#allocation2], 4
        %s270 = scalar_lea.sflag [#allocation3], 4
        // Predicated region
        $region45: #{tpu_custom_call.1} parent=27 // pred_check
          _
        $region46: #{tpu_custom_call.1} parent=27 // pred_check_branch
          %272 = sbr.rel target = $region48
        $region47: #{tpu_custom_call.1} parent=27 // pred_region
          %273 = sst [smem:[#allocation10]] [#allocation19]
          %274 = sst [smem:[#allocation11]] [#allocation18]
        $region48: #{tpu_custom_call.1} parent=27 // pred_fallthru
          _
        %276 = shalt.err (0)
        %s278 = sshll.u32 %s269, 4
        %s279 = int_to_ptr.vmem [resolvable:$true] %s278
        %281 = dma.hbm_to_vmem [thread:$0]  %s268, 16, %s279, %s270
        %s282 = sadd.s32 %s188, 5
        %s283 = smul.u32 %s282, 128
        %s284 = sld [smem:[#allocation5 + %s283]]
        %s285 = sadd.s32 %s189, %s284
        %s286 = smul.addr %s285, 16
        %s287 = scalar_lea.hbm %s3, %s286
        %s288 = scalar_lea.vmem [#allocation2], 5
        %s289 = scalar_lea.sflag [#allocation3], 5
        // Predicated region
        $region49: #{tpu_custom_call.1} parent=27 // pred_check
          _
        $region50: #{tpu_custom_call.1} parent=27 // pred_check_branch
          %291 = sbr.rel target = $region52
        $region51: #{tpu_custom_call.1} parent=27 // pred_region
          %292 = sst [smem:[#allocation10]] [#allocation21]
          %293 = sst [smem:[#allocation11]] [#allocation20]
        $region52: #{tpu_custom_call.1} parent=27 // pred_fallthru
          _
        %295 = shalt.err (0)
        %s297 = sshll.u32 %s288, 4
        %s298 = int_to_ptr.vmem [resolvable:$true] %s297
        %300 = dma.hbm_to_vmem [thread:$0]  %s287, 16, %s298, %s289
        %s301 = sadd.s32 %s188, 6
        %s302 = smul.u32 %s301, 128
        %s303 = sld [smem:[#allocation5 + %s302]]
        %s304 = sadd.s32 %s189, %s303
        %s305 = smul.addr %s304, 16
        %s306 = scalar_lea.hbm %s3, %s305
        %s307 = scalar_lea.vmem [#allocation2], 6
        %s308 = scalar_lea.sflag [#allocation3], 6
        // Predicated region
        $region53: #{tpu_custom_call.1} parent=27 // pred_check
          _
        $region54: #{tpu_custom_call.1} parent=27 // pred_check_branch
          %310 = sbr.rel target = $region56
        $region55: #{tpu_custom_call.1} parent=27 // pred_region
          %311 = sst [smem:[#allocation10]] [#allocation23]
          %312 = sst [smem:[#allocation11]] [#allocation22]
        $region56: #{tpu_custom_call.1} parent=27 // pred_fallthru
          _
        %314 = shalt.err (0)
        %s316 = sshll.u32 %s307, 4
        %s317 = int_to_ptr.vmem [resolvable:$true] %s316
        %319 = dma.hbm_to_vmem [thread:$0]  %s306, 16, %s317, %s308
        %s320 = sadd.s32 %s188, 7
        %s321 = smul.u32 %s320, 128
        %s322 = sld [smem:[#allocation5 + %s321]]
        %s323 = sadd.s32 %s189, %s322
        %s324 = smul.addr %s323, 16
        %s325 = scalar_lea.hbm %s3, %s324
        %s326 = scalar_lea.vmem [#allocation2], 7
        %s327 = scalar_lea.sflag [#allocation3], 7
        // Predicated region
        $region57: #{tpu_custom_call.1} parent=27 // pred_check
          _
        $region58: #{tpu_custom_call.1} parent=27 // pred_check_branch
          %329 = sbr.rel target = $region60
        $region59: #{tpu_custom_call.1} parent=27 // pred_region
          %330 = sst [smem:[#allocation10]] [#allocation25]
          %331 = sst [smem:[#allocation11]] [#allocation24]
        $region60: #{tpu_custom_call.1} parent=27 // pred_fallthru
          _
        %333 = shalt.err (0)
        %s335 = sshll.u32 %s326, 4
        %s336 = int_to_ptr.vmem [resolvable:$true] %s335
        %338 = dma.hbm_to_vmem [thread:$0]  %s325, 16, %s336, %s327
        %v339 = vld [vmem:[%s182] sm:$0xff]
        %v340 = vld [vmem:[%s185] sm:$0x1]
        %v341 = vlaneseq
        %v342 = vand.u32 %v341, 127
        %343 = vset.pattern.permute.xlu0 0
        %344 = vperm.xlu0 %343, %v339
        %v345 = vpop.permute.xlu0 %344
        %vm346 = vcmp.lt.s32.totalorder %v342, %v345
        %v348 = vlaneseq
        %v349 = vshrl.u32 %v348, 7
        %v350 = vsub.s32 0, %v349
        %v351 = vrot.slane %v340, %v350
        %v353 = vsel %vm346, %v351, 0.0
        %s354 = smul.u32 1, 1
        %s355 = sshll.u32 %s354, 4
        %356 = dma.done [#allocation3], %s355
        %s357 = sshll.u32 %s354, 4
        %358 = dma.done %s213, %s357
        %s359 = sshll.u32 %s354, 4
        %360 = dma.done %s232, %s359
        %s361 = sshll.u32 %s354, 4
        %362 = dma.done %s251, %s361
        %s363 = sshll.u32 %s354, 4
        %364 = dma.done %s270, %s363
        %s365 = sshll.u32 %s354, 4
        %366 = dma.done %s289, %s365
        %s367 = sshll.u32 %s354, 4
        %368 = dma.done %s308, %s367
        %s369 = sshll.u32 %s354, 4
        %370 = dma.done %s327, %s369
        %s371 = sadd.s32 %s190, 1
        %s372 = sld [smem:[#allocation5 + %s371]]
        %s373 = sadd.s32 %s189, %s372
        %s374 = smul.addr %s373, 16
        %s375 = scalar_lea.hbm %s3, %s374
        %s376 = scalar_lea.vmem [#allocation2], 8
        %s377 = scalar_lea.sflag [#allocation3], 8
        // Predicated region
        $region61: #{tpu_custom_call.1} parent=27 // pred_check
          _
        $region62: #{tpu_custom_call.1} parent=27 // pred_check_branch
          %379 = sbr.rel target = $region64
        $region63: #{tpu_custom_call.1} parent=27 // pred_region
          %380 = sst [smem:[#allocation10]] [#allocation27]
          %381 = sst [smem:[#allocation11]] [#allocation26]
        $region64: #{tpu_custom_call.1} parent=27 // pred_fallthru
          _
        %383 = shalt.err (0)
        %s385 = sshll.u32 %s376, 4
        %s386 = int_to_ptr.vmem [resolvable:$true] %s385
        %388 = dma.hbm_to_vmem [thread:$0]  %s375, 16, %s386, %s377
        %s389 = sadd.s32 %s207, 1
        %s390 = sld [smem:[#allocation5 + %s389]]
        %s391 = sadd.s32 %s189, %s390
        %s392 = smul.addr %s391, 16
        %s393 = scalar_lea.hbm %s3, %s392
        %s394 = scalar_lea.vmem [#allocation2], 9
        %s395 = scalar_lea.sflag [#allocation3], 9
        // Predicated region
        $region65: #{tpu_custom_call.1} parent=27 // pred_check
          _
        $region66: #{tpu_custom_call.1} parent=27 // pred_check_branch
          %397 = sbr.rel target = $region68
        $region67: #{tpu_custom_call.1} parent=27 // pred_region
          %398 = sst [smem:[#allocation10]] [#allocation29]
          %399 = sst [smem:[#allocation11]] [#allocation28]
        $region68: #{tpu_custom_call.1} parent=27 // pred_fallthru
          _
        %401 = shalt.err (0)
        %s403 = sshll.u32 %s394, 4
        %s404 = int_to_ptr.vmem [resolvable:$true] %s403
        %406 = dma.hbm_to_vmem [thread:$0]  %s393, 16, %s404, %s395
        %s407 = sadd.s32 %s226, 1
        %s408 = sld [smem:[#allocation5 + %s407]]
        %s409 = sadd.s32 %s189, %s408
        %s410 = smul.addr %s409, 16
        %s411 = scalar_lea.hbm %s3, %s410
        %s412 = scalar_lea.vmem [#allocation2], 10
        %s413 = scalar_lea.sflag [#allocation3], 10
        // Predicated region
        $region69: #{tpu_custom_call.1} parent=27 // pred_check
          _
        $region70: #{tpu_custom_call.1} parent=27 // pred_check_branch
          %415 = sbr.rel target = $region72
        $region71: #{tpu_custom_call.1} parent=27 // pred_region
          %416 = sst [smem:[#allocation10]] [#allocation31]
          %417 = sst [smem:[#allocation11]] [#allocation30]
        $region72: #{tpu_custom_call.1} parent=27 // pred_fallthru
          _
        %419 = shalt.err (0)
        %s421 = sshll.u32 %s412, 4
        %s422 = int_to_ptr.vmem [resolvable:$true] %s421
        %424 = dma.hbm_to_vmem [thread:$0]  %s411, 16, %s422, %s413
        %s425 = sadd.s32 %s245, 1
        %s426 = sld [smem:[#allocation5 + %s425]]
        %s427 = sadd.s32 %s189, %s426
        %s428 = smul.addr %s427, 16
        %s429 = scalar_lea.hbm %s3, %s428
        %s430 = scalar_lea.vmem [#allocation2], 11
        %s431 = scalar_lea.sflag [#allocation3], 11
        // Predicated region
        $region73: #{tpu_custom_call.1} parent=27 // pred_check
          _
        $region74: #{tpu_custom_call.1} parent=27 // pred_check_branch
          %433 = sbr.rel target = $region76
        $region75: #{tpu_custom_call.1} parent=27 // pred_region
          %434 = sst [smem:[#allocation10]] [#allocation33]
          %435 = sst [smem:[#allocation11]] [#allocation32]
        $region76: #{tpu_custom_call.1} parent=27 // pred_fallthru
          _
        %437 = shalt.err (0)
        %s439 = sshll.u32 %s430, 4
        %s440 = int_to_ptr.vmem [resolvable:$true] %s439
        %442 = dma.hbm_to_vmem [thread:$0]  %s429, 16, %s440, %s431
        %s443 = sadd.s32 %s264, 1
        %s444 = sld [smem:[#allocation5 + %s443]]
        %s445 = sadd.s32 %s189, %s444
        %s446 = smul.addr %s445, 16
        %s447 = scalar_lea.hbm %s3, %s446
        %s448 = scalar_lea.vmem [#allocation2], 12
        %s449 = scalar_lea.sflag [#allocation3], 12
        // Predicated region
        $region77: #{tpu_custom_call.1} parent=27 // pred_check
          _
        $region78: #{tpu_custom_call.1} parent=27 // pred_check_branch
          %451 = sbr.rel target = $region80
        $region79: #{tpu_custom_call.1} parent=27 // pred_region
          %452 = sst [smem:[#allocation10]] [#allocation35]
          %453 = sst [smem:[#allocation11]] [#allocation34]
        $region80: #{tpu_custom_call.1} parent=27 // pred_fallthru
          _
        %455 = shalt.err (0)
        %s457 = sshll.u32 %s448, 4
        %s458 = int_to_ptr.vmem [resolvable:$true] %s457
        %460 = dma.hbm_to_vmem [thread:$0]  %s447, 16, %s458, %s449
        %s461 = sadd.s32 %s283, 1
        %s462 = sld [smem:[#allocation5 + %s461]]
        %s463 = sadd.s32 %s189, %s462
        %s464 = smul.addr %s463, 16
        %s465 = scalar_lea.hbm %s3, %s464
        %s466 = scalar_lea.vmem [#allocation2], 13
        %s467 = scalar_lea.sflag [#allocation3], 13
        // Predicated region
        $region81: #{tpu_custom_call.1} parent=27 // pred_check
          _
        $region82: #{tpu_custom_call.1} parent=27 // pred_check_branch
          %469 = sbr.rel target = $region84
        $region83: #{tpu_custom_call.1} parent=27 // pred_region
          %470 = sst [smem:[#allocation10]] [#allocation37]
          %471 = sst [smem:[#allocation11]] [#allocation36]
        $region84: #{tpu_custom_call.1} parent=27 // pred_fallthru
          _
        %473 = shalt.err (0)
        %s475 = sshll.u32 %s466, 4
        %s476 = int_to_ptr.vmem [resolvable:$true] %s475
        %478 = dma.hbm_to_vmem [thread:$0]  %s465, 16, %s476, %s467
        %s479 = sadd.s32 %s302, 1
        %s480 = sld [smem:[#allocation5 + %s479]]
        %s481 = sadd.s32 %s189, %s480
        %s482 = smul.addr %s481, 16
        %s483 = scalar_lea.hbm %s3, %s482
        %s484 = scalar_lea.vmem [#allocation2], 14
        %s485 = scalar_lea.sflag [#allocation3], 14
        // Predicated region
        $region85: #{tpu_custom_call.1} parent=27 // pred_check
          _
        $region86: #{tpu_custom_call.1} parent=27 // pred_check_branch
          %487 = sbr.rel target = $region88
        $region87: #{tpu_custom_call.1} parent=27 // pred_region
          %488 = sst [smem:[#allocation10]] [#allocation39]
          %489 = sst [smem:[#allocation11]] [#allocation38]
        $region88: #{tpu_custom_call.1} parent=27 // pred_fallthru
          _
        %491 = shalt.err (0)
        %s493 = sshll.u32 %s484, 4
        %s494 = int_to_ptr.vmem [resolvable:$true] %s493
        %496 = dma.hbm_to_vmem [thread:$0]  %s483, 16, %s494, %s485
        %s497 = sadd.s32 %s321, 1
        %s498 = sld [smem:[#allocation5 + %s497]]
        %s499 = sadd.s32 %s189, %s498
        %s500 = smul.addr %s499, 16
        %s501 = scalar_lea.hbm %s3, %s500
        %s502 = scalar_lea.vmem [#allocation2], 15
        %s503 = scalar_lea.sflag [#allocation3], 15
        // Predicated region
        $region89: #{tpu_custom_call.1} parent=27 // pred_check
          _
        $region90: #{tpu_custom_call.1} parent=27 // pred_check_branch
          %505 = sbr.rel target = $region92
        $region91: #{tpu_custom_call.1} parent=27 // pred_region
          %506 = sst [smem:[#allocation10]] [#allocation41]
          %507 = sst [smem:[#allocation11]] [#allocation40]
        $region92: #{tpu_custom_call.1} parent=27 // pred_fallthru
          _
        %509 = shalt.err (0)
        %s511 = sshll.u32 %s502, 4
        %s512 = int_to_ptr.vmem [resolvable:$true] %s511
        %514 = dma.hbm_to_vmem [thread:$0]  %s501, 16, %s512, %s503
        %v515 = vld [vmem:[#allocation2] sm:$0xff]
        %517 = vset.pattern.permute.xlu0 0
        %518 = vperm.xlu0 %517, %v353
        %v519 = vpop.permute.xlu0 %518
        %v521 = vmul.f32 %v519, %v515
        %v522 = vadd.f32 %v521, 0.0
        %s523 = sshll.u32 %s354, 4
        %524 = dma.done %s377, %s523
        %s525 = sshll.u32 %s354, 4
        %526 = dma.done %s395, %s525
        %s527 = sshll.u32 %s354, 4
        %528 = dma.done %s413, %s527
        %s529 = sshll.u32 %s354, 4
        %530 = dma.done %s431, %s529
        %s531 = sshll.u32 %s354, 4
        %532 = dma.done %s449, %s531
        %s533 = sshll.u32 %s354, 4
        %534 = dma.done %s467, %s533
        %s535 = sshll.u32 %s354, 4
        %536 = dma.done %s485, %s535
        %s537 = sshll.u32 %s354, 4
        %538 = dma.done %s503, %s537
        %s539 = sadd.s32 %s190, 2
        %s540 = sld [smem:[#allocation5 + %s539]]
        %s541 = sadd.s32 %s189, %s540
        %s542 = smul.addr %s541, 16
        %s543 = scalar_lea.hbm %s3, %s542
        // Predicated region
        $region93: #{tpu_custom_call.1} parent=27 // pred_check
          _
        $region94: #{tpu_custom_call.1} parent=27 // pred_check_branch
          %545 = sbr.rel target = $region96
        $region95: #{tpu_custom_call.1} parent=27 // pred_region
          %546 = sst [smem:[#allocation10]] [#allocation43]
          %547 = sst [smem:[#allocation11]] [#allocation42]
        $region96: #{tpu_custom_call.1} parent=27 // pred_fallthru
          _
        %549 = shalt.err (0)
        %s551 = sshll.u32 [#allocation2], 4
        %s552 = int_to_ptr.vmem [resolvable:$true] %s551
        %554 = dma.hbm_to_vmem [thread:$0]  %s543, 16, %s552, [#allocation3]
        %s555 = sadd.s32 %s207, 2
        %s556 = sld [smem:[#allocation5 + %s555]]
        %s557 = sadd.s32 %s189, %s556
        %s558 = smul.addr %s557, 16
        %s559 = scalar_lea.hbm %s3, %s558
        // Predicated region
        $region97: #{tpu_custom_call.1} parent=27 // pred_check
          _
        $region98: #{tpu_custom_call.1} parent=27 // pred_check_branch
          %561 = sbr.rel target = $region100
        $region99: #{tpu_custom_call.1} parent=27 // pred_region
          %562 = sst [smem:[#allocation10]] [#allocation45]
          %563 = sst [smem:[#allocation11]] [#allocation44]
        $region100: #{tpu_custom_call.1} parent=27 // pred_fallthru
          _
        %565 = shalt.err (0)
        %s567 = sshll.u32 %s212, 4
        %s568 = int_to_ptr.vmem [resolvable:$true] %s567
        %570 = dma.hbm_to_vmem [thread:$0]  %s559, 16, %s568, %s213
        %s571 = sadd.s32 %s226, 2
        %s572 = sld [smem:[#allocation5 + %s571]]
        %s573 = sadd.s32 %s189, %s572
        %s574 = smul.addr %s573, 16
        %s575 = scalar_lea.hbm %s3, %s574
        // Predicated region
        $region101: #{tpu_custom_call.1} parent=27 // pred_check
          _
        $region102: #{tpu_custom_call.1} parent=27 // pred_check_branch
          %577 = sbr.rel target = $region104
        $region103: #{tpu_custom_call.1} parent=27 // pred_region
          %578 = sst [smem:[#allocation10]] [#allocation47]
          %579 = sst [smem:[#allocation11]] [#allocation46]
        $region104: #{tpu_custom_call.1} parent=27 // pred_fallthru
          _
        %581 = shalt.err (0)
        %s583 = sshll.u32 %s231, 4
        %s584 = int_to_ptr.vmem [resolvable:$true] %s583
        %586 = dma.hbm_to_vmem [thread:$0]  %s575, 16, %s584, %s232
        %s587 = sadd.s32 %s245, 2
        %s588 = sld [smem:[#allocation5 + %s587]]
        %s589 = sadd.s32 %s189, %s588
        %s590 = smul.addr %s589, 16
        %s591 = scalar_lea.hbm %s3, %s590
        // Predicated region
        $region105: #{tpu_custom_call.1} parent=27 // pred_check
          _
        $region106: #{tpu_custom_call.1} parent=27 // pred_check_branch
          %593 = sbr.rel target = $region108
        $region107: #{tpu_custom_call.1} parent=27 // pred_region
          %594 = sst [smem:[#allocation10]] [#allocation49]
          %595 = sst [smem:[#allocation11]] [#allocation48]
        $region108: #{tpu_custom_call.1} parent=27 // pred_fallthru
          _
        %597 = shalt.err (0)
        %s599 = sshll.u32 %s250, 4
        %s600 = int_to_ptr.vmem [resolvable:$true] %s599
        %602 = dma.hbm_to_vmem [thread:$0]  %s591, 16, %s600, %s251
        %s603 = sadd.s32 %s264, 2
        %s604 = sld [smem:[#allocation5 + %s603]]
        %s605 = sadd.s32 %s189, %s604
        %s606 = smul.addr %s605, 16
        %s607 = scalar_lea.hbm %s3, %s606
        // Predicated region
        $region109: #{tpu_custom_call.1} parent=27 // pred_check
          _
        $region110: #{tpu_custom_call.1} parent=27 // pred_check_branch
          %609 = sbr.rel target = $region112
        $region111: #{tpu_custom_call.1} parent=27 // pred_region
          %610 = sst [smem:[#allocation10]] [#allocation51]
          %611 = sst [smem:[#allocation11]] [#allocation50]
        $region112: #{tpu_custom_call.1} parent=27 // pred_fallthru
          _
        %613 = shalt.err (0)
        %s615 = sshll.u32 %s269, 4
        %s616 = int_to_ptr.vmem [resolvable:$true] %s615
        %618 = dma.hbm_to_vmem [thread:$0]  %s607, 16, %s616, %s270
        %s619 = sadd.s32 %s283, 2
        %s620 = sld [smem:[#allocation5 + %s619]]
        %s621 = sadd.s32 %s189, %s620
        %s622 = smul.addr %s621, 16
        %s623 = scalar_lea.hbm %s3, %s622
        // Predicated region
        $region113: #{tpu_custom_call.1} parent=27 // pred_check
          _
        $region114: #{tpu_custom_call.1} parent=27 // pred_check_branch
          %625 = sbr.rel target = $region116
        $region115: #{tpu_custom_call.1} parent=27 // pred_region
          %626 = sst [smem:[#allocation10]] [#allocation53]
          %627 = sst [smem:[#allocation11]] [#allocation52]
        $region116: #{tpu_custom_call.1} parent=27 // pred_fallthru
          _
        %629 = shalt.err (0)
        %s631 = sshll.u32 %s288, 4
        %s632 = int_to_ptr.vmem [resolvable:$true] %s631
        %634 = dma.hbm_to_vmem [thread:$0]  %s623, 16, %s632, %s289
        %s635 = sadd.s32 %s302, 2
        %s636 = sld [smem:[#allocation5 + %s635]]
        %s637 = sadd.s32 %s189, %s636
        %s638 = smul.addr %s637, 16
        %s639 = scalar_lea.hbm %s3, %s638
        // Predicated region
        $region117: #{tpu_custom_call.1} parent=27 // pred_check
          _
        $region118: #{tpu_custom_call.1} parent=27 // pred_check_branch
          %641 = sbr.rel target = $region120
        $region119: #{tpu_custom_call.1} parent=27 // pred_region
          %642 = sst [smem:[#allocation10]] [#allocation55]
          %643 = sst [smem:[#allocation11]] [#allocation54]
        $region120: #{tpu_custom_call.1} parent=27 // pred_fallthru
          _
        %645 = shalt.err (0)
        %s647 = sshll.u32 %s307, 4
        %s648 = int_to_ptr.vmem [resolvable:$true] %s647
        %650 = dma.hbm_to_vmem [thread:$0]  %s639, 16, %s648, %s308
        %s651 = sadd.s32 %s321, 2
        %s652 = sld [smem:[#allocation5 + %s651]]
        %s653 = sadd.s32 %s189, %s652
        %s654 = smul.addr %s653, 16
        %s655 = scalar_lea.hbm %s3, %s654
        // Predicated region
        $region121: #{tpu_custom_call.1} parent=27 // pred_check
          _
        $region122: #{tpu_custom_call.1} parent=27 // pred_check_branch
          %657 = sbr.rel target = $region124
        $region123: #{tpu_custom_call.1} parent=27 // pred_region
          %658 = sst [smem:[#allocation10]] [#allocation57]
          %659 = sst [smem:[#allocation11]] [#allocation56]
        $region124: #{tpu_custom_call.1} parent=27 // pred_fallthru
          _
        %661 = shalt.err (0)
        %s663 = sshll.u32 %s326, 4
        %s664 = int_to_ptr.vmem [resolvable:$true] %s663
        %666 = dma.hbm_to_vmem [thread:$0]  %s655, 16, %s664, %s327
        %v667 = vld [vmem:[%s376] sm:$0xff]
        %668 = vset.pattern.permute.xlu0 1
        %669 = vperm.xlu0 %668, %v353
        %v670 = vpop.permute.xlu0 %669
        %v672 = vmul.f32 %v670, %v667
        %v673 = vadd.f32 %v522, %v672
        %s674 = sshll.u32 %s354, 4
        %675 = dma.done [#allocation3], %s674
        %s676 = sshll.u32 %s354, 4
        %677 = dma.done %s213, %s676
        %s678 = sshll.u32 %s354, 4
        %679 = dma.done %s232, %s678
        %s680 = sshll.u32 %s354, 4
        %681 = dma.done %s251, %s680
        %s682 = sshll.u32 %s354, 4
        %683 = dma.done %s270, %s682
        %s684 = sshll.u32 %s354, 4
        %685 = dma.done %s289, %s684
        %s686 = sshll.u32 %s354, 4
        %687 = dma.done %s308, %s686
        %s688 = sshll.u32 %s354, 4
        %689 = dma.done %s327, %s688
        %s690 = sadd.s32 %s190, 3
        %s691 = sld [smem:[#allocation5 + %s690]]
        %s692 = sadd.s32 %s189, %s691
        %s693 = smul.addr %s692, 16
        %s694 = scalar_lea.hbm %s3, %s693
        // Predicated region
        $region125: #{tpu_custom_call.1} parent=27 // pred_check
          _
        $region126: #{tpu_custom_call.1} parent=27 // pred_check_branch
          %696 = sbr.rel target = $region128
        $region127: #{tpu_custom_call.1} parent=27 // pred_region
          %697 = sst [smem:[#allocation10]] [#allocation59]
          %698 = sst [smem:[#allocation11]] [#allocation58]
        $region128: #{tpu_custom_call.1} parent=27 // pred_fallthru
          _
        %700 = shalt.err (0)
        %s702 = sshll.u32 %s376, 4
        %s703 = int_to_ptr.vmem [resolvable:$true] %s702
        %705 = dma.hbm_to_vmem [thread:$0]  %s694, 16, %s703, %s377
        %s706 = sadd.s32 %s207, 3
        %s707 = sld [smem:[#allocation5 + %s706]]
        %s708 = sadd.s32 %s189, %s707
        %s709 = smul.addr %s708, 16
        %s710 = scalar_lea.hbm %s3, %s709
        // Predicated region
        $region129: #{tpu_custom_call.1} parent=27 // pred_check
          _
        $region130: #{tpu_custom_call.1} parent=27 // pred_check_branch
          %712 = sbr.rel target = $region132
        $region131: #{tpu_custom_call.1} parent=27 // pred_region
          %713 = sst [smem:[#allocation10]] [#allocation61]
          %714 = sst [smem:[#allocation11]] [#allocation60]
        $region132: #{tpu_custom_call.1} parent=27 // pred_fallthru
          _
        %716 = shalt.err (0)
        %s718 = sshll.u32 %s394, 4
        %s719 = int_to_ptr.vmem [resolvable:$true] %s718
        %721 = dma.hbm_to_vmem [thread:$0]  %s710, 16, %s719, %s395
        %s722 = sadd.s32 %s226, 3
        %s723 = sld [smem:[#allocation5 + %s722]]
        %s724 = sadd.s32 %s189, %s723
        %s725 = smul.addr %s724, 16
        %s726 = scalar_lea.hbm %s3, %s725
        // Predicated region
        $region133: #{tpu_custom_call.1} parent=27 // pred_check
          _
        $region134: #{tpu_custom_call.1} parent=27 // pred_check_branch
          %728 = sbr.rel target = $region136
        $region135: #{tpu_custom_call.1} parent=27 // pred_region
          %729 = sst [smem:[#allocation10]] [#allocation63]
          %730 = sst [smem:[#allocation11]] [#allocation62]
        $region136: #{tpu_custom_call.1} parent=27 // pred_fallthru
          _
        %732 = shalt.err (0)
        %s734 = sshll.u32 %s412, 4
        %s735 = int_to_ptr.vmem [resolvable:$true] %s734
        %737 = dma.hbm_to_vmem [thread:$0]  %s726, 16, %s735, %s413
        %s738 = sadd.s32 %s245, 3
        %s739 = sld [smem:[#allocation5 + %s738]]
        %s740 = sadd.s32 %s189, %s739
        %s741 = smul.addr %s740, 16
        %s742 = scalar_lea.hbm %s3, %s741
        // Predicated region
        $region137: #{tpu_custom_call.1} parent=27 // pred_check
          _
        $region138: #{tpu_custom_call.1} parent=27 // pred_check_branch
          %744 = sbr.rel target = $region140
        $region139: #{tpu_custom_call.1} parent=27 // pred_region
          %745 = sst [smem:[#allocation10]] [#allocation65]
          %746 = sst [smem:[#allocation11]] [#allocation64]
        $region140: #{tpu_custom_call.1} parent=27 // pred_fallthru
          _
        %748 = shalt.err (0)
        %s750 = sshll.u32 %s430, 4
        %s751 = int_to_ptr.vmem [resolvable:$true] %s750
        %753 = dma.hbm_to_vmem [thread:$0]  %s742, 16, %s751, %s431
        %s754 = sadd.s32 %s264, 3
        %s755 = sld [smem:[#allocation5 + %s754]]
        %s756 = sadd.s32 %s189, %s755
        %s757 = smul.addr %s756, 16
        %s758 = scalar_lea.hbm %s3, %s757
        // Predicated region
        $region141: #{tpu_custom_call.1} parent=27 // pred_check
          _
        $region142: #{tpu_custom_call.1} parent=27 // pred_check_branch
          %760 = sbr.rel target = $region144
        $region143: #{tpu_custom_call.1} parent=27 // pred_region
          %761 = sst [smem:[#allocation10]] [#allocation67]
          %762 = sst [smem:[#allocation11]] [#allocation66]
        $region144: #{tpu_custom_call.1} parent=27 // pred_fallthru
          _
        %764 = shalt.err (0)
        %s766 = sshll.u32 %s448, 4
        %s767 = int_to_ptr.vmem [resolvable:$true] %s766
        %769 = dma.hbm_to_vmem [thread:$0]  %s758, 16, %s767, %s449
        %s770 = sadd.s32 %s283, 3
        %s771 = sld [smem:[#allocation5 + %s770]]
        %s772 = sadd.s32 %s189, %s771
        %s773 = smul.addr %s772, 16
        %s774 = scalar_lea.hbm %s3, %s773
        // Predicated region
        $region145: #{tpu_custom_call.1} parent=27 // pred_check
          _
        $region146: #{tpu_custom_call.1} parent=27 // pred_check_branch
          %776 = sbr.rel target = $region148
        $region147: #{tpu_custom_call.1} parent=27 // pred_region
          %777 = sst [smem:[#allocation10]] [#allocation69]
          %778 = sst [smem:[#allocation11]] [#allocation68]
        $region148: #{tpu_custom_call.1} parent=27 // pred_fallthru
          _
        %780 = shalt.err (0)
        %s782 = sshll.u32 %s466, 4
        %s783 = int_to_ptr.vmem [resolvable:$true] %s782
        %785 = dma.hbm_to_vmem [thread:$0]  %s774, 16, %s783, %s467
        %s786 = sadd.s32 %s302, 3
        %s787 = sld [smem:[#allocation5 + %s786]]
        %s788 = sadd.s32 %s189, %s787
        %s789 = smul.addr %s788, 16
        %s790 = scalar_lea.hbm %s3, %s789
        // Predicated region
        $region149: #{tpu_custom_call.1} parent=27 // pred_check
          _
        $region150: #{tpu_custom_call.1} parent=27 // pred_check_branch
          %792 = sbr.rel target = $region152
        $region151: #{tpu_custom_call.1} parent=27 // pred_region
          %793 = sst [smem:[#allocation10]] [#allocation71]
          %794 = sst [smem:[#allocation11]] [#allocation70]
        $region152: #{tpu_custom_call.1} parent=27 // pred_fallthru
          _
        %796 = shalt.err (0)
        %s798 = sshll.u32 %s484, 4
        %s799 = int_to_ptr.vmem [resolvable:$true] %s798
        %801 = dma.hbm_to_vmem [thread:$0]  %s790, 16, %s799, %s485
        %s802 = sadd.s32 %s321, 3
        %s803 = sld [smem:[#allocation5 + %s802]]
        %s804 = sadd.s32 %s189, %s803
        %s805 = smul.addr %s804, 16
        %s806 = scalar_lea.hbm %s3, %s805
        // Predicated region
        $region153: #{tpu_custom_call.1} parent=27 // pred_check
          _
        $region154: #{tpu_custom_call.1} parent=27 // pred_check_branch
          %808 = sbr.rel target = $region156
        $region155: #{tpu_custom_call.1} parent=27 // pred_region
          %809 = sst [smem:[#allocation10]] [#allocation73]
          %810 = sst [smem:[#allocation11]] [#allocation72]
        $region156: #{tpu_custom_call.1} parent=27 // pred_fallthru
          _
        %812 = shalt.err (0)
        %s814 = sshll.u32 %s502, 4
        %s815 = int_to_ptr.vmem [resolvable:$true] %s814
        %817 = dma.hbm_to_vmem [thread:$0]  %s806, 16, %s815, %s503
        %v818 = vld [vmem:[#allocation2] sm:$0xff]
        %819 = vset.pattern.permute.xlu0 2
        %820 = vperm.xlu0 %819, %v353
        %v821 = vpop.permute.xlu0 %820
        %v823 = vmul.f32 %v821, %v818
        %v824 = vadd.f32 %v673, %v823
        %s825 = sshll.u32 %s354, 4
        %826 = dma.done %s377, %s825
        %s827 = sshll.u32 %s354, 4
        %828 = dma.done %s395, %s827
        %s829 = sshll.u32 %s354, 4
        %830 = dma.done %s413, %s829
        %s831 = sshll.u32 %s354, 4
        %832 = dma.done %s431, %s831
        %s833 = sshll.u32 %s354, 4
        %834 = dma.done %s449, %s833
        %s835 = sshll.u32 %s354, 4
        %836 = dma.done %s467, %s835
        %s837 = sshll.u32 %s354, 4
        %838 = dma.done %s485, %s837
        %s839 = sshll.u32 %s354, 4
        %840 = dma.done %s503, %s839
        %s841 = sadd.s32 %s190, 4
        %s842 = sld [smem:[#allocation5 + %s841]]
        %s843 = sadd.s32 %s189, %s842
        %s844 = smul.addr %s843, 16
        %s845 = scalar_lea.hbm %s3, %s844
        // Predicated region
        $region157: #{tpu_custom_call.1} parent=27 // pred_check
          _
        $region158: #{tpu_custom_call.1} parent=27 // pred_check_branch
          %847 = sbr.rel target = $region160
        $region159: #{tpu_custom_call.1} parent=27 // pred_region
          %848 = sst [smem:[#allocation10]] [#allocation75]
          %849 = sst [smem:[#allocation11]] [#allocation74]
        $region160: #{tpu_custom_call.1} parent=27 // pred_fallthru
          _
        %851 = shalt.err (0)
        %s853 = sshll.u32 [#allocation2], 4
        %s854 = int_to_ptr.vmem [resolvable:$true] %s853
        %856 = dma.hbm_to_vmem [thread:$0]  %s845, 16, %s854, [#allocation3]
        %s857 = sadd.s32 %s207, 4
        %s858 = sld [smem:[#allocation5 + %s857]]
        %s859 = sadd.s32 %s189, %s858
        %s860 = smul.addr %s859, 16
        %s861 = scalar_lea.hbm %s3, %s860
        // Predicated region
        $region161: #{tpu_custom_call.1} parent=27 // pred_check
          _
        $region162: #{tpu_custom_call.1} parent=27 // pred_check_branch
          %863 = sbr.rel target = $region164
        $region163: #{tpu_custom_call.1} parent=27 // pred_region
          %864 = sst [smem:[#allocation10]] [#allocation77]
          %865 = sst [smem:[#allocation11]] [#allocation76]
        $region164: #{tpu_custom_call.1} parent=27 // pred_fallthru
          _
        %867 = shalt.err (0)
        %s869 = sshll.u32 %s212, 4
        %s870 = int_to_ptr.vmem [resolvable:$true] %s869
        %872 = dma.hbm_to_vmem [thread:$0]  %s861, 16, %s870, %s213
        %s873 = sadd.s32 %s226, 4
        %s874 = sld [smem:[#allocation5 + %s873]]
        %s875 = sadd.s32 %s189, %s874
        %s876 = smul.addr %s875, 16
        %s877 = scalar_lea.hbm %s3, %s876
        // Predicated region
        $region165: #{tpu_custom_call.1} parent=27 // pred_check
          _
        $region166: #{tpu_custom_call.1} parent=27 // pred_check_branch
          %879 = sbr.rel target = $region168
        $region167: #{tpu_custom_call.1} parent=27 // pred_region
          %880 = sst [smem:[#allocation10]] [#allocation79]
          %881 = sst [smem:[#allocation11]] [#allocation78]
        $region168: #{tpu_custom_call.1} parent=27 // pred_fallthru
          _
        %883 = shalt.err (0)
        %s885 = sshll.u32 %s231, 4
        %s886 = int_to_ptr.vmem [resolvable:$true] %s885
        %888 = dma.hbm_to_vmem [thread:$0]  %s877, 16, %s886, %s232
        %s889 = sadd.s32 %s245, 4
        %s890 = sld [smem:[#allocation5 + %s889]]
        %s891 = sadd.s32 %s189, %s890
        %s892 = smul.addr %s891, 16
        %s893 = scalar_lea.hbm %s3, %s892
        // Predicated region
        $region169: #{tpu_custom_call.1} parent=27 // pred_check
          _
        $region170: #{tpu_custom_call.1} parent=27 // pred_check_branch
          %895 = sbr.rel target = $region172
        $region171: #{tpu_custom_call.1} parent=27 // pred_region
          %896 = sst [smem:[#allocation10]] [#allocation81]
          %897 = sst [smem:[#allocation11]] [#allocation80]
        $region172: #{tpu_custom_call.1} parent=27 // pred_fallthru
          _
        %899 = shalt.err (0)
        %s901 = sshll.u32 %s250, 4
        %s902 = int_to_ptr.vmem [resolvable:$true] %s901
        %904 = dma.hbm_to_vmem [thread:$0]  %s893, 16, %s902, %s251
        %s905 = sadd.s32 %s264, 4
        %s906 = sld [smem:[#allocation5 + %s905]]
        %s907 = sadd.s32 %s189, %s906
        %s908 = smul.addr %s907, 16
        %s909 = scalar_lea.hbm %s3, %s908
        // Predicated region
        $region173: #{tpu_custom_call.1} parent=27 // pred_check
          _
        $region174: #{tpu_custom_call.1} parent=27 // pred_check_branch
          %911 = sbr.rel target = $region176
        $region175: #{tpu_custom_call.1} parent=27 // pred_region
          %912 = sst [smem:[#allocation10]] [#allocation83]
          %913 = sst [smem:[#allocation11]] [#allocation82]
        $region176: #{tpu_custom_call.1} parent=27 // pred_fallthru
          _
        %915 = shalt.err (0)
        %s917 = sshll.u32 %s269, 4
        %s918 = int_to_ptr.vmem [resolvable:$true] %s917
        %920 = dma.hbm_to_vmem [thread:$0]  %s909, 16, %s918, %s270
        %s921 = sadd.s32 %s283, 4
        %s922 = sld [smem:[#allocation5 + %s921]]
        %s923 = sadd.s32 %s189, %s922
        %s924 = smul.addr %s923, 16
        %s925 = scalar_lea.hbm %s3, %s924
        // Predicated region
        $region177: #{tpu_custom_call.1} parent=27 // pred_check
          _
        $region178: #{tpu_custom_call.1} parent=27 // pred_check_branch
          %927 = sbr.rel target = $region180
        $region179: #{tpu_custom_call.1} parent=27 // pred_region
          %928 = sst [smem:[#allocation10]] [#allocation85]
          %929 = sst [smem:[#allocation11]] [#allocation84]
        $region180: #{tpu_custom_call.1} parent=27 // pred_fallthru
          _
        %931 = shalt.err (0)
        %s933 = sshll.u32 %s288, 4
        %s934 = int_to_ptr.vmem [resolvable:$true] %s933
        %936 = dma.hbm_to_vmem [thread:$0]  %s925, 16, %s934, %s289
        %s937 = sadd.s32 %s302, 4
        %s938 = sld [smem:[#allocation5 + %s937]]
        %s939 = sadd.s32 %s189, %s938
        %s940 = smul.addr %s939, 16
        %s941 = scalar_lea.hbm %s3, %s940
        // Predicated region
        $region181: #{tpu_custom_call.1} parent=27 // pred_check
          _
        $region182: #{tpu_custom_call.1} parent=27 // pred_check_branch
          %943 = sbr.rel target = $region184
        $region183: #{tpu_custom_call.1} parent=27 // pred_region
          %944 = sst [smem:[#allocation10]] [#allocation87]
          %945 = sst [smem:[#allocation11]] [#allocation86]
        $region184: #{tpu_custom_call.1} parent=27 // pred_fallthru
          _
        %947 = shalt.err (0)
        %s949 = sshll.u32 %s307, 4
        %s950 = int_to_ptr.vmem [resolvable:$true] %s949
        %952 = dma.hbm_to_vmem [thread:$0]  %s941, 16, %s950, %s308
        %s953 = sadd.s32 %s321, 4
        %s954 = sld [smem:[#allocation5 + %s953]]
        %s955 = sadd.s32 %s189, %s954
        %s956 = smul.addr %s955, 16
        %s957 = scalar_lea.hbm %s3, %s956
        // Predicated region
        $region185: #{tpu_custom_call.1} parent=27 // pred_check
          _
        $region186: #{tpu_custom_call.1} parent=27 // pred_check_branch
          %959 = sbr.rel target = $region188
        $region187: #{tpu_custom_call.1} parent=27 // pred_region
          %960 = sst [smem:[#allocation10]] [#allocation89]
          %961 = sst [smem:[#allocation11]] [#allocation88]
        $region188: #{tpu_custom_call.1} parent=27 // pred_fallthru
          _
        %963 = shalt.err (0)
        %s965 = sshll.u32 %s326, 4
        %s966 = int_to_ptr.vmem [resolvable:$true] %s965
        %968 = dma.hbm_to_vmem [thread:$0]  %s957, 16, %s966, %s327
        %v969 = vld [vmem:[%s376] sm:$0xff]
        %970 = vset.pattern.permute.xlu0 3
        %971 = vperm.xlu0 %970, %v353
        %v972 = vpop.permute.xlu0 %971
        %v974 = vmul.f32 %v972, %v969
        %v975 = vadd.f32 %v824, %v974
        %s976 = sshll.u32 %s354, 4
        %977 = dma.done [#allocation3], %s976
        %s978 = sshll.u32 %s354, 4
        %979 = dma.done %s213, %s978
        %s980 = sshll.u32 %s354, 4
        %981 = dma.done %s232, %s980
        %s982 = sshll.u32 %s354, 4
        %983 = dma.done %s251, %s982
        %s984 = sshll.u32 %s354, 4
        %985 = dma.done %s270, %s984
        %s986 = sshll.u32 %s354, 4
        %987 = dma.done %s289, %s986
        %s988 = sshll.u32 %s354, 4
        %989 = dma.done %s308, %s988
        %s990 = sshll.u32 %s354, 4
        %991 = dma.done %s327, %s990
        %s992 = sadd.s32 %s190, 5
        %s993 = sld [smem:[#allocation5 + %s992]]
        %s994 = sadd.s32 %s189, %s993
        %s995 = smul.addr %s994, 16
        %s996 = scalar_lea.hbm %s3, %s995
        // Predicated region
        $region189: #{tpu_custom_call.1} parent=27 // pred_check
          _
        $region190: #{tpu_custom_call.1} parent=27 // pred_check_branch
          %998 = sbr.rel target = $region192
        $region191: #{tpu_custom_call.1} parent=27 // pred_region
          %999 = sst [smem:[#allocation10]] [#allocation91]
          %1000 = sst [smem:[#allocation11]] [#allocation90]
        $region192: #{tpu_custom_call.1} parent=27 // pred_fallthru
          _
        %1002 = shalt.err (0)
        %s1004 = sshll.u32 %s376, 4
        %s1005 = int_to_ptr.vmem [resolvable:$true] %s1004
        %1007 = dma.hbm_to_vmem [thread:$0]  %s996, 16, %s1005, %s377
        %s1008 = sadd.s32 %s207, 5
        %s1009 = sld [smem:[#allocation5 + %s1008]]
        %s1010 = sadd.s32 %s189, %s1009
        %s1011 = smul.addr %s1010, 16
        %s1012 = scalar_lea.hbm %s3, %s1011
        // Predicated region
        $region193: #{tpu_custom_call.1} parent=27 // pred_check
          _
        $region194: #{tpu_custom_call.1} parent=27 // pred_check_branch
          %1014 = sbr.rel target = $region196
        $region195: #{tpu_custom_call.1} parent=27 // pred_region
          %1015 = sst [smem:[#allocation10]] [#allocation93]
          %1016 = sst [smem:[#allocation11]] [#allocation92]
        $region196: #{tpu_custom_call.1} parent=27 // pred_fallthru
          _
        %1018 = shalt.err (0)
        %s1020 = sshll.u32 %s394, 4
        %s1021 = int_to_ptr.vmem [resolvable:$true] %s1020
        %1023 = dma.hbm_to_vmem [thread:$0]  %s1012, 16, %s1021, %s395
        %s1024 = sadd.s32 %s226, 5
        %s1025 = sld [smem:[#allocation5 + %s1024]]
        %s1026 = sadd.s32 %s189, %s1025
        %s1027 = smul.addr %s1026, 16
        %s1028 = scalar_lea.hbm %s3, %s1027
        // Predicated region
        $region197: #{tpu_custom_call.1} parent=27 // pred_check
          _
        $region198: #{tpu_custom_call.1} parent=27 // pred_check_branch
          %1030 = sbr.rel target = $region200
        $region199: #{tpu_custom_call.1} parent=27 // pred_region
          %1031 = sst [smem:[#allocation10]] [#allocation95]
          %1032 = sst [smem:[#allocation11]] [#allocation94]
        $region200: #{tpu_custom_call.1} parent=27 // pred_fallthru
          _
        %1034 = shalt.err (0)
        %s1036 = sshll.u32 %s412, 4
        %s1037 = int_to_ptr.vmem [resolvable:$true] %s1036
        %1039 = dma.hbm_to_vmem [thread:$0]  %s1028, 16, %s1037, %s413
        %s1040 = sadd.s32 %s245, 5
        %s1041 = sld [smem:[#allocation5 + %s1040]]
        %s1042 = sadd.s32 %s189, %s1041
        %s1043 = smul.addr %s1042, 16
        %s1044 = scalar_lea.hbm %s3, %s1043
        // Predicated region
        $region201: #{tpu_custom_call.1} parent=27 // pred_check
          _
        $region202: #{tpu_custom_call.1} parent=27 // pred_check_branch
          %1046 = sbr.rel target = $region204
        $region203: #{tpu_custom_call.1} parent=27 // pred_region
          %1047 = sst [smem:[#allocation10]] [#allocation97]
          %1048 = sst [smem:[#allocation11]] [#allocation96]
        $region204: #{tpu_custom_call.1} parent=27 // pred_fallthru
          _
        %1050 = shalt.err (0)
        %s1052 = sshll.u32 %s430, 4
        %s1053 = int_to_ptr.vmem [resolvable:$true] %s1052
        %1055 = dma.hbm_to_vmem [thread:$0]  %s1044, 16, %s1053, %s431
        %s1056 = sadd.s32 %s264, 5
        %s1057 = sld [smem:[#allocation5 + %s1056]]
        %s1058 = sadd.s32 %s189, %s1057
        %s1059 = smul.addr %s1058, 16
        %s1060 = scalar_lea.hbm %s3, %s1059
        // Predicated region
        $region205: #{tpu_custom_call.1} parent=27 // pred_check
          _
        $region206: #{tpu_custom_call.1} parent=27 // pred_check_branch
          %1062 = sbr.rel target = $region208
        $region207: #{tpu_custom_call.1} parent=27 // pred_region
          %1063 = sst [smem:[#allocation10]] [#allocation99]
          %1064 = sst [smem:[#allocation11]] [#allocation98]
        $region208: #{tpu_custom_call.1} parent=27 // pred_fallthru
          _
        %1066 = shalt.err (0)
        %s1068 = sshll.u32 %s448, 4
        %s1069 = int_to_ptr.vmem [resolvable:$true] %s1068
        %1071 = dma.hbm_to_vmem [thread:$0]  %s1060, 16, %s1069, %s449
        %s1072 = sadd.s32 %s283, 5
        %s1073 = sld [smem:[#allocation5 + %s1072]]
        %s1074 = sadd.s32 %s189, %s1073
        %s1075 = smul.addr %s1074, 16
        %s1076 = scalar_lea.hbm %s3, %s1075
        // Predicated region
        $region209: #{tpu_custom_call.1} parent=27 // pred_check
          _
        $region210: #{tpu_custom_call.1} parent=27 // pred_check_branch
          %1078 = sbr.rel target = $region212
        $region211: #{tpu_custom_call.1} parent=27 // pred_region
          %1079 = sst [smem:[#allocation10]] [#allocation101]
          %1080 = sst [smem:[#allocation11]] [#allocation100]
        $region212: #{tpu_custom_call.1} parent=27 // pred_fallthru
          _
        %1082 = shalt.err (0)
        %s1084 = sshll.u32 %s466, 4
        %s1085 = int_to_ptr.vmem [resolvable:$true] %s1084
        %1087 = dma.hbm_to_vmem [thread:$0]  %s1076, 16, %s1085, %s467
        %s1088 = sadd.s32 %s302, 5
        %s1089 = sld [smem:[#allocation5 + %s1088]]
        %s1090 = sadd.s32 %s189, %s1089
        %s1091 = smul.addr %s1090, 16
        %s1092 = scalar_lea.hbm %s3, %s1091
        // Predicated region
        $region213: #{tpu_custom_call.1} parent=27 // pred_check
          _
        $region214: #{tpu_custom_call.1} parent=27 // pred_check_branch
          %1094 = sbr.rel target = $region216
        $region215: #{tpu_custom_call.1} parent=27 // pred_region
          %1095 = sst [smem:[#allocation10]] [#allocation103]
          %1096 = sst [smem:[#allocation11]] [#allocation102]
        $region216: #{tpu_custom_call.1} parent=27 // pred_fallthru
          _
        %1098 = shalt.err (0)
        %s1100 = sshll.u32 %s484, 4
        %s1101 = int_to_ptr.vmem [resolvable:$true] %s1100
        %1103 = dma.hbm_to_vmem [thread:$0]  %s1092, 16, %s1101, %s485
        %s1104 = sadd.s32 %s321, 5
        %s1105 = sld [smem:[#allocation5 + %s1104]]
        %s1106 = sadd.s32 %s189, %s1105
        %s1107 = smul.addr %s1106, 16
        %s1108 = scalar_lea.hbm %s3, %s1107
        // Predicated region
        $region217: #{tpu_custom_call.1} parent=27 // pred_check
          _
        $region218: #{tpu_custom_call.1} parent=27 // pred_check_branch
          %1110 = sbr.rel target = $region220
        $region219: #{tpu_custom_call.1} parent=27 // pred_region
          %1111 = sst [smem:[#allocation10]] [#allocation105]
          %1112 = sst [smem:[#allocation11]] [#allocation104]
        $region220: #{tpu_custom_call.1} parent=27 // pred_fallthru
          _
        %1114 = shalt.err (0)
        %s1116 = sshll.u32 %s502, 4
        %s1117 = int_to_ptr.vmem [resolvable:$true] %s1116
        %1119 = dma.hbm_to_vmem [thread:$0]  %s1108, 16, %s1117, %s503
        %v1120 = vld [vmem:[#allocation2] sm:$0xff]
        %1121 = vset.pattern.permute.xlu0 4
        %1122 = vperm.xlu0 %1121, %v353
        %v1123 = vpop.permute.xlu0 %1122
        %v1125 = vmul.f32 %v1123, %v1120
        %v1126 = vadd.f32 %v975, %v1125
        %s1127 = sshll.u32 %s354, 4
        %1128 = dma.done %s377, %s1127
        %s1129 = sshll.u32 %s354, 4
        %1130 = dma.done %s395, %s1129
        %s1131 = sshll.u32 %s354, 4
        %1132 = dma.done %s413, %s1131
        %s1133 = sshll.u32 %s354, 4
        %1134 = dma.done %s431, %s1133
        %s1135 = sshll.u32 %s354, 4
        %1136 = dma.done %s449, %s1135
        %s1137 = sshll.u32 %s354, 4
        %1138 = dma.done %s467, %s1137
        %s1139 = sshll.u32 %s354, 4
        %1140 = dma.done %s485, %s1139
        %s1141 = sshll.u32 %s354, 4
        %1142 = dma.done %s503, %s1141
        %s1143 = sadd.s32 %s190, 6
        %s1144 = sld [smem:[#allocation5 + %s1143]]
        %s1145 = sadd.s32 %s189, %s1144
        %s1146 = smul.addr %s1145, 16
        %s1147 = scalar_lea.hbm %s3, %s1146
        // Predicated region
        $region221: #{tpu_custom_call.1} parent=27 // pred_check
          _
        $region222: #{tpu_custom_call.1} parent=27 // pred_check_branch
          %1149 = sbr.rel target = $region224
        $region223: #{tpu_custom_call.1} parent=27 // pred_region
          %1150 = sst [smem:[#allocation10]] [#allocation107]
          %1151 = sst [smem:[#allocation11]] [#allocation106]
        $region224: #{tpu_custom_call.1} parent=27 // pred_fallthru
          _
        %1153 = shalt.err (0)
        %s1155 = sshll.u32 [#allocation2], 4
        %s1156 = int_to_ptr.vmem [resolvable:$true] %s1155
        %1158 = dma.hbm_to_vmem [thread:$0]  %s1147, 16, %s1156, [#allocation3]
        %s1159 = sadd.s32 %s207, 6
        %s1160 = sld [smem:[#allocation5 + %s1159]]
        %s1161 = sadd.s32 %s189, %s1160
        %s1162 = smul.addr %s1161, 16
        %s1163 = scalar_lea.hbm %s3, %s1162
        // Predicated region
        $region225: #{tpu_custom_call.1} parent=27 // pred_check
          _
        $region226: #{tpu_custom_call.1} parent=27 // pred_check_branch
          %1165 = sbr.rel target = $region228
        $region227: #{tpu_custom_call.1} parent=27 // pred_region
          %1166 = sst [smem:[#allocation10]] [#allocation109]
          %1167 = sst [smem:[#allocation11]] [#allocation108]
        $region228: #{tpu_custom_call.1} parent=27 // pred_fallthru
          _
        %1169 = shalt.err (0)
        %s1171 = sshll.u32 %s212, 4
        %s1172 = int_to_ptr.vmem [resolvable:$true] %s1171
        %1174 = dma.hbm_to_vmem [thread:$0]  %s1163, 16, %s1172, %s213
        %s1175 = sadd.s32 %s226, 6
        %s1176 = sld [smem:[#allocation5 + %s1175]]
        %s1177 = sadd.s32 %s189, %s1176
        %s1178 = smul.addr %s1177, 16
        %s1179 = scalar_lea.hbm %s3, %s1178
        // Predicated region
        $region229: #{tpu_custom_call.1} parent=27 // pred_check
          _
        $region230: #{tpu_custom_call.1} parent=27 // pred_check_branch
          %1181 = sbr.rel target = $region232
        $region231: #{tpu_custom_call.1} parent=27 // pred_region
          %1182 = sst [smem:[#allocation10]] [#allocation111]
          %1183 = sst [smem:[#allocation11]] [#allocation110]
        $region232: #{tpu_custom_call.1} parent=27 // pred_fallthru
          _
        %1185 = shalt.err (0)
        %s1187 = sshll.u32 %s231, 4
        %s1188 = int_to_ptr.vmem [resolvable:$true] %s1187
        %1190 = dma.hbm_to_vmem [thread:$0]  %s1179, 16, %s1188, %s232
        %s1191 = sadd.s32 %s245, 6
        %s1192 = sld [smem:[#allocation5 + %s1191]]
        %s1193 = sadd.s32 %s189, %s1192
        %s1194 = smul.addr %s1193, 16
        %s1195 = scalar_lea.hbm %s3, %s1194
        // Predicated region
        $region233: #{tpu_custom_call.1} parent=27 // pred_check
          _
        $region234: #{tpu_custom_call.1} parent=27 // pred_check_branch
          %1197 = sbr.rel target = $region236
        $region235: #{tpu_custom_call.1} parent=27 // pred_region
          %1198 = sst [smem:[#allocation10]] [#allocation113]
          %1199 = sst [smem:[#allocation11]] [#allocation112]
        $region236: #{tpu_custom_call.1} parent=27 // pred_fallthru
          _
        %1201 = shalt.err (0)
        %s1203 = sshll.u32 %s250, 4
        %s1204 = int_to_ptr.vmem [resolvable:$true] %s1203
        %1206 = dma.hbm_to_vmem [thread:$0]  %s1195, 16, %s1204, %s251
        %s1207 = sadd.s32 %s264, 6
        %s1208 = sld [smem:[#allocation5 + %s1207]]
        %s1209 = sadd.s32 %s189, %s1208
        %s1210 = smul.addr %s1209, 16
        %s1211 = scalar_lea.hbm %s3, %s1210
        // Predicated region
        $region237: #{tpu_custom_call.1} parent=27 // pred_check
          _
        $region238: #{tpu_custom_call.1} parent=27 // pred_check_branch
          %1213 = sbr.rel target = $region240
        $region239: #{tpu_custom_call.1} parent=27 // pred_region
          %1214 = sst [smem:[#allocation10]] [#allocation115]
          %1215 = sst [smem:[#allocation11]] [#allocation114]
        $region240: #{tpu_custom_call.1} parent=27 // pred_fallthru
          _
        %1217 = shalt.err (0)
        %s1219 = sshll.u32 %s269, 4
        %s1220 = int_to_ptr.vmem [resolvable:$true] %s1219
        %1222 = dma.hbm_to_vmem [thread:$0]  %s1211, 16, %s1220, %s270
        %s1223 = sadd.s32 %s283, 6
        %s1224 = sld [smem:[#allocation5 + %s1223]]
        %s1225 = sadd.s32 %s189, %s1224
        %s1226 = smul.addr %s1225, 16
        %s1227 = scalar_lea.hbm %s3, %s1226
        // Predicated region
        $region241: #{tpu_custom_call.1} parent=27 // pred_check
          _
        $region242: #{tpu_custom_call.1} parent=27 // pred_check_branch
          %1229 = sbr.rel target = $region244
        $region243: #{tpu_custom_call.1} parent=27 // pred_region
          %1230 = sst [smem:[#allocation10]] [#allocation117]
          %1231 = sst [smem:[#allocation11]] [#allocation116]
        $region244: #{tpu_custom_call.1} parent=27 // pred_fallthru
          _
        %1233 = shalt.err (0)
        %s1235 = sshll.u32 %s288, 4
        %s1236 = int_to_ptr.vmem [resolvable:$true] %s1235
        %1238 = dma.hbm_to_vmem [thread:$0]  %s1227, 16, %s1236, %s289
        %s1239 = sadd.s32 %s302, 6
        %s1240 = sld [smem:[#allocation5 + %s1239]]
        %s1241 = sadd.s32 %s189, %s1240
        %s1242 = smul.addr %s1241, 16
        %s1243 = scalar_lea.hbm %s3, %s1242
        // Predicated region
        $region245: #{tpu_custom_call.1} parent=27 // pred_check
          _
        $region246: #{tpu_custom_call.1} parent=27 // pred_check_branch
          %1245 = sbr.rel target = $region248
        $region247: #{tpu_custom_call.1} parent=27 // pred_region
          %1246 = sst [smem:[#allocation10]] [#allocation119]
          %1247 = sst [smem:[#allocation11]] [#allocation118]
        $region248: #{tpu_custom_call.1} parent=27 // pred_fallthru
          _
        %1249 = shalt.err (0)
        %s1251 = sshll.u32 %s307, 4
        %s1252 = int_to_ptr.vmem [resolvable:$true] %s1251
        %1254 = dma.hbm_to_vmem [thread:$0]  %s1243, 16, %s1252, %s308
        %s1255 = sadd.s32 %s321, 6
        %s1256 = sld [smem:[#allocation5 + %s1255]]
        %s1257 = sadd.s32 %s189, %s1256
        %s1258 = smul.addr %s1257, 16
        %s1259 = scalar_lea.hbm %s3, %s1258
        // Predicated region
        $region249: #{tpu_custom_call.1} parent=27 // pred_check
          _
        $region250: #{tpu_custom_call.1} parent=27 // pred_check_branch
          %1261 = sbr.rel target = $region252
        $region251: #{tpu_custom_call.1} parent=27 // pred_region
          %1262 = sst [smem:[#allocation10]] [#allocation121]
          %1263 = sst [smem:[#allocation11]] [#allocation120]
        $region252: #{tpu_custom_call.1} parent=27 // pred_fallthru
          _
        %1265 = shalt.err (0)
        %s1267 = sshll.u32 %s326, 4
        %s1268 = int_to_ptr.vmem [resolvable:$true] %s1267
        %1270 = dma.hbm_to_vmem [thread:$0]  %s1259, 16, %s1268, %s327
        %v1271 = vld [vmem:[%s376] sm:$0xff]
        %1272 = vset.pattern.permute.xlu0 5
        %1273 = vperm.xlu0 %1272, %v353
        %v1274 = vpop.permute.xlu0 %1273
        %v1276 = vmul.f32 %v1274, %v1271
        %v1277 = vadd.f32 %v1126, %v1276
        %s1278 = sshll.u32 %s354, 4
        %1279 = dma.done [#allocation3], %s1278
        %s1280 = sshll.u32 %s354, 4
        %1281 = dma.done %s213, %s1280
        %s1282 = sshll.u32 %s354, 4
        %1283 = dma.done %s232, %s1282
        %s1284 = sshll.u32 %s354, 4
        %1285 = dma.done %s251, %s1284
        %s1286 = sshll.u32 %s354, 4
        %1287 = dma.done %s270, %s1286
        %s1288 = sshll.u32 %s354, 4
        %1289 = dma.done %s289, %s1288
        %s1290 = sshll.u32 %s354, 4
        %1291 = dma.done %s308, %s1290
        %s1292 = sshll.u32 %s354, 4
        %1293 = dma.done %s327, %s1292
        %s1294 = sadd.s32 %s190, 7
        %s1295 = sld [smem:[#allocation5 + %s1294]]
        %s1296 = sadd.s32 %s189, %s1295
        %s1297 = smul.addr %s1296, 16
        %s1298 = scalar_lea.hbm %s3, %s1297
        // Predicated region
        $region253: #{tpu_custom_call.1} parent=27 // pred_check
          _
        $region254: #{tpu_custom_call.1} parent=27 // pred_check_branch
          %1300 = sbr.rel target = $region256
        $region255: #{tpu_custom_call.1} parent=27 // pred_region
          %1301 = sst [smem:[#allocation10]] [#allocation123]
          %1302 = sst [smem:[#allocation11]] [#allocation122]
        $region256: #{tpu_custom_call.1} parent=27 // pred_fallthru
          _
        %1304 = shalt.err (0)
        %s1306 = sshll.u32 %s376, 4
        %s1307 = int_to_ptr.vmem [resolvable:$true] %s1306
        %1309 = dma.hbm_to_vmem [thread:$0]  %s1298, 16, %s1307, %s377
        %s1310 = sadd.s32 %s207, 7
        %s1311 = sld [smem:[#allocation5 + %s1310]]
        %s1312 = sadd.s32 %s189, %s1311
        %s1313 = smul.addr %s1312, 16
        %s1314 = scalar_lea.hbm %s3, %s1313
        // Predicated region
        $region257: #{tpu_custom_call.1} parent=27 // pred_check
          _
        $region258: #{tpu_custom_call.1} parent=27 // pred_check_branch
          %1316 = sbr.rel target = $region260
        $region259: #{tpu_custom_call.1} parent=27 // pred_region
          %1317 = sst [smem:[#allocation10]] [#allocation125]
          %1318 = sst [smem:[#allocation11]] [#allocation124]
        $region260: #{tpu_custom_call.1} parent=27 // pred_fallthru
          _
        %1320 = shalt.err (0)
        %s1322 = sshll.u32 %s394, 4
        %s1323 = int_to_ptr.vmem [resolvable:$true] %s1322
        %1325 = dma.hbm_to_vmem [thread:$0]  %s1314, 16, %s1323, %s395
        %s1326 = sadd.s32 %s226, 7
        %s1327 = sld [smem:[#allocation5 + %s1326]]
        %s1328 = sadd.s32 %s189, %s1327
        %s1329 = smul.addr %s1328, 16
        %s1330 = scalar_lea.hbm %s3, %s1329
        // Predicated region
        $region261: #{tpu_custom_call.1} parent=27 // pred_check
          _
        $region262: #{tpu_custom_call.1} parent=27 // pred_check_branch
          %1332 = sbr.rel target = $region264
        $region263: #{tpu_custom_call.1} parent=27 // pred_region
          %1333 = sst [smem:[#allocation10]] [#allocation127]
          %1334 = sst [smem:[#allocation11]] [#allocation126]
        $region264: #{tpu_custom_call.1} parent=27 // pred_fallthru
          _
        %1336 = shalt.err (0)
        %s1338 = sshll.u32 %s412, 4
        %s1339 = int_to_ptr.vmem [resolvable:$true] %s1338
        %1341 = dma.hbm_to_vmem [thread:$0]  %s1330, 16, %s1339, %s413
        %s1342 = sadd.s32 %s245, 7
        %s1343 = sld [smem:[#allocation5 + %s1342]]
        %s1344 = sadd.s32 %s189, %s1343
        %s1345 = smul.addr %s1344, 16
        %s1346 = scalar_lea.hbm %s3, %s1345
        // Predicated region
        $region265: #{tpu_custom_call.1} parent=27 // pred_check
          _
        $region266: #{tpu_custom_call.1} parent=27 // pred_check_branch
          %1348 = sbr.rel target = $region268
        $region267: #{tpu_custom_call.1} parent=27 // pred_region
          %1349 = sst [smem:[#allocation10]] [#allocation129]
          %1350 = sst [smem:[#allocation11]] [#allocation128]
        $region268: #{tpu_custom_call.1} parent=27 // pred_fallthru
          _
        %1352 = shalt.err (0)
        %s1354 = sshll.u32 %s430, 4
        %s1355 = int_to_ptr.vmem [resolvable:$true] %s1354
        %1357 = dma.hbm_to_vmem [thread:$0]  %s1346, 16, %s1355, %s431
        %s1358 = sadd.s32 %s264, 7
        %s1359 = sld [smem:[#allocation5 + %s1358]]
        %s1360 = sadd.s32 %s189, %s1359
        %s1361 = smul.addr %s1360, 16
        %s1362 = scalar_lea.hbm %s3, %s1361
        // Predicated region
        $region269: #{tpu_custom_call.1} parent=27 // pred_check
          _
        $region270: #{tpu_custom_call.1} parent=27 // pred_check_branch
          %1364 = sbr.rel target = $region272
        $region271: #{tpu_custom_call.1} parent=27 // pred_region
          %1365 = sst [smem:[#allocation10]] [#allocation131]
          %1366 = sst [smem:[#allocation11]] [#allocation130]
        $region272: #{tpu_custom_call.1} parent=27 // pred_fallthru
          _
        %1368 = shalt.err (0)
        %s1370 = sshll.u32 %s448, 4
        %s1371 = int_to_ptr.vmem [resolvable:$true] %s1370
        %1373 = dma.hbm_to_vmem [thread:$0]  %s1362, 16, %s1371, %s449
        %s1374 = sadd.s32 %s283, 7
        %s1375 = sld [smem:[#allocation5 + %s1374]]
        %s1376 = sadd.s32 %s189, %s1375
        %s1377 = smul.addr %s1376, 16
        %s1378 = scalar_lea.hbm %s3, %s1377
        // Predicated region
        $region273: #{tpu_custom_call.1} parent=27 // pred_check
          _
        $region274: #{tpu_custom_call.1} parent=27 // pred_check_branch
          %1380 = sbr.rel target = $region276
        $region275: #{tpu_custom_call.1} parent=27 // pred_region
          %1381 = sst [smem:[#allocation10]] [#allocation133]
          %1382 = sst [smem:[#allocation11]] [#allocation132]
        $region276: #{tpu_custom_call.1} parent=27 // pred_fallthru
          _
        %1384 = shalt.err (0)
        %s1386 = sshll.u32 %s466, 4
        %s1387 = int_to_ptr.vmem [resolvable:$true] %s1386
        %1389 = dma.hbm_to_vmem [thread:$0]  %s1378, 16, %s1387, %s467
        %s1390 = sadd.s32 %s302, 7
        %s1391 = sld [smem:[#allocation5 + %s1390]]
        %s1392 = sadd.s32 %s189, %s1391
        %s1393 = smul.addr %s1392, 16
        %s1394 = scalar_lea.hbm %s3, %s1393
        // Predicated region
        $region277: #{tpu_custom_call.1} parent=27 // pred_check
          _
        $region278: #{tpu_custom_call.1} parent=27 // pred_check_branch
          %1396 = sbr.rel target = $region280
        $region279: #{tpu_custom_call.1} parent=27 // pred_region
          %1397 = sst [smem:[#allocation10]] [#allocation135]
          %1398 = sst [smem:[#allocation11]] [#allocation134]
        $region280: #{tpu_custom_call.1} parent=27 // pred_fallthru
          _
        %1400 = shalt.err (0)
        %s1402 = sshll.u32 %s484, 4
        %s1403 = int_to_ptr.vmem [resolvable:$true] %s1402
        %1405 = dma.hbm_to_vmem [thread:$0]  %s1394, 16, %s1403, %s485
        %s1406 = sadd.s32 %s321, 7
        %s1407 = sld [smem:[#allocation5 + %s1406]]
        %s1408 = sadd.s32 %s189, %s1407
        %s1409 = smul.addr %s1408, 16
        %s1410 = scalar_lea.hbm %s3, %s1409
        // Predicated region
        $region281: #{tpu_custom_call.1} parent=27 // pred_check
          _
        $region282: #{tpu_custom_call.1} parent=27 // pred_check_branch
          %1412 = sbr.rel target = $region284
        $region283: #{tpu_custom_call.1} parent=27 // pred_region
          %1413 = sst [smem:[#allocation10]] [#allocation137]
          %1414 = sst [smem:[#allocation11]] [#allocation136]
        $region284: #{tpu_custom_call.1} parent=27 // pred_fallthru
          _
        %1416 = shalt.err (0)
        %s1418 = sshll.u32 %s502, 4
        %s1419 = int_to_ptr.vmem [resolvable:$true] %s1418
        %1421 = dma.hbm_to_vmem [thread:$0]  %s1410, 16, %s1419, %s503
        %v1422 = vld [vmem:[#allocation2] sm:$0xff]
        %1423 = vset.pattern.permute.xlu0 6
        %1424 = vperm.xlu0 %1423, %v353
        %v1425 = vpop.permute.xlu0 %1424
        %v1427 = vmul.f32 %v1425, %v1422
        %v1428 = vadd.f32 %v1277, %v1427
        %s1429 = sshll.u32 %s354, 4
        %1430 = dma.done %s377, %s1429
        %s1431 = sshll.u32 %s354, 4
        %1432 = dma.done %s395, %s1431
        %s1433 = sshll.u32 %s354, 4
        %1434 = dma.done %s413, %s1433
        %s1435 = sshll.u32 %s354, 4
        %1436 = dma.done %s431, %s1435
        %s1437 = sshll.u32 %s354, 4
        %1438 = dma.done %s449, %s1437
        %s1439 = sshll.u32 %s354, 4
        %1440 = dma.done %s467, %s1439
        %s1441 = sshll.u32 %s354, 4
        %1442 = dma.done %s485, %s1441
        %s1443 = sshll.u32 %s354, 4
        %1444 = dma.done %s503, %s1443
        %v1445 = vld [vmem:[%s376] sm:$0xff]
        %1446 = vset.pattern.permute.xlu0 7
        %1447 = vperm.xlu0 %1446, %v353
        %v1448 = vpop.permute.xlu0 %1447
        %v1450 = vmul.f32 %v1448, %v1445
        %v1451 = vadd.f32 %v1428, %v1450
        %1452 = vst [vmem:[%s175] sm:$0xff] %v1451
        %s1453 = sand.u32 %s100, 1
        %s1454 = scalar_lea.sflag [#allocation7], %s1453
        %s1455 = sand.u32 %s100, 1
        %s1456 = smul.addr %s1455, 8
        %s1457 = scalar_lea.vmem [#allocation6], %s1456
        // Predicated region
        $region285: #{tpu_custom_call.1} parent=27 // pred_check
          %p1458 = pneg %p110
        $region286: #{tpu_custom_call.1} parent=27 // pred_check_branch
          %1460 = sbr.rel (%p1458) target = $region288
        $region287: #{tpu_custom_call.1} parent=27 // pred_region
          %s1462 = ssub.s32 128, 128
          %1463 = vsyncadd %s1454, %s1462
          %s1464 = smul.addr %s29, 2
          %s1465 = sadd.s32 %s28, %s1464
          %s1466 = smul.addr %s1465, 128
          %s1467 = scalar_lea.hbm %s4, %s1466
          %s1469 = sshll.u32 %s1457, 4
          %s1470 = int_to_ptr.vmem [resolvable:$true] %s1469
          %1472 = dma.vmem_to_hbm [thread:$0]  %s1470, 128, %s1467, %s1454
        $region288: #{tpu_custom_call.1} parent=27 // pred_fallthru
          _
      $region28: #{tpu_custom_call.1} parent=5 // pred_fallthru
        _
      %p1473 = scmp.le.s32.totalorder 2, %s19
      // Predicated region
      $region289: #{tpu_custom_call.1} parent=5 // pred_check
        %p1474 = pneg %p1473
      $region290: #{tpu_custom_call.1} parent=5 // pred_check_branch
        %1476 = sbr.rel (%p1474) target = $region292
      $region291: #{tpu_custom_call.1} parent=5 // pred_region
        %s1477 = ssub.s32 %s19, 2
        // Predicated region
        $region293: #{tpu_custom_call.1} parent=291 // pred_check
          %p1478 = pneg %p116
        $region294: #{tpu_custom_call.1} parent=291 // pred_check_branch
          %1480 = sbr.rel (%p1478) target = $region296
        $region295: #{tpu_custom_call.1} parent=291 // pred_region
          %s1481 = sand.u32 %s101, 1
          %s1482 = scalar_lea.sflag [#allocation7], %s1481
          %s1483 = sand.u32 %s101, 1
          %s1484 = smul.addr %s1483, 8
          %s1485 = scalar_lea.vmem [#allocation6], %s1484
          %1486 = dma.done %s1482, 128
        $region296: #{tpu_custom_call.1} parent=291 // pred_fallthru
          _
      $region292: #{tpu_custom_call.1} parent=5 // pred_fallthru
        _
    $region6: #{tpu_custom_call.1} parent=1 // loop_footer
      %s23 = sadd.s32 1, %s19
    $region7: #{tpu_custom_call.1} parent=1 // loop_footer_branch
      %18 = sbr.rel target = $region3
    $region8: #{tpu_custom_call.1} parent=1 // loop_exit
      _
    %1487 = vsyncpa [#allocation7], 1
    %s1488 = scalar_lea.sflag [#allocation7], 1
    %1489 = vsyncpa %s1488, 1
  %1490 = vsyncmov [#allocation3]
  %s1491 = vpop.sfrf %1490
  %p1492 = scmp.eq.s32.totalorder %s1491, 0
  %p1493 = pneg %p1492
  %1495 = shalt.err (%p1493)
  %s1496 = scalar_lea.sflag [#allocation3], 1
  %1497 = vsyncmov %s1496
  %s1498 = vpop.sfrf %1497
  %p1499 = scmp.eq.s32.totalorder %s1498, 0
  %p1500 = pneg %p1499
  %1502 = shalt.err (%p1500)
  %s1503 = scalar_lea.sflag [#allocation3], 2
  %1504 = vsyncmov %s1503
  %s1505 = vpop.sfrf %1504
  %p1506 = scmp.eq.s32.totalorder %s1505, 0
  %p1507 = pneg %p1506
  %1509 = shalt.err (%p1507)
  %s1510 = scalar_lea.sflag [#allocation3], 3
  %1511 = vsyncmov %s1510
  %s1512 = vpop.sfrf %1511
  %p1513 = scmp.eq.s32.totalorder %s1512, 0
  %p1514 = pneg %p1513
  %1516 = shalt.err (%p1514)
  %s1517 = scalar_lea.sflag [#allocation3], 4
  %1518 = vsyncmov %s1517
  %s1519 = vpop.sfrf %1518
  %p1520 = scmp.eq.s32.totalorder %s1519, 0
  %p1521 = pneg %p1520
  %1523 = shalt.err (%p1521)
  %s1524 = scalar_lea.sflag [#allocation3], 5
  %1525 = vsyncmov %s1524
  %s1526 = vpop.sfrf %1525
  %p1527 = scmp.eq.s32.totalorder %s1526, 0
  %p1528 = pneg %p1527
  %1530 = shalt.err (%p1528)
  %s1531 = scalar_lea.sflag [#allocation3], 6
  %1532 = vsyncmov %s1531
  %s1533 = vpop.sfrf %1532
  %p1534 = scmp.eq.s32.totalorder %s1533, 0
  %p1535 = pneg %p1534
  %1537 = shalt.err (%p1535)
  %s1538 = scalar_lea.sflag [#allocation3], 7
  %1539 = vsyncmov %s1538
  %s1540 = vpop.sfrf %1539
  %p1541 = scmp.eq.s32.totalorder %s1540, 0
  %p1542 = pneg %p1541
  %1544 = shalt.err (%p1542)
  %s1545 = scalar_lea.sflag [#allocation3], 8
  %1546 = vsyncmov %s1545
  %s1547 = vpop.sfrf %1546
  %p1548 = scmp.eq.s32.totalorder %s1547, 0
  %p1549 = pneg %p1548
  %1551 = shalt.err (%p1549)
  %s1552 = scalar_lea.sflag [#allocation3], 9
  %1553 = vsyncmov %s1552
  %s1554 = vpop.sfrf %1553
  %p1555 = scmp.eq.s32.totalorder %s1554, 0
  %p1556 = pneg %p1555
  %1558 = shalt.err (%p1556)
  %s1559 = scalar_lea.sflag [#allocation3], 10
  %1560 = vsyncmov %s1559
  %s1561 = vpop.sfrf %1560
  %p1562 = scmp.eq.s32.totalorder %s1561, 0
  %p1563 = pneg %p1562
  %1565 = shalt.err (%p1563)
  %s1566 = scalar_lea.sflag [#allocation3], 11
  %1567 = vsyncmov %s1566
  %s1568 = vpop.sfrf %1567
  %p1569 = scmp.eq.s32.totalorder %s1568, 0
  %p1570 = pneg %p1569
  %1572 = shalt.err (%p1570)
  %s1573 = scalar_lea.sflag [#allocation3], 12
  %1574 = vsyncmov %s1573
  %s1575 = vpop.sfrf %1574
  %p1576 = scmp.eq.s32.totalorder %s1575, 0
  %p1577 = pneg %p1576
  %1579 = shalt.err (%p1577)
  %s1580 = scalar_lea.sflag [#allocation3], 13
  %1581 = vsyncmov %s1580
  %s1582 = vpop.sfrf %1581
  %p1583 = scmp.eq.s32.totalorder %s1582, 0
  %p1584 = pneg %p1583
  %1586 = shalt.err (%p1584)
  %s1587 = scalar_lea.sflag [#allocation3], 14
  %1588 = vsyncmov %s1587
  %s1589 = vpop.sfrf %1588
  %p1590 = scmp.eq.s32.totalorder %s1589, 0
  %p1591 = pneg %p1590
  %1593 = shalt.err (%p1591)
  %s1594 = scalar_lea.sflag [#allocation3], 15
  %1595 = vsyncmov %s1594
  %s1596 = vpop.sfrf %1595
  %p1597 = scmp.eq.s32.totalorder %s1596, 0
  %p1598 = pneg %p1597
  %1600 = shalt.err (%p1598)

</llo_original>
